<compile_context>
chip_gen: v7x
topology: tpu7x:2x2x1
jax: 0.10.0
libtpu: 0.0.40
codegen_flags: <defaults>
</compile_context>

<pallas_src>
import functools

import jax
import jax.numpy as jnp
import numpy as np
from jax import lax
from jax.experimental import pallas as pl
from jax.experimental.pallas import tpu as pltpu


def _round_up(x, m):
    return (x + m - 1) // m * m


# ---------------------------------------------------------------------------
# Embedding gather: 32 rows per grid step, manual row DMAs from the HBM table.
# ---------------------------------------------------------------------------
_GATHER_ROWS = 32


def _embed_gather_kernel(ids_ref, table_ref, out_ref, sem):
    base = pl.program_id(0) * _GATHER_ROWS
    copies = []
    for r in range(_GATHER_ROWS):                 # issue all row DMAs ...
        tok = ids_ref[base + r]
        cp = pltpu.make_async_copy(
            table_ref.at[pl.ds(tok, 1)], out_ref.at[pl.ds(r, 1)], sem.at[r])
        cp.start()
        copies.append(cp)
    for cp in copies:                             # ... then wait on the SAME descriptors
        cp.wait()


def embedding_lookup(ids_flat, table):
    """ids_flat: (N,) int32; table: (V, E_pad) f32 in HBM -> (N, E_pad)."""
    n = ids_flat.shape[0]
    _, e = table.shape                            # e already padded to 128 multiple
    n_pad = _round_up(n, _GATHER_ROWS)
    ids_p = jnp.pad(ids_flat.astype(jnp.int32), (0, n_pad - n))
    out = pl.pallas_call(
        _embed_gather_kernel,
        out_shape=jax.ShapeDtypeStruct((n_pad, e), table.dtype),
        grid_spec=pltpu.PrefetchScalarGridSpec(
            num_scalar_prefetch=1,
            grid=(n_pad // _GATHER_ROWS,),
            in_specs=[pl.BlockSpec(memory_space=pl.ANY)],   # table stays in HBM
            out_specs=pl.BlockSpec((_GATHER_ROWS, e), lambda i, ids: (i, 0)),
            scratch_shapes=[pltpu.SemaphoreType.DMA((_GATHER_ROWS,))],
        ),
        compiler_params=pltpu.CompilerParams(dimension_semantics=("parallel",)),
    )(ids_p, table)
    return out[:n]


# ---------------------------------------------------------------------------
# Tiled linear kernel: y = x @ w + b  (bf16 MXU inputs, f32 accumulation,
# selectable output dtype).  Used for hoisted input projections and the FC.
# ---------------------------------------------------------------------------
def _linear_kernel(x_ref, w_ref, b_ref, o_ref, acc_ref):
    k = pl.program_id(2)

    @pl.when(k == 0)
    def _():
        acc_ref[...] = jnp.zeros_like(acc_ref)

    acc_ref[...] += jnp.dot(x_ref[...], w_ref[...],
                            preferred_element_type=jnp.float32)

    @pl.when(k == pl.num_programs(2) - 1)
    def _():
        o_ref[...] = (acc_ref[...] + b_ref[...]).astype(o_ref.dtype)


def linear(x, w_t, b, *, out_dtype=jnp.float32, compute_dtype=jnp.bfloat16,
           tm_max=512, tn_max=512, tk_max=512):
    """x: (M, K); w_t: (K, N) (pre-transposed, typically bf16); b: (N,) f32."""
    m, k = x.shape
    _, n = w_t.shape
    tm = min(tm_max, _round_up(m, 8))
    tn = min(tn_max, _round_up(n, 128))
    tk = min(tk_max, _round_up(k, 128))
    mp, np_, kp = _round_up(m, tm), _round_up(n, tn), _round_up(k, tk)

    x_p = jnp.pad(x.astype(compute_dtype), ((0, mp - m), (0, kp - k)))
    w_p = jnp.pad(w_t.astype(compute_dtype), ((0, kp - k), (0, np_ - n)))
    b_p = jnp.pad(b.astype(jnp.float32).reshape(1, n), ((0, 0), (0, np_ - n)))

    out = pl.pallas_call(
        _linear_kernel,
        out_shape=jax.ShapeDtypeStruct((mp, np_), out_dtype),
        grid_spec=pltpu.PrefetchScalarGridSpec(
            num_scalar_prefetch=0,
            grid=(mp // tm, np_ // tn, kp // tk),
            in_specs=[
                pl.BlockSpec((tm, tk), lambda i, j, kk: (i, kk)),
                pl.BlockSpec((tk, tn), lambda i, j, kk: (kk, j)),
                pl.BlockSpec((1, tn), lambda i, j, kk: (0, j)),
            ],
            out_specs=pl.BlockSpec((tm, tn), lambda i, j, kk: (i, j)),
            scratch_shapes=[pltpu.VMEM((tm, tn), jnp.float32)],
        ),
        compiler_params=pltpu.CompilerParams(
            dimension_semantics=("parallel", "parallel", "arbitrary")),
    )(x_p, w_p, b_p)
    return out[:m, :n]


# ---------------------------------------------------------------------------
# One vanilla-RNN (tanh) layer.  gx = x @ W_ih^T + (b_ih + b_hh) is hoisted.
# Time-major (T, B, H) blocks; grid = (batch tiles [parallel], time chunks
# [arbitrary]); hidden state carried in a VMEM scratch; bf16 MXU inputs.
# ---------------------------------------------------------------------------
_MAX_T_CHUNK = 32


def _pick_t_chunk(t):
    if t <= _MAX_T_CHUNK:
        return t
    for cand in range(_MAX_T_CHUNK, 7, -1):
        if t % cand == 0:
            return cand
    return _MAX_T_CHUNK                           # pad T + mask updates


def _pick_batch_tile(b):
    # Split batch into 2 "parallel" tiles (v7x second TensorCore) when legal.
    if b % 16 == 0:
        return b // 2
    return b


def _rnn_layer_kernel(gx_ref, h0_ref, whh_ref, y_ref, hT_ref, h_sc,
                      *, t_chunk, seq_len, needs_mask, unroll):
    tc = pl.program_id(1)

    @pl.when(tc == 0)
    def _():
        h_sc[...] = h0_ref[...]

    whh = whh_ref[...]                            # bf16 (H, H), hoisted out of time loop

    def step(s, h):
        g = gx_ref[s].astype(jnp.float32)         # (TB, H), dense leading-axis index
        h_new = jnp.tanh(g + jnp.dot(h.astype(jnp.bfloat16), whh,
                                     preferred_element_type=jnp.float32))
        if needs_mask:                            # padded tail steps: keep h
            h_new = jnp.where(tc * t_chunk + s < seq_len, h_new, h)
        y_ref[s] = h_new.astype(y_ref.dtype)
        return h_new

    h = lax.fori_loop(0, t_chunk, step, h_sc[...], unroll=unroll)
    h_sc[...] = h

    @pl.when(tc == pl.num_programs(1) - 1)        # only last chunk writes h_T
    def _():
        hT_ref[...] = h


def rnn_layer(gx, h0, whh_t_bf16):
    """gx: (T, B, H) bf16 pre-projected input; h0: (B, H) f32; whh_t: (H, H) bf16."""
    t, b, h = gx.shape
    t_chunk = _pick_t_chunk(t)
    t_pad = _round_up(t, t_chunk)
    if t_pad != t:
        gx = jnp.pad(gx, ((0, t_pad - t), (0, 0), (0, 0)))
    tb = _pick_batch_tile(b)
    unroll = next(d for d in (8, 4, 2, 1) if t_chunk % d == 0)
    kernel = functools.partial(_rnn_layer_kernel, t_chunk=t_chunk, seq_len=t,
                               needs_mask=(t_pad != t), unroll=unroll)

    y, h_t = pl.pallas_call(
        kernel,
        out_shape=(
            jax.ShapeDtypeStruct((t_pad, b, h), jnp.bfloat16),
            jax.ShapeDtypeStruct((b, h), jnp.float32),
        ),
        grid_spec=pltpu.PrefetchScalarGridSpec(
            num_scalar_prefetch=0,
            grid=(b // tb, t_pad // t_chunk),
            in_specs=[
                pl.BlockSpec((t_chunk, tb, h), lambda bi, tc: (tc, bi, 0)),
                pl.BlockSpec((tb, h), lambda bi, tc: (bi, 0)),
                pl.BlockSpec((h, h), lambda bi, tc: (0, 0)),
            ],
            out_specs=(
                pl.BlockSpec((t_chunk, tb, h), lambda bi, tc: (tc, bi, 0)),
                pl.BlockSpec((tb, h), lambda bi, tc: (bi, 0)),
            ),
            scratch_shapes=[pltpu.VMEM((tb, h), jnp.float32)],
        ),
        compiler_params=pltpu.CompilerParams(
            dimension_semantics=("parallel", "arbitrary")),
    )(gx, h0, whh_t_bf16)
    if t_pad != t:
        y = y[:t]
    return y, h_t


# ---------------------------------------------------------------------------
# Parameters (PyTorch layout) + one-time kernel-ready preparation.
# ---------------------------------------------------------------------------
def init_params(key, vocab_size, embedding_dim, hidden_dim, n_layers):
    params = {}
    keys = jax.random.split(key, 3 + 4 * n_layers)
    k = iter(keys)
    params["embedding"] = jax.random.normal(
        next(k), (vocab_size, embedding_dim), jnp.float32)
    scale = 1.0 / jnp.sqrt(hidden_dim)
    for layer in range(n_layers):
        d_in = embedding_dim if layer == 0 else hidden_dim
        params[f"w_ih_{layer}"] = jax.random.uniform(
            next(k), (hidden_dim, d_in), jnp.float32, -scale, scale)
        params[f"w_hh_{layer}"] = jax.random.uniform(
            next(k), (hidden_dim, hidden_dim), jnp.float32, -scale, scale)
        params[f"b_ih_{layer}"] = jax.random.uniform(
            next(k), (hidden_dim,), jnp.float32, -scale, scale)
        params[f"b_hh_{layer}"] = jax.random.uniform(
            next(k), (hidden_dim,), jnp.float32, -scale, scale)
    params["fc_w"] = jax.random.uniform(
        next(k), (vocab_size, hidden_dim), jnp.float32, -scale, scale)
    params["fc_b"] = jax.random.uniform(
        next(k), (vocab_size,), jnp.float32, -scale, scale)
    return params


def prepare_params(params, n_layers):
    """One-time transpose / bf16 cast / padding -- NOT part of the per-call path."""
    prep = {}
    v, e = params["embedding"].shape
    e_pad = _round_up(e, 128)
    prep["embedding"] = jnp.pad(params["embedding"], ((0, 0), (0, e_pad - e)))
    for layer in range(n_layers):
        w_ih_t = jnp.transpose(params[f"w_ih_{layer}"])          # (D_in, H)
        if layer == 0:
            w_ih_t = jnp.pad(w_ih_t, ((0, e_pad - e), (0, 0)))   # match padded table
        prep[f"w_ih_t_{layer}"] = w_ih_t.astype(jnp.bfloat16)
        prep[f"w_hh_t_{layer}"] = jnp.transpose(
            params[f"w_hh_{layer}"]).astype(jnp.bfloat16)
        prep[f"bias_{layer}"] = (params[f"b_ih_{layer}"]
                                 + params[f"b_hh_{layer}"]).astype(jnp.float32)
    prep["fc_w_t"] = jnp.transpose(params["fc_w"]).astype(jnp.bfloat16)
    prep["fc_b"] = params["fc_b"].astype(jnp.float32)
    return prep


# ---------------------------------------------------------------------------
# Model forward (reshapes are free; one final transpose restores batch-first).
# ---------------------------------------------------------------------------
@functools.partial(jax.jit, static_argnames=("n_layers", "hidden_dim"))
def rnn_model_forward(prep, x_tokens, hidden, *, n_layers, hidden_dim):
    """x_tokens: (B, T) int32; hidden: (L, B, H) -> (logits (B*T, V), h_n (L, B, H))."""
    b, t = x_tokens.shape

    # Time-major token order so recurrence blocks are (T, B, H) and ref[s] is a
    # dense leading-axis index.
    ids_tm = jnp.transpose(x_tokens).reshape(-1)                     # (T*B,)
    x_flat = embedding_lookup(ids_tm, prep["embedding"])             # (T*B, E_pad) f32

    h_finals = []
    y = None
    for layer in range(n_layers):
        # Hoisted input projection: one MXU matmul over all T*B rows, bf16 out.
        gx_flat = linear(x_flat, prep[f"w_ih_t_{layer}"], prep[f"bias_{layer}"],
                         out_dtype=jnp.bfloat16)                     # (T*B, H)
        gx = gx_flat.reshape(t, b, hidden_dim)                       # free reshape
        y, h_t = rnn_layer(gx, hidden[layer], prep[f"w_hh_t_{layer}"])
        h_finals.append(h_t)
        x_flat = y.reshape(t * b, hidden_dim)                        # free reshape

    # Matches PyTorch: out.contiguous().view(-1, H) is batch-first (row = b*T + t).
    out_bf = jnp.transpose(y, (1, 0, 2)).reshape(b * t, hidden_dim)  # bf16, cheap
    logits = linear(out_bf, prep["fc_w_t"], prep["fc_b"],
                    out_dtype=jnp.float32, tm_max=1024)
    return logits, jnp.stack(h_finals)


# ---------------------------------------------------------------------------
# Pure-JAX reference (uses the original PyTorch-layout params).
# ---------------------------------------------------------------------------
def reference_forward(params, x_tokens, hidden, n_layers, hidden_dim):
    b, t = x_tokens.shape
    x = params["embedding"][x_tokens]                                # (B, T, E)
    h_all = []
    for layer in range(n_layers):
        w_ih = params[f"w_ih_{layer}"]
        w_hh = params[f"w_hh_{layer}"]
        bias = params[f"b_ih_{layer}"] + params[f"b_hh_{layer}"]
        h = hidden[layer]
        ys = []
        for s in range(t):
            h = jnp.tanh(x[:, s, :] @ w_ih.T + h @ w_hh.T + bias)
            ys.append(h)
        x = jnp.stack(ys, axis=1)
        h_all.append(h)
    out = x.reshape(b * t, hidden_dim) @ params["fc_w"].T + params["fc_b"]
    return out, jnp.stack(h_all)


if __name__ == "__main__":
    vocab_size, embedding_dim, hidden_dim, n_layers = 32, 16, 32, 2
    batch, seq = 2, 8

    key = jax.random.PRNGKey(0)
    pkey, xkey = jax.random.split(key)
    params = init_params(pkey, vocab_size, embedding_dim, hidden_dim, n_layers)
    prep = prepare_params(params, n_layers)          # one-time, outside the jit

    x_tokens = jax.random.randint(xkey, (batch, seq), 0, vocab_size, jnp.int32)
    hidden = jnp.zeros((n_layers, batch, hidden_dim), jnp.float32)

    logits, h_n = rnn_model_forward(
        prep, x_tokens, hidden, n_layers=n_layers, hidden_dim=hidden_dim)
    jax.block_until_ready((logits, h_n))

    assert logits.shape == (batch * seq, vocab_size)
    assert h_n.shape == (n_layers, batch, hidden_dim)

    ref_logits, ref_h = reference_forward(params, x_tokens, hidden,
                                          n_layers, hidden_dim)
    np.testing.assert_allclose(np.asarray(logits), np.asarray(ref_logits),
                               atol=5e-2, rtol=5e-2)
    np.testing.assert_allclose(np.asarray(h_n), np.asarray(ref_h),
                               atol=5e-2, rtol=5e-2)

    print("KERNEL_OK")
</pallas_src>

<mosaic_0001>
module attributes {stable_mosaic.version = 11 : i64} {
  func.func @_rnn_layer_kernel(%arg0: i32, %arg1: i32, %arg2: memref<8x2x32xbf16, #tpu.memory_space<vmem>>, %arg3: memref<2x32xf32, #tpu.memory_space<vmem>>, %arg4: memref<32x32xbf16, #tpu.memory_space<vmem>>, %arg5: memref<8x2x32xbf16, #tpu.memory_space<vmem>>, %arg6: memref<2x32xf32, #tpu.memory_space<vmem>>, %arg7: memref<2x32xf32, #tpu.memory_space<vmem>>) attributes {dimension_semantics = [#tpu.dimension_semantics<parallel>, #tpu.dimension_semantics<arbitrary>], iteration_bounds = array<i64: 1, 1>, scalar_prefetch = 0 : i64, scratch_operands = 1 : i64, tpu.core_type = #tpu.core_type<tc>, window_params = [{transform_indices = @transform_0, window_bounds = array<i64: 8, 2, 32>}, {transform_indices = @transform_1, window_bounds = array<i64: 2, 32>}, {pipeline_mode = #tpu.pipeline_mode<synchronous>, transform_indices = @transform_2, window_bounds = array<i64: 32, 32>}, {transform_indices = @transform_3, window_bounds = array<i64: 8, 2, 32>}, {transform_indices = @transform_4, window_bounds = array<i64: 2, 32>}]} {
    %c0_i32 = arith.constant 0 : i32
    %0 = arith.cmpi eq, %arg1, %c0_i32 : i32
    %1 = arith.extui %0 : i1 to i32
    %c0_i32_0 = arith.constant 0 : i32
    %2 = arith.cmpi ne, %1, %c0_i32_0 : i32
    scf.if %2 {
      %c0_48 = arith.constant 0 : index
      %c0_49 = arith.constant 0 : index
      %113 = vector.load %arg3[%c0_48, %c0_49] : memref<2x32xf32, #tpu.memory_space<vmem>>, vector<2x32xf32>
      %c0_50 = arith.constant 0 : index
      %c0_51 = arith.constant 0 : index
      %114 = vector.load %arg7[%c0_50, %c0_51] : memref<2x32xf32, #tpu.memory_space<vmem>>, vector<2x32xf32>
      tpu.vector_store %arg7[%c0_50, %c0_51], %113 {strides = array<i32>} : memref<2x32xf32, #tpu.memory_space<vmem>>, vector<2x32xf32>,
    } else {
    }
    %c0 = arith.constant 0 : index
    %c0_1 = arith.constant 0 : index
    %3 = vector.load %arg4[%c0, %c0_1] : memref<32x32xbf16, #tpu.memory_space<vmem>>, vector<32x32xbf16>
    %c0_2 = arith.constant 0 : index
    %c0_3 = arith.constant 0 : index
    %4 = vector.load %arg7[%c0_2, %c0_3] : memref<2x32xf32, #tpu.memory_space<vmem>>, vector<2x32xf32>
    %c0_i32_4 = arith.constant 0 : i32
    %5 = arith.index_cast %c0_i32_4 : i32 to index
    %c0_5 = arith.constant 0 : index
    %c0_6 = arith.constant 0 : index
    %6 = vector.load %arg2[%5, %c0_5, %c0_6] : memref<8x2x32xbf16, #tpu.memory_space<vmem>>, vector<1x2x32xbf16>
    %7 = vector.shape_cast %6 : vector<1x2x32xbf16> to vector<2x32xbf16>
    %8 = arith.extf %7 : vector<2x32xbf16> to vector<2x32xf32>
    %9 = arith.truncf %4 : vector<2x32xf32> to vector<2x32xbf16>
    %cst = arith.constant dense<0.000000e+00> : vector<2x32xf32>
    %10 = tpu.matmul %9, %3, %cst {dimension_numbers = #tpu.dot_dimension_numbers<[1], [0], [0], [1], [0, 0, 1, 1], [], []>} : vector<2x32xbf16>, vector<32x32xbf16>, vector<2x32xf32> -> vector<2x32xf32>
    %11 = arith.addf %8, %10 : vector<2x32xf32>
    %12 = math.tanh %11 : vector<2x32xf32>
    %13 = arith.truncf %12 : vector<2x32xf32> to vector<2x32xbf16>
    %14 = arith.index_cast %c0_i32_4 : i32 to index
    %c0_7 = arith.constant 0 : index
    %c0_8 = arith.constant 0 : index
    %15 = vector.load %arg5[%14, %c0_7, %c0_8] : memref<8x2x32xbf16, #tpu.memory_space<vmem>>, vector<1x2x32xbf16>
    %16 = vector.shape_cast %15 : vector<1x2x32xbf16> to vector<2x32xbf16>
    %17 = vector.shape_cast %13 : vector<2x32xbf16> to vector<1x2x32xbf16>
    tpu.vector_store %arg5[%14, %c0_7, %c0_8], %17 {strides = array<i32>} : memref<8x2x32xbf16, #tpu.memory_space<vmem>>, vector<1x2x32xbf16>,
    %c1_i32 = arith.constant 1 : i32
    %18 = arith.index_cast %c1_i32 : i32 to index
    %c0_9 = arith.constant 0 : index
    %c0_10 = arith.constant 0 : index
    %19 = vector.load %arg2[%18, %c0_9, %c0_10] : memref<8x2x32xbf16, #tpu.memory_space<vmem>>, vector<1x2x32xbf16>
    %20 = vector.shape_cast %19 : vector<1x2x32xbf16> to vector<2x32xbf16>
    %21 = arith.extf %20 : vector<2x32xbf16> to vector<2x32xf32>
    %22 = arith.truncf %12 : vector<2x32xf32> to vector<2x32xbf16>
    %cst_11 = arith.constant dense<0.000000e+00> : vector<2x32xf32>
    %23 = tpu.matmul %22, %3, %cst_11 {dimension_numbers = #tpu.dot_dimension_numbers<[1], [0], [0], [1], [0, 0, 1, 1], [], []>} : vector<2x32xbf16>, vector<32x32xbf16>, vector<2x32xf32> -> vector<2x32xf32>
    %24 = arith.addf %21, %23 : vector<2x32xf32>
    %25 = math.tanh %24 : vector<2x32xf32>
    %26 = arith.truncf %25 : vector<2x32xf32> to vector<2x32xbf16>
    %27 = arith.index_cast %c1_i32 : i32 to index
    %c0_12 = arith.constant 0 : index
    %c0_13 = arith.constant 0 : index
    %28 = vector.load %arg5[%27, %c0_12, %c0_13] : memref<8x2x32xbf16, #tpu.memory_space<vmem>>, vector<1x2x32xbf16>
    %29 = vector.shape_cast %28 : vector<1x2x32xbf16> to vector<2x32xbf16>
    %30 = vector.shape_cast %26 : vector<2x32xbf16> to vector<1x2x32xbf16>
    tpu.vector_store %arg5[%27, %c0_12, %c0_13], %30 {strides = array<i32>} : memref<8x2x32xbf16, #tpu.memory_space<vmem>>, vector<1x2x32xbf16>,
    %c2_i32 = arith.constant 2 : i32
    %31 = arith.index_cast %c2_i32 : i32 to index
    %c0_14 = arith.constant 0 : index
    %c0_15 = arith.constant 0 : index
    %32 = vector.load %arg2[%31, %c0_14, %c0_15] : memref<8x2x32xbf16, #tpu.memory_space<vmem>>, vector<1x2x32xbf16>
    %33 = vector.shape_cast %32 : vector<1x2x32xbf16> to vector<2x32xbf16>
    %34 = arith.extf %33 : vector<2x32xbf16> to vector<2x32xf32>
    %35 = arith.truncf %25 : vector<2x32xf32> to vector<2x32xbf16>
    %cst_16 = arith.constant dense<0.000000e+00> : vector<2x32xf32>
    %36 = tpu.matmul %35, %3, %cst_16 {dimension_numbers = #tpu.dot_dimension_numbers<[1], [0], [0], [1], [0, 0, 1, 1], [], []>} : vector<2x32xbf16>, vector<32x32xbf16>, vector<2x32xf32> -> vector<2x32xf32>
    %37 = arith.addf %34, %36 : vector<2x32xf32>
    %38 = math.tanh %37 : vector<2x32xf32>
    %39 = arith.truncf %38 : vector<2x32xf32> to vector<2x32xbf16>
    %40 = arith.index_cast %c2_i32 : i32 to index
    %c0_17 = arith.constant 0 : index
    %c0_18 = arith.constant 0 : index
    %41 = vector.load %arg5[%40, %c0_17, %c0_18] : memref<8x2x32xbf16, #tpu.memory_space<vmem>>, vector<1x2x32xbf16>
    %42 = vector.shape_cast %41 : vector<1x2x32xbf16> to vector<2x32xbf16>
    %43 = vector.shape_cast %39 : vector<2x32xbf16> to vector<1x2x32xbf16>
    tpu.vector_store %arg5[%40, %c0_17, %c0_18], %43 {strides = array<i32>} : memref<8x2x32xbf16, #tpu.memory_space<vmem>>, vector<1x2x32xbf16>,
    %c3_i32 = arith.constant 3 : i32
    %44 = arith.index_cast %c3_i32 : i32 to index
    %c0_19 = arith.constant 0 : index
    %c0_20 = arith.constant 0 : index
    %45 = vector.load %arg2[%44, %c0_19, %c0_20] : memref<8x2x32xbf16, #tpu.memory_space<vmem>>, vector<1x2x32xbf16>
    %46 = vector.shape_cast %45 : vector<1x2x32xbf16> to vector<2x32xbf16>
    %47 = arith.extf %46 : vector<2x32xbf16> to vector<2x32xf32>
    %48 = arith.truncf %38 : vector<2x32xf32> to vector<2x32xbf16>
    %cst_21 = arith.constant dense<0.000000e+00> : vector<2x32xf32>
    %49 = tpu.matmul %48, %3, %cst_21 {dimension_numbers = #tpu.dot_dimension_numbers<[1], [0], [0], [1], [0, 0, 1, 1], [], []>} : vector<2x32xbf16>, vector<32x32xbf16>, vector<2x32xf32> -> vector<2x32xf32>
    %50 = arith.addf %47, %49 : vector<2x32xf32>
    %51 = math.tanh %50 : vector<2x32xf32>
    %52 = arith.truncf %51 : vector<2x32xf32> to vector<2x32xbf16>
    %53 = arith.index_cast %c3_i32 : i32 to index
    %c0_22 = arith.constant 0 : index
    %c0_23 = arith.constant 0 : index
    %54 = vector.load %arg5[%53, %c0_22, %c0_23] : memref<8x2x32xbf16, #tpu.memory_space<vmem>>, vector<1x2x32xbf16>
    %55 = vector.shape_cast %54 : vector<1x2x32xbf16> to vector<2x32xbf16>
    %56 = vector.shape_cast %52 : vector<2x32xbf16> to vector<1x2x32xbf16>
    tpu.vector_store %arg5[%53, %c0_22, %c0_23], %56 {strides = array<i32>} : memref<8x2x32xbf16, #tpu.memory_space<vmem>>, vector<1x2x32xbf16>,
    %c4_i32 = arith.constant 4 : i32
    %57 = arith.index_cast %c4_i32 : i32 to index
    %c0_24 = arith.constant 0 : index
    %c0_25 = arith.constant 0 : index
    %58 = vector.load %arg2[%57, %c0_24, %c0_25] : memref<8x2x32xbf16, #tpu.memory_space<vmem>>, vector<1x2x32xbf16>
    %59 = vector.shape_cast %58 : vector<1x2x32xbf16> to vector<2x32xbf16>
    %60 = arith.extf %59 : vector<2x32xbf16> to vector<2x32xf32>
    %61 = arith.truncf %51 : vector<2x32xf32> to vector<2x32xbf16>
    %cst_26 = arith.constant dense<0.000000e+00> : vector<2x32xf32>
    %62 = tpu.matmul %61, %3, %cst_26 {dimension_numbers = #tpu.dot_dimension_numbers<[1], [0], [0], [1], [0, 0, 1, 1], [], []>} : vector<2x32xbf16>, vector<32x32xbf16>, vector<2x32xf32> -> vector<2x32xf32>
    %63 = arith.addf %60, %62 : vector<2x32xf32>
    %64 = math.tanh %63 : vector<2x32xf32>
    %65 = arith.truncf %64 : vector<2x32xf32> to vector<2x32xbf16>
    %66 = arith.index_cast %c4_i32 : i32 to index
    %c0_27 = arith.constant 0 : index
    %c0_28 = arith.constant 0 : index
    %67 = vector.load %arg5[%66, %c0_27, %c0_28] : memref<8x2x32xbf16, #tpu.memory_space<vmem>>, vector<1x2x32xbf16>
    %68 = vector.shape_cast %67 : vector<1x2x32xbf16> to vector<2x32xbf16>
    %69 = vector.shape_cast %65 : vector<2x32xbf16> to vector<1x2x32xbf16>
    tpu.vector_store %arg5[%66, %c0_27, %c0_28], %69 {strides = array<i32>} : memref<8x2x32xbf16, #tpu.memory_space<vmem>>, vector<1x2x32xbf16>,
    %c5_i32 = arith.constant 5 : i32
    %70 = arith.index_cast %c5_i32 : i32 to index
    %c0_29 = arith.constant 0 : index
    %c0_30 = arith.constant 0 : index
    %71 = vector.load %arg2[%70, %c0_29, %c0_30] : memref<8x2x32xbf16, #tpu.memory_space<vmem>>, vector<1x2x32xbf16>
    %72 = vector.shape_cast %71 : vector<1x2x32xbf16> to vector<2x32xbf16>
    %73 = arith.extf %72 : vector<2x32xbf16> to vector<2x32xf32>
    %74 = arith.truncf %64 : vector<2x32xf32> to vector<2x32xbf16>
    %cst_31 = arith.constant dense<0.000000e+00> : vector<2x32xf32>
    %75 = tpu.matmul %74, %3, %cst_31 {dimension_numbers = #tpu.dot_dimension_numbers<[1], [0], [0], [1], [0, 0, 1, 1], [], []>} : vector<2x32xbf16>, vector<32x32xbf16>, vector<2x32xf32> -> vector<2x32xf32>
    %76 = arith.addf %73, %75 : vector<2x32xf32>
    %77 = math.tanh %76 : vector<2x32xf32>
    %78 = arith.truncf %77 : vector<2x32xf32> to vector<2x32xbf16>
    %79 = arith.index_cast %c5_i32 : i32 to index
    %c0_32 = arith.constant 0 : index
    %c0_33 = arith.constant 0 : index
    %80 = vector.load %arg5[%79, %c0_32, %c0_33] : memref<8x2x32xbf16, #tpu.memory_space<vmem>>, vector<1x2x32xbf16>
    %81 = vector.shape_cast %80 : vector<1x2x32xbf16> to vector<2x32xbf16>
    %82 = vector.shape_cast %78 : vector<2x32xbf16> to vector<1x2x32xbf16>
    tpu.vector_store %arg5[%79, %c0_32, %c0_33], %82 {strides = array<i32>} : memref<8x2x32xbf16, #tpu.memory_space<vmem>>, vector<1x2x32xbf16>,
    %c6_i32 = arith.constant 6 : i32
    %83 = arith.index_cast %c6_i32 : i32 to index
    %c0_34 = arith.constant 0 : index
    %c0_35 = arith.constant 0 : index
    %84 = vector.load %arg2[%83, %c0_34, %c0_35] : memref<8x2x32xbf16, #tpu.memory_space<vmem>>, vector<1x2x32xbf16>
    %85 = vector.shape_cast %84 : vector<1x2x32xbf16> to vector<2x32xbf16>
    %86 = arith.extf %85 : vector<2x32xbf16> to vector<2x32xf32>
    %87 = arith.truncf %77 : vector<2x32xf32> to vector<2x32xbf16>
    %cst_36 = arith.constant dense<0.000000e+00> : vector<2x32xf32>
    %88 = tpu.matmul %87, %3, %cst_36 {dimension_numbers = #tpu.dot_dimension_numbers<[1], [0], [0], [1], [0, 0, 1, 1], [], []>} : vector<2x32xbf16>, vector<32x32xbf16>, vector<2x32xf32> -> vector<2x32xf32>
    %89 = arith.addf %86, %88 : vector<2x32xf32>
    %90 = math.tanh %89 : vector<2x32xf32>
    %91 = arith.truncf %90 : vector<2x32xf32> to vector<2x32xbf16>
    %92 = arith.index_cast %c6_i32 : i32 to index
    %c0_37 = arith.constant 0 : index
    %c0_38 = arith.constant 0 : index
    %93 = vector.load %arg5[%92, %c0_37, %c0_38] : memref<8x2x32xbf16, #tpu.memory_space<vmem>>, vector<1x2x32xbf16>
    %94 = vector.shape_cast %93 : vector<1x2x32xbf16> to vector<2x32xbf16>
    %95 = vector.shape_cast %91 : vector<2x32xbf16> to vector<1x2x32xbf16>
    tpu.vector_store %arg5[%92, %c0_37, %c0_38], %95 {strides = array<i32>} : memref<8x2x32xbf16, #tpu.memory_space<vmem>>, vector<1x2x32xbf16>,
    %c7_i32 = arith.constant 7 : i32
    %96 = arith.index_cast %c7_i32 : i32 to index
    %c0_39 = arith.constant 0 : index
    %c0_40 = arith.constant 0 : index
    %97 = vector.load %arg2[%96, %c0_39, %c0_40] : memref<8x2x32xbf16, #tpu.memory_space<vmem>>, vector<1x2x32xbf16>
    %98 = vector.shape_cast %97 : vector<1x2x32xbf16> to vector<2x32xbf16>
    %99 = arith.extf %98 : vector<2x32xbf16> to vector<2x32xf32>
    %100 = arith.truncf %90 : vector<2x32xf32> to vector<2x32xbf16>
    %cst_41 = arith.constant dense<0.000000e+00> : vector<2x32xf32>
    %101 = tpu.matmul %100, %3, %cst_41 {dimension_numbers = #tpu.dot_dimension_numbers<[1], [0], [0], [1], [0, 0, 1, 1], [], []>} : vector<2x32xbf16>, vector<32x32xbf16>, vector<2x32xf32> -> vector<2x32xf32>
    %102 = arith.addf %99, %101 : vector<2x32xf32>
    %103 = math.tanh %102 : vector<2x32xf32>
    %104 = arith.truncf %103 : vector<2x32xf32> to vector<2x32xbf16>
    %105 = arith.index_cast %c7_i32 : i32 to index
    %c0_42 = arith.constant 0 : index
    %c0_43 = arith.constant 0 : index
    %106 = vector.load %arg5[%105, %c0_42, %c0_43] : memref<8x2x32xbf16, #tpu.memory_space<vmem>>, vector<1x2x32xbf16>
    %107 = vector.shape_cast %106 : vector<1x2x32xbf16> to vector<2x32xbf16>
    %108 = vector.shape_cast %104 : vector<2x32xbf16> to vector<1x2x32xbf16>
    tpu.vector_store %arg5[%105, %c0_42, %c0_43], %108 {strides = array<i32>} : memref<8x2x32xbf16, #tpu.memory_space<vmem>>, vector<1x2x32xbf16>,
    %c8_i32 = arith.constant 8 : i32
    %c0_44 = arith.constant 0 : index
    %c0_45 = arith.constant 0 : index
    %109 = vector.load %arg7[%c0_44, %c0_45] : memref<2x32xf32, #tpu.memory_space<vmem>>, vector<2x32xf32>
    tpu.vector_store %arg7[%c0_44, %c0_45], %103 {strides = array<i32>} : memref<2x32xf32, #tpu.memory_space<vmem>>, vector<2x32xf32>,
    %c0_i32_46 = arith.constant 0 : i32
    %110 = arith.cmpi eq, %arg1, %c0_i32_46 : i32
    %111 = arith.extui %110 : i1 to i32
    %c0_i32_47 = arith.constant 0 : i32
    %112 = arith.cmpi ne, %111, %c0_i32_47 : i32
    scf.if %112 {
      %c0_48 = arith.constant 0 : index
      %c0_49 = arith.constant 0 : index
      %113 = vector.load %arg6[%c0_48, %c0_49] : memref<2x32xf32, #tpu.memory_space<vmem>>, vector<2x32xf32>
      tpu.vector_store %arg6[%c0_48, %c0_49], %103 {strides = array<i32>} : memref<2x32xf32, #tpu.memory_space<vmem>>, vector<2x32xf32>,
    } else {
    }
    return
  }
  func.func @transform_0(%arg0: i32, %arg1: i32) -> (i32, i32, i32) {
    %c0_i32 = arith.constant 0 : i32
    %c0_i32_0 = arith.constant 0 : i32
    return %arg1, %arg0, %c0_i32 : i32, i32, i32
  }
  func.func @transform_1(%arg0: i32, %arg1: i32) -> (i32, i32) {
    %c0_i32 = arith.constant 0 : i32
    %c0_i32_0 = arith.constant 0 : i32
    return %arg0, %c0_i32 : i32, i32
  }
  func.func @transform_2(%arg0: i32, %arg1: i32) -> (i32, i32) {
    %c0_i32 = arith.constant 0 : i32
    %c0_i32_0 = arith.constant 0 : i32
    %c0_i32_1 = arith.constant 0 : i32
    return %c0_i32, %c0_i32_0 : i32, i32
  }
  func.func @transform_3(%arg0: i32, %arg1: i32) -> (i32, i32, i32) {
    %c0_i32 = arith.constant 0 : i32
    %c0_i32_0 = arith.constant 0 : i32
    return %arg1, %arg0, %c0_i32 : i32, i32, i32
  }
  func.func @transform_4(%arg0: i32, %arg1: i32) -> (i32, i32) {
    %c0_i32 = arith.constant 0 : i32
    %c0_i32_0 = arith.constant 0 : i32
    return %arg0, %c0_i32 : i32, i32
  }
}

module attributes {stable_mosaic.version = 11 : i64} {
  func.func @_embed_gather_kernel(%arg0: i32, %arg1: memref<32xi32, #tpu.memory_space<smem>>, %arg2: memref<32x128xf32, #tpu.memory_space<any>>, %arg3: memref<32x128xf32, #tpu.memory_space<vmem>>, %arg4: memref<32x!tpu.dma_semaphore, #tpu.memory_space<semaphore_mem>>) attributes {dimension_semantics = [#tpu.dimension_semantics<parallel>], iteration_bounds = array<i64: 1>, scalar_prefetch = 1 : i64, scratch_operands = 1 : i64, tpu.core_type = #tpu.core_type<tc>, window_params = [{}, {transform_indices = @transform_1, window_bounds = array<i64: 32, 128>}]} {
    %c32_i32 = arith.constant 32 : i32
    %0 = arith.muli %arg0, %c32_i32 : i32
    %c0_i32 = arith.constant 0 : i32
    %1 = arith.addi %0, %c0_i32 : i32
    %2 = arith.index_cast %1 : i32 to index
    %3 = memref.load %arg1[%2] : memref<32xi32, #tpu.memory_space<smem>>
    %c0_i32_0 = arith.constant 0 : i32
    %c0_i32_1 = arith.constant 0 : i32
    %4 = tpu.memref_slice %arg2[%3, %c0_i32_1] : memref<32x128xf32, #tpu.memory_space<any>> -> memref<1x128xf32, #tpu.memory_space<any>>
    %c0_i32_2 = arith.constant 0 : i32
    %c0_i32_3 = arith.constant 0 : i32
    %5 = tpu.memref_slice %arg3[%c0_i32_2, %c0_i32_3] : memref<32x128xf32, #tpu.memory_space<vmem>> -> memref<1x128xf32, #tpu.memory_space<vmem>>
    %6 = tpu.memref_slice %arg4[%c0_i32_0] : memref<32x!tpu.dma_semaphore, #tpu.memory_space<semaphore_mem>> -> memref<1x!tpu.dma_semaphore, #tpu.memory_space<semaphore_mem>>
    %7 = tpu.memref_squeeze %6 : memref<1x!tpu.dma_semaphore, #tpu.memory_space<semaphore_mem>> -> memref<!tpu.dma_semaphore, #tpu.memory_space<semaphore_mem>>
    tpu.enqueue_dma source(%4 : memref<1x128xf32, #tpu.memory_space<any>>) target(%5 : memref<1x128xf32, #tpu.memory_space<vmem>>) target_semaphore(%7 : memref<!tpu.dma_semaphore, #tpu.memory_space<semaphore_mem>>)
    %c1_i32 = arith.constant 1 : i32
    %8 = arith.addi %0, %c1_i32 : i32
    %9 = arith.index_cast %8 : i32 to index
    %10 = memref.load %arg1[%9] : memref<32xi32, #tpu.memory_space<smem>>
    %c1_i32_4 = arith.constant 1 : i32
    %c0_i32_5 = arith.constant 0 : i32
    %11 = tpu.memref_slice %arg2[%10, %c0_i32_5] : memref<32x128xf32, #tpu.memory_space<any>> -> memref<1x128xf32, #tpu.memory_space<any>>
    %c1_i32_6 = arith.constant 1 : i32
    %c0_i32_7 = arith.constant 0 : i32
    %12 = tpu.memref_slice %arg3[%c1_i32_6, %c0_i32_7] : memref<32x128xf32, #tpu.memory_space<vmem>> -> memref<1x128xf32, #tpu.memory_space<vmem>>
    %13 = tpu.memref_slice %arg4[%c1_i32_4] : memref<32x!tpu.dma_semaphore, #tpu.memory_space<semaphore_mem>> -> memref<1x!tpu.dma_semaphore, #tpu.memory_space<semaphore_mem>>
    %14 = tpu.memref_squeeze %13 : memref<1x!tpu.dma_semaphore, #tpu.memory_space<semaphore_mem>> -> memref<!tpu.dma_semaphore, #tpu.memory_space<semaphore_mem>>
    tpu.enqueue_dma source(%11 : memref<1x128xf32, #tpu.memory_space<any>>) target(%12 : memref<1x128xf32, #tpu.memory_space<vmem>>) target_semaphore(%14 : memref<!tpu.dma_semaphore, #tpu.memory_space<semaphore_mem>>)
    %c2_i32 = arith.constant 2 : i32
    %15 = arith.addi %0, %c2_i32 : i32
    %16 = arith.index_cast %15 : i32 to index
    %17 = memref.load %arg1[%16] : memref<32xi32, #tpu.memory_space<smem>>
    %c2_i32_8 = arith.constant 2 : i32
    %c0_i32_9 = arith.constant 0 : i32
    %18 = tpu.memref_slice %arg2[%17, %c0_i32_9] : memref<32x128xf32, #tpu.memory_space<any>> -> memref<1x128xf32, #tpu.memory_space<any>>
    %c2_i32_10 = arith.constant 2 : i32
    %c0_i32_11 = arith.constant 0 : i32
    %19 = tpu.memref_slice %arg3[%c2_i32_10, %c0_i32_11] : memref<32x128xf32, #tpu.memory_space<vmem>> -> memref<1x128xf32, #tpu.memory_space<vmem>>
    %20 = tpu.memref_slice %arg4[%c2_i32_8] : memref<32x!tpu.dma_semaphore, #tpu.memory_space<semaphore_mem>> -> memref<1x!tpu.dma_semaphore, #tpu.memory_space<semaphore_mem>>
    %21 = tpu.memref_squeeze %20 : memref<1x!tpu.dma_semaphore, #tpu.memory_space<semaphore_mem>> -> memref<!tpu.dma_semaphore, #tpu.memory_space<semaphore_mem>>
    tpu.enqueue_dma source(%18 : memref<1x128xf32, #tpu.memory_space<any>>) target(%19 : memref<1x128xf32, #tpu.memory_space<vmem>>) target_semaphore(%21 : memref<!tpu.dma_semaphore, #tpu.memory_space<semaphore_mem>>)
    %c3_i32 = arith.constant 3 : i32
    %22 = arith.addi %0, %c3_i32 : i32
    %23 = arith.index_cast %22 : i32 to index
    %24 = memref.load %arg1[%23] : memref<32xi32, #tpu.memory_space<smem>>
    %c3_i32_12 = arith.constant 3 : i32
    %c0_i32_13 = arith.constant 0 : i32
    %25 = tpu.memref_slice %arg2[%24, %c0_i32_13] : memref<32x128xf32, #tpu.memory_space<any>> -> memref<1x128xf32, #tpu.memory_space<any>>
    %c3_i32_14 = arith.constant 3 : i32
    %c0_i32_15 = arith.constant 0 : i32
    %26 = tpu.memref_slice %arg3[%c3_i32_14, %c0_i32_15] : memref<32x128xf32, #tpu.memory_space<vmem>> -> memref<1x128xf32, #tpu.memory_space<vmem>>
    %27 = tpu.memref_slice %arg4[%c3_i32_12] : memref<32x!tpu.dma_semaphore, #tpu.memory_space<semaphore_mem>> -> memref<1x!tpu.dma_semaphore, #tpu.memory_space<semaphore_mem>>
    %28 = tpu.memref_squeeze %27 : memref<1x!tpu.dma_semaphore, #tpu.memory_space<semaphore_mem>> -> memref<!tpu.dma_semaphore, #tpu.memory_space<semaphore_mem>>
    tpu.enqueue_dma source(%25 : memref<1x128xf32, #tpu.memory_space<any>>) target(%26 : memref<1x128xf32, #tpu.memory_space<vmem>>) target_semaphore(%28 : memref<!tpu.dma_semaphore, #tpu.memory_space<semaphore_mem>>)
    %c4_i32 = arith.constant 4 : i32
    %29 = arith.addi %0, %c4_i32 : i32
    %30 = arith.index_cast %29 : i32 to index
    %31 = memref.load %arg1[%30] : memref<32xi32, #tpu.memory_space<smem>>
    %c4_i32_16 = arith.constant 4 : i32
    %c0_i32_17 = arith.constant 0 : i32
    %32 = tpu.memref_slice %arg2[%31, %c0_i32_17] : memref<32x128xf32, #tpu.memory_space<any>> -> memref<1x128xf32, #tpu.memory_space<any>>
    %c4_i32_18 = arith.constant 4 : i32
    %c0_i32_19 = arith.constant 0 : i32
    %33 = tpu.memref_slice %arg3[%c4_i32_18, %c0_i32_19] : memref<32x128xf32, #tpu.memory_space<vmem>> -> memref<1x128xf32, #tpu.memory_space<vmem>>
    %34 = tpu.memref_slice %arg4[%c4_i32_16] : memref<32x!tpu.dma_semaphore, #tpu.memory_space<semaphore_mem>> -> memref<1x!tpu.dma_semaphore, #tpu.memory_space<semaphore_mem>>
    %35 = tpu.memref_squeeze %34 : memref<1x!tpu.dma_semaphore, #tpu.memory_space<semaphore_mem>> -> memref<!tpu.dma_semaphore, #tpu.memory_space<semaphore_mem>>
    tpu.enqueue_dma source(%32 : memref<1x128xf32, #tpu.memory_space<any>>) target(%33 : memref<1x128xf32, #tpu.memory_space<vmem>>) target_semaphore(%35 : memref<!tpu.dma_semaphore, #tpu.memory_space<semaphore_mem>>)
    %c5_i32 = arith.constant 5 : i32
    %36 = arith.addi %0, %c5_i32 : i32
    %37 = arith.index_cast %36 : i32 to index
    %38 = memref.load %arg1[%37] : memref<32xi32, #tpu.memory_space<smem>>
    %c5_i32_20 = arith.constant 5 : i32
    %c0_i32_21 = arith.constant 0 : i32
    %39 = tpu.memref_slice %arg2[%38, %c0_i32_21] : memref<32x128xf32, #tpu.memory_space<any>> -> memref<1x128xf32, #tpu.memory_space<any>>
    %c5_i32_22 = arith.constant 5 : i32
    %c0_i32_23 = arith.constant 0 : i32
    %40 = tpu.memref_slice %arg3[%c5_i32_22, %c0_i32_23] : memref<32x128xf32, #tpu.memory_space<vmem>> -> memref<1x128xf32, #tpu.memory_space<vmem>>
    %41 = tpu.memref_slice %arg4[%c5_i32_20] : memref<32x!tpu.dma_semaphore, #tpu.memory_space<semaphore_mem>> -> memref<1x!tpu.dma_semaphore, #tpu.memory_space<semaphore_mem>>
    %42 = tpu.memref_squeeze %41 : memref<1x!tpu.dma_semaphore, #tpu.memory_space<semaphore_mem>> -> memref<!tpu.dma_semaphore, #tpu.memory_space<semaphore_mem>>
    tpu.enqueue_dma source(%39 : memref<1x128xf32, #tpu.memory_space<any>>) target(%40 : memref<1x128xf32, #tpu.memory_space<vmem>>) target_semaphore(%42 : memref<!tpu.dma_semaphore, #tpu.memory_space<semaphore_mem>>)
    %c6_i32 = arith.constant 6 : i32
    %43 = arith.addi %0, %c6_i32 : i32
    %44 = arith.index_cast %43 : i32 to index
    %45 = memref.load %arg1[%44] : memref<32xi32, #tpu.memory_space<smem>>
    %c6_i32_24 = arith.constant 6 : i32
    %c0_i32_25 = arith.constant 0 : i32
    %46 = tpu.memref_slice %arg2[%45, %c0_i32_25] : memref<32x128xf32, #tpu.memory_space<any>> -> memref<1x128xf32, #tpu.memory_space<any>>
    %c6_i32_26 = arith.constant 6 : i32
    %c0_i32_27 = arith.constant 0 : i32
    %47 = tpu.memref_slice %arg3[%c6_i32_26, %c0_i32_27] : memref<32x128xf32, #tpu.memory_space<vmem>> -> memref<1x128xf32, #tpu.memory_space<vmem>>
    %48 = tpu.memref_slice %arg4[%c6_i32_24] : memref<32x!tpu.dma_semaphore, #tpu.memory_space<semaphore_mem>> -> memref<1x!tpu.dma_semaphore, #tpu.memory_space<semaphore_mem>>
    %49 = tpu.memref_squeeze %48 : memref<1x!tpu.dma_semaphore, #tpu.memory_space<semaphore_mem>> -> memref<!tpu.dma_semaphore, #tpu.memory_space<semaphore_mem>>
    tpu.enqueue_dma source(%46 : memref<1x128xf32, #tpu.memory_space<any>>) target(%47 : memref<1x128xf32, #tpu.memory_space<vmem>>) target_semaphore(%49 : memref<!tpu.dma_semaphore, #tpu.memory_space<semaphore_mem>>)
    %c7_i32 = arith.constant 7 : i32
    %50 = arith.addi %0, %c7_i32 : i32
    %51 = arith.index_cast %50 : i32 to index
    %52 = memref.load %arg1[%51] : memref<32xi32, #tpu.memory_space<smem>>
    %c7_i32_28 = arith.constant 7 : i32
    %c0_i32_29 = arith.constant 0 : i32
    %53 = tpu.memref_slice %arg2[%52, %c0_i32_29] : memref<32x128xf32, #tpu.memory_space<any>> -> memref<1x128xf32, #tpu.memory_space<any>>
    %c7_i32_30 = arith.constant 7 : i32
    %c0_i32_31 = arith.constant 0 : i32
    %54 = tpu.memref_slice %arg3[%c7_i32_30, %c0_i32_31] : memref<32x128xf32, #tpu.memory_space<vmem>> -> memref<1x128xf32, #tpu.memory_space<vmem>>
    %55 = tpu.memref_slice %arg4[%c7_i32_28] : memref<32x!tpu.dma_semaphore, #tpu.memory_space<semaphore_mem>> -> memref<1x!tpu.dma_semaphore, #tpu.memory_space<semaphore_mem>>
    %56 = tpu.memref_squeeze %55 : memref<1x!tpu.dma_semaphore, #tpu.memory_space<semaphore_mem>> -> memref<!tpu.dma_semaphore, #tpu.memory_space<semaphore_mem>>
    tpu.enqueue_dma source(%53 : memref<1x128xf32, #tpu.memory_space<any>>) target(%54 : memref<1x128xf32, #tpu.memory_space<vmem>>) target_semaphore(%56 : memref<!tpu.dma_semaphore, #tpu.memory_space<semaphore_mem>>)
    %c8_i32 = arith.constant 8 : i32
    %57 = arith.addi %0, %c8_i32 : i32
    %58 = arith.index_cast %57 : i32 to index
    %59 = memref.load %arg1[%58] : memref<32xi32, #tpu.memory_space<smem>>
    %c8_i32_32 = arith.constant 8 : i32
    %c0_i32_33 = arith.constant 0 : i32
    %60 = tpu.memref_slice %arg2[%59, %c0_i32_33] : memref<32x128xf32, #tpu.memory_space<any>> -> memref<1x128xf32, #tpu.memory_space<any>>
    %c8_i32_34 = arith.constant 8 : i32
    %c0_i32_35 = arith.constant 0 : i32
    %61 = tpu.memref_slice %arg3[%c8_i32_34, %c0_i32_35] : memref<32x128xf32, #tpu.memory_space<vmem>> -> memref<1x128xf32, #tpu.memory_space<vmem>>
    %62 = tpu.memref_slice %arg4[%c8_i32_32] : memref<32x!tpu.dma_semaphore, #tpu.memory_space<semaphore_mem>> -> memref<1x!tpu.dma_semaphore, #tpu.memory_space<semaphore_mem>>
    %63 = tpu.memref_squeeze %62 : memref<1x!tpu.dma_semaphore, #tpu.memory_space<semaphore_mem>> -> memref<!tpu.dma_semaphore, #tpu.memory_space<semaphore_mem>>
    tpu.enqueue_dma source(%60 : memref<1x128xf32, #tpu.memory_space<any>>) target(%61 : memref<1x128xf32, #tpu.memory_space<vmem>>) target_semaphore(%63 : memref<!tpu.dma_semaphore, #tpu.memory_space<semaphore_mem>>)
    %c9_i32 = arith.constant 9 : i32
    %64 = arith.addi %0, %c9_i32 : i32
    %65 = arith.index_cast %64 : i32 to index
    %66 = memref.load %arg1[%65] : memref<32xi32, #tpu.memory_space<smem>>
    %c9_i32_36 = arith.constant 9 : i32
    %c0_i32_37 = arith.constant 0 : i32
    %67 = tpu.memref_slice %arg2[%66, %c0_i32_37] : memref<32x128xf32, #tpu.memory_space<any>> -> memref<1x128xf32, #tpu.memory_space<any>>
    %c9_i32_38 = arith.constant 9 : i32
    %c0_i32_39 = arith.constant 0 : i32
    %68 = tpu.memref_slice %arg3[%c9_i32_38, %c0_i32_39] : memref<32x128xf32, #tpu.memory_space<vmem>> -> memref<1x128xf32, #tpu.memory_space<vmem>>
    %69 = tpu.memref_slice %arg4[%c9_i32_36] : memref<32x!tpu.dma_semaphore, #tpu.memory_space<semaphore_mem>> -> memref<1x!tpu.dma_semaphore, #tpu.memory_space<semaphore_mem>>
    %70 = tpu.memref_squeeze %69 : memref<1x!tpu.dma_semaphore, #tpu.memory_space<semaphore_mem>> -> memref<!tpu.dma_semaphore, #tpu.memory_space<semaphore_mem>>
    tpu.enqueue_dma source(%67 : memref<1x128xf32, #tpu.memory_space<any>>) target(%68 : memref<1x128xf32, #tpu.memory_space<vmem>>) target_semaphore(%70 : memref<!tpu.dma_semaphore, #tpu.memory_space<semaphore_mem>>)
    %c10_i32 = arith.constant 10 : i32
    %71 = arith.addi %0, %c10_i32 : i32
    %72 = arith.index_cast %71 : i32 to index
    %73 = memref.load %arg1[%72] : memref<32xi32, #tpu.memory_space<smem>>
    %c10_i32_40 = arith.constant 10 : i32
    %c0_i32_41 = arith.constant 0 : i32
    %74 = tpu.memref_slice %arg2[%73, %c0_i32_41] : memref<32x128xf32, #tpu.memory_space<any>> -> memref<1x128xf32, #tpu.memory_space<any>>
    %c10_i32_42 = arith.constant 10 : i32
    %c0_i32_43 = arith.constant 0 : i32
    %75 = tpu.memref_slice %arg3[%c10_i32_42, %c0_i32_43] : memref<32x128xf32, #tpu.memory_space<vmem>> -> memref<1x128xf32, #tpu.memory_space<vmem>>
    %76 = tpu.memref_slice %arg4[%c10_i32_40] : memref<32x!tpu.dma_semaphore, #tpu.memory_space<semaphore_mem>> -> memref<1x!tpu.dma_semaphore, #tpu.memory_space<semaphore_mem>>
    %77 = tpu.memref_squeeze %76 : memref<1x!tpu.dma_semaphore, #tpu.memory_space<semaphore_mem>> -> memref<!tpu.dma_semaphore, #tpu.memory_space<semaphore_mem>>
    tpu.enqueue_dma source(%74 : memref<1x128xf32, #tpu.memory_space<any>>) target(%75 : memref<1x128xf32, #tpu.memory_space<vmem>>) target_semaphore(%77 : memref<!tpu.dma_semaphore, #tpu.memory_space<semaphore_mem>>)
    %c11_i32 = arith.constant 11 : i32
    %78 = arith.addi %0, %c11_i32 : i32
    %79 = arith.index_cast %78 : i32 to index
    %80 = memref.load %arg1[%79] : memref<32xi32, #tpu.memory_space<smem>>
    %c11_i32_44 = arith.constant 11 : i32
    %c0_i32_45 = arith.constant 0 : i32
    %81 = tpu.memref_slice %arg2[%80, %c0_i32_45] : memref<32x128xf32, #tpu.memory_space<any>> -> memref<1x128xf32, #tpu.memory_space<any>>
    %c11_i32_46 = arith.constant 11 : i32
    %c0_i32_47 = arith.constant 0 : i32
    %82 = tpu.memref_slice %arg3[%c11_i32_46, %c0_i32_47] : memref<32x128xf32, #tpu.memory_space<vmem>> -> memref<1x128xf32, #tpu.memory_space<vmem>>
    %83 = tpu.memref_slice %arg4[%c11_i32_44] : memref<32x!tpu.dma_semaphore, #tpu.memory_space<semaphore_mem>> -> memref<1x!tpu.dma_semaphore, #tpu.memory_space<semaphore_mem>>
    %84 = tpu.memref_squeeze %83 : memref<1x!tpu.dma_semaphore, #tpu.memory_space<semaphore_mem>> -> memref<!tpu.dma_semaphore, #tpu.memory_space<semaphore_mem>>
    tpu.enqueue_dma source(%81 : memref<1x128xf32, #tpu.memory_space<any>>) target(%82 : memref<1x128xf32, #tpu.memory_space<vmem>>) target_semaphore(%84 : memref<!tpu.dma_semaphore, #tpu.memory_space<semaphore_mem>>)
    %c12_i32 = arith.constant 12 : i32
    %85 = arith.addi %0, %c12_i32 : i32
    %86 = arith.index_cast %85 : i32 to index
    %87 = memref.load %arg1[%86] : memref<32xi32, #tpu.memory_space<smem>>
    %c12_i32_48 = arith.constant 12 : i32
    %c0_i32_49 = arith.constant 0 : i32
    %88 = tpu.memref_slice %arg2[%87, %c0_i32_49] : memref<32x128xf32, #tpu.memory_space<any>> -> memref<1x128xf32, #tpu.memory_space<any>>
    %c12_i32_50 = arith.constant 12 : i32
    %c0_i32_51 = arith.constant 0 : i32
    %89 = tpu.memref_slice %arg3[%c12_i32_50, %c0_i32_51] : memref<32x128xf32, #tpu.memory_space<vmem>> -> memref<1x128xf32, #tpu.memory_space<vmem>>
    %90 = tpu.memref_slice %arg4[%c12_i32_48] : memref<32x!tpu.dma_semaphore, #tpu.memory_space<semaphore_mem>> -> memref<1x!tpu.dma_semaphore, #tpu.memory_space<semaphore_mem>>
    %91 = tpu.memref_squeeze %90 : memref<1x!tpu.dma_semaphore, #tpu.memory_space<semaphore_mem>> -> memref<!tpu.dma_semaphore, #tpu.memory_space<semaphore_mem>>
    tpu.enqueue_dma source(%88 : memref<1x128xf32, #tpu.memory_space<any>>) target(%89 : memref<1x128xf32, #tpu.memory_space<vmem>>) target_semaphore(%91 : memref<!tpu.dma_semaphore, #tpu.memory_space<semaphore_mem>>)
    %c13_i32 = arith.constant 13 : i32
    %92 = arith.addi %0, %c13_i32 : i32
    %93 = arith.index_cast %92 : i32 to index
    %94 = memref.load %arg1[%93] : memref<32xi32, #tpu.memory_space<smem>>
    %c13_i32_52 = arith.constant 13 : i32
    %c0_i32_53 = arith.constant 0 : i32
    %95 = tpu.memref_slice %arg2[%94, %c0_i32_53] : memref<32x128xf32, #tpu.memory_space<any>> -> memref<1x128xf32, #tpu.memory_space<any>>
    %c13_i32_54 = arith.constant 13 : i32
    %c0_i32_55 = arith.constant 0 : i32
    %96 = tpu.memref_slice %arg3[%c13_i32_54, %c0_i32_55] : memref<32x128xf32, #tpu.memory_space<vmem>> -> memref<1x128xf32, #tpu.memory_space<vmem>>
    %97 = tpu.memref_slice %arg4[%c13_i32_52] : memref<32x!tpu.dma_semaphore, #tpu.memory_space<semaphore_mem>> -> memref<1x!tpu.dma_semaphore, #tpu.memory_space<semaphore_mem>>
    %98 = tpu.memref_squeeze %97 : memref<1x!tpu.dma_semaphore, #tpu.memory_space<semaphore_mem>> -> memref<!tpu.dma_semaphore, #tpu.memory_space<semaphore_mem>>
    tpu.enqueue_dma source(%95 : memref<1x128xf32, #tpu.memory_space<any>>) target(%96 : memref<1x128xf32, #tpu.memory_space<vmem>>) target_semaphore(%98 : memref<!tpu.dma_semaphore, #tpu.memory_space<semaphore_mem>>)
    %c14_i32 = arith.constant 14 : i32
    %99 = arith.addi %0, %c14_i32 : i32
    %100 = arith.index_cast %99 : i32 to index
    %101 = memref.load %arg1[%100] : memref<32xi32, #tpu.memory_space<smem>>
    %c14_i32_56 = arith.constant 14 : i32
    %c0_i32_57 = arith.constant 0 : i32
    %102 = tpu.memref_slice %arg2[%101, %c0_i32_57] : memref<32x128xf32, #tpu.memory_space<any>> -> memref<1x128xf32, #tpu.memory_space<any>>
    %c14_i32_58 = arith.constant 14 : i32
    %c0_i32_59 = arith.constant 0 : i32
    %103 = tpu.memref_slice %arg3[%c14_i32_58, %c0_i32_59] : memref<32x128xf32, #tpu.memory_space<vmem>> -> memref<1x128xf32, #tpu.memory_space<vmem>>
    %104 = tpu.memref_slice %arg4[%c14_i32_56] : memref<32x!tpu.dma_semaphore, #tpu.memory_space<semaphore_mem>> -> memref<1x!tpu.dma_semaphore, #tpu.memory_space<semaphore_mem>>
    %105 = tpu.memref_squeeze %104 : memref<1x!tpu.dma_semaphore, #tpu.memory_space<semaphore_mem>> -> memref<!tpu.dma_semaphore, #tpu.memory_space<semaphore_mem>>
    tpu.enqueue_dma source(%102 : memref<1x128xf32, #tpu.memory_space<any>>) target(%103 : memref<1x128xf32, #tpu.memory_space<vmem>>) target_semaphore(%105 : memref<!tpu.dma_semaphore, #tpu.memory_space<semaphore_mem>>)
    %c15_i32 = arith.constant 15 : i32
    %106 = arith.addi %0, %c15_i32 : i32
    %107 = arith.index_cast %106 : i32 to index
    %108 = memref.load %arg1[%107] : memref<32xi32, #tpu.memory_space<smem>>
    %c15_i32_60 = arith.constant 15 : i32
    %c0_i32_61 = arith.constant 0 : i32
    %109 = tpu.memref_slice %arg2[%108, %c0_i32_61] : memref<32x128xf32, #tpu.memory_space<any>> -> memref<1x128xf32, #tpu.memory_space<any>>
    %c15_i32_62 = arith.constant 15 : i32
    %c0_i32_63 = arith.constant 0 : i32
    %110 = tpu.memref_slice %arg3[%c15_i32_62, %c0_i32_63] : memref<32x128xf32, #tpu.memory_space<vmem>> -> memref<1x128xf32, #tpu.memory_space<vmem>>
    %111 = tpu.memref_slice %arg4[%c15_i32_60] : memref<32x!tpu.dma_semaphore, #tpu.memory_space<semaphore_mem>> -> memref<1x!tpu.dma_semaphore, #tpu.memory_space<semaphore_mem>>
    %112 = tpu.memref_squeeze %111 : memref<1x!tpu.dma_semaphore, #tpu.memory_space<semaphore_mem>> -> memref<!tpu.dma_semaphore, #tpu.memory_space<semaphore_mem>>
    tpu.enqueue_dma source(%109 : memref<1x128xf32, #tpu.memory_space<any>>) target(%110 : memref<1x128xf32, #tpu.memory_space<vmem>>) target_semaphore(%112 : memref<!tpu.dma_semaphore, #tpu.memory_space<semaphore_mem>>)
    %c16_i32 = arith.constant 16 : i32
    %113 = arith.addi %0, %c16_i32 : i32
    %114 = arith.index_cast %113 : i32 to index
    %115 = memref.load %arg1[%114] : memref<32xi32, #tpu.memory_space<smem>>
    %c16_i32_64 = arith.constant 16 : i32
    %c0_i32_65 = arith.constant 0 : i32
    %116 = tpu.memref_slice %arg2[%115, %c0_i32_65] : memref<32x128xf32, #tpu.memory_space<any>> -> memref<1x128xf32, #tpu.memory_space<any>>
    %c16_i32_66 = arith.constant 16 : i32
    %c0_i32_67 = arith.constant 0 : i32
    %117 = tpu.memref_slice %arg3[%c16_i32_66, %c0_i32_67] : memref<32x128xf32, #tpu.memory_space<vmem>> -> memref<1x128xf32, #tpu.memory_space<vmem>>
    %118 = tpu.memref_slice %arg4[%c16_i32_64] : memref<32x!tpu.dma_semaphore, #tpu.memory_space<semaphore_mem>> -> memref<1x!tpu.dma_semaphore, #tpu.memory_space<semaphore_mem>>
    %119 = tpu.memref_squeeze %118 : memref<1x!tpu.dma_semaphore, #tpu.memory_space<semaphore_mem>> -> memref<!tpu.dma_semaphore, #tpu.memory_space<semaphore_mem>>
    tpu.enqueue_dma source(%116 : memref<1x128xf32, #tpu.memory_space<any>>) target(%117 : memref<1x128xf32, #tpu.memory_space<vmem>>) target_semaphore(%119 : memref<!tpu.dma_semaphore, #tpu.memory_space<semaphore_mem>>)
    %c17_i32 = arith.constant 17 : i32
    %120 = arith.addi %0, %c17_i32 : i32
    %121 = arith.index_cast %120 : i32 to index
    %122 = memref.load %arg1[%121] : memref<32xi32, #tpu.memory_space<smem>>
    %c17_i32_68 = arith.constant 17 : i32
    %c0_i32_69 = arith.constant 0 : i32
    %123 = tpu.memref_slice %arg2[%122, %c0_i32_69] : memref<32x128xf32, #tpu.memory_space<any>> -> memref<1x128xf32, #tpu.memory_space<any>>
    %c17_i32_70 = arith.constant 17 : i32
    %c0_i32_71 = arith.constant 0 : i32
    %124 = tpu.memref_slice %arg3[%c17_i32_70, %c0_i32_71] : memref<32x128xf32, #tpu.memory_space<vmem>> -> memref<1x128xf32, #tpu.memory_space<vmem>>
    %125 = tpu.memref_slice %arg4[%c17_i32_68] : memref<32x!tpu.dma_semaphore, #tpu.memory_space<semaphore_mem>> -> memref<1x!tpu.dma_semaphore, #tpu.memory_space<semaphore_mem>>
    %126 = tpu.memref_squeeze %125 : memref<1x!tpu.dma_semaphore, #tpu.memory_space<semaphore_mem>> -> memref<!tpu.dma_semaphore, #tpu.memory_space<semaphore_mem>>
    tpu.enqueue_dma source(%123 : memref<1x128xf32, #tpu.memory_space<any>>) target(%124 : memref<1x128xf32, #tpu.memory_space<vmem>>) target_semaphore(%126 : memref<!tpu.dma_semaphore, #tpu.memory_space<semaphore_mem>>)
    %c18_i32 = arith.constant 18 : i32
    %127 = arith.addi %0, %c18_i32 : i32
    %128 = arith.index_cast %127 : i32 to index
    %129 = memref.load %arg1[%128] : memref<32xi32, #tpu.memory_space<smem>>
    %c18_i32_72 = arith.constant 18 : i32
    %c0_i32_73 = arith.constant 0 : i32
    %130 = tpu.memref_slice %arg2[%129, %c0_i32_73] : memref<32x128xf32, #tpu.memory_space<any>> -> memref<1x128xf32, #tpu.memory_space<any>>
    %c18_i32_74 = arith.constant 18 : i32
    %c0_i32_75 = arith.constant 0 : i32
    %131 = tpu.memref_slice %arg3[%c18_i32_74, %c0_i32_75] : memref<32x128xf32, #tpu.memory_space<vmem>> -> memref<1x128xf32, #tpu.memory_space<vmem>>
    %132 = tpu.memref_slice %arg4[%c18_i32_72] : memref<32x!tpu.dma_semaphore, #tpu.memory_space<semaphore_mem>> -> memref<1x!tpu.dma_semaphore, #tpu.memory_space<semaphore_mem>>
    %133 = tpu.memref_squeeze %132 : memref<1x!tpu.dma_semaphore, #tpu.memory_space<semaphore_mem>> -> memref<!tpu.dma_semaphore, #tpu.memory_space<semaphore_mem>>
    tpu.enqueue_dma source(%130 : memref<1x128xf32, #tpu.memory_space<any>>) target(%131 : memref<1x128xf32, #tpu.memory_space<vmem>>) target_semaphore(%133 : memref<!tpu.dma_semaphore, #tpu.memory_space<semaphore_mem>>)
    %c19_i32 = arith.constant 19 : i32
    %134 = arith.addi %0, %c19_i32 : i32
    %135 = arith.index_cast %134 : i32 to index
    %136 = memref.load %arg1[%135] : memref<32xi32, #tpu.memory_space<smem>>
    %c19_i32_76 = arith.constant 19 : i32
    %c0_i32_77 = arith.constant 0 : i32
    %137 = tpu.memref_slice %arg2[%136, %c0_i32_77] : memref<32x128xf32, #tpu.memory_space<any>> -> memref<1x128xf32, #tpu.memory_space<any>>
    %c19_i32_78 = arith.constant 19 : i32
    %c0_i32_79 = arith.constant 0 : i32
    %138 = tpu.memref_slice %arg3[%c19_i32_78, %c0_i32_79] : memref<32x128xf32, #tpu.memory_space<vmem>> -> memref<1x128xf32, #tpu.memory_space<vmem>>
    %139 = tpu.memref_slice %arg4[%c19_i32_76] : memref<32x!tpu.dma_semaphore, #tpu.memory_space<semaphore_mem>> -> memref<1x!tpu.dma_semaphore, #tpu.memory_space<semaphore_mem>>
    %140 = tpu.memref_squeeze %139 : memref<1x!tpu.dma_semaphore, #tpu.memory_space<semaphore_mem>> -> memref<!tpu.dma_semaphore, #tpu.memory_space<semaphore_mem>>
    tpu.enqueue_dma source(%137 : memref<1x128xf32, #tpu.memory_space<any>>) target(%138 : memref<1x128xf32, #tpu.memory_space<vmem>>) target_semaphore(%140 : memref<!tpu.dma_semaphore, #tpu.memory_space<semaphore_mem>>)
    %c20_i32 = arith.constant 20 : i32
    %141 = arith.addi %0, %c20_i32 : i32
    %142 = arith.index_cast %141 : i32 to index
    %143 = memref.load %arg1[%142] : memref<32xi32, #tpu.memory_space<smem>>
    %c20_i32_80 = arith.constant 20 : i32
    %c0_i32_81 = arith.constant 0 : i32
    %144 = tpu.memref_slice %arg2[%143, %c0_i32_81] : memref<32x128xf32, #tpu.memory_space<any>> -> memref<1x128xf32, #tpu.memory_space<any>>
    %c20_i32_82 = arith.constant 20 : i32
    %c0_i32_83 = arith.constant 0 : i32
    %145 = tpu.memref_slice %arg3[%c20_i32_82, %c0_i32_83] : memref<32x128xf32, #tpu.memory_space<vmem>> -> memref<1x128xf32, #tpu.memory_space<vmem>>
    %146 = tpu.memref_slice %arg4[%c20_i32_80] : memref<32x!tpu.dma_semaphore, #tpu.memory_space<semaphore_mem>> -> memref<1x!tpu.dma_semaphore, #tpu.memory_space<semaphore_mem>>
    %147 = tpu.memref_squeeze %146 : memref<1x!tpu.dma_semaphore, #tpu.memory_space<semaphore_mem>> -> memref<!tpu.dma_semaphore, #tpu.memory_space<semaphore_mem>>
    tpu.enqueue_dma source(%144 : memref<1x128xf32, #tpu.memory_space<any>>) target(%145 : memref<1x128xf32, #tpu.memory_space<vmem>>) target_semaphore(%147 : memref<!tpu.dma_semaphore, #tpu.memory_space<semaphore_mem>>)
    %c21_i32 = arith.constant 21 : i32
    %148 = arith.addi %0, %c21_i32 : i32
    %149 = arith.index_cast %148 : i32 to index
    %150 = memref.load %arg1[%149] : memref<32xi32, #tpu.memory_space<smem>>
    %c21_i32_84 = arith.constant 21 : i32
    %c0_i32_85 = arith.constant 0 : i32
    %151 = tpu.memref_slice %arg2[%150, %c0_i32_85] : memref<32x128xf32, #tpu.memory_space<any>> -> memref<1x128xf32, #tpu.memory_space<any>>
    %c21_i32_86 = arith.constant 21 : i32
    %c0_i32_87 = arith.constant 0 : i32
    %152 = tpu.memref_slice %arg3[%c21_i32_86, %c0_i32_87] : memref<32x128xf32, #tpu.memory_space<vmem>> -> memref<1x128xf32, #tpu.memory_space<vmem>>
    %153 = tpu.memref_slice %arg4[%c21_i32_84] : memref<32x!tpu.dma_semaphore, #tpu.memory_space<semaphore_mem>> -> memref<1x!tpu.dma_semaphore, #tpu.memory_space<semaphore_mem>>
    %154 = tpu.memref_squeeze %153 : memref<1x!tpu.dma_semaphore, #tpu.memory_space<semaphore_mem>> -> memref<!tpu.dma_semaphore, #tpu.memory_space<semaphore_mem>>
    tpu.enqueue_dma source(%151 : memref<1x128xf32, #tpu.memory_space<any>>) target(%152 : memref<1x128xf32, #tpu.memory_space<vmem>>) target_semaphore(%154 : memref<!tpu.dma_semaphore, #tpu.memory_space<semaphore_mem>>)
    %c22_i32 = arith.constant 22 : i32
    %155 = arith.addi %0, %c22_i32 : i32
    %156 = arith.index_cast %155 : i32 to index
    %157 = memref.load %arg1[%156] : memref<32xi32, #tpu.memory_space<smem>>
    %c22_i32_88 = arith.constant 22 : i32
    %c0_i32_89 = arith.constant 0 : i32
    %158 = tpu.memref_slice %arg2[%157, %c0_i32_89] : memref<32x128xf32, #tpu.memory_space<any>> -> memref<1x128xf32, #tpu.memory_space<any>>
    %c22_i32_90 = arith.constant 22 : i32
    %c0_i32_91 = arith.constant 0 : i32
    %159 = tpu.memref_slice %arg3[%c22_i32_90, %c0_i32_91] : memref<32x128xf32, #tpu.memory_space<vmem>> -> memref<1x128xf32, #tpu.memory_space<vmem>>
    %160 = tpu.memref_slice %arg4[%c22_i32_88] : memref<32x!tpu.dma_semaphore, #tpu.memory_space<semaphore_mem>> -> memref<1x!tpu.dma_semaphore, #tpu.memory_space<semaphore_mem>>
    %161 = tpu.memref_squeeze %160 : memref<1x!tpu.dma_semaphore, #tpu.memory_space<semaphore_mem>> -> memref<!tpu.dma_semaphore, #tpu.memory_space<semaphore_mem>>
    tpu.enqueue_dma source(%158 : memref<1x128xf32, #tpu.memory_space<any>>) target(%159 : memref<1x128xf32, #tpu.memory_space<vmem>>) target_semaphore(%161 : memref<!tpu.dma_semaphore, #tpu.memory_space<semaphore_mem>>)
    %c23_i32 = arith.constant 23 : i32
    %162 = arith.addi %0, %c23_i32 : i32
    %163 = arith.index_cast %162 : i32 to index
    %164 = memref.load %arg1[%163] : memref<32xi32, #tpu.memory_space<smem>>
    %c23_i32_92 = arith.constant 23 : i32
    %c0_i32_93 = arith.constant 0 : i32
    %165 = tpu.memref_slice %arg2[%164, %c0_i32_93] : memref<32x128xf32, #tpu.memory_space<any>> -> memref<1x128xf32, #tpu.memory_space<any>>
    %c23_i32_94 = arith.constant 23 : i32
    %c0_i32_95 = arith.constant 0 : i32
    %166 = tpu.memref_slice %arg3[%c23_i32_94, %c0_i32_95] : memref<32x128xf32, #tpu.memory_space<vmem>> -> memref<1x128xf32, #tpu.memory_space<vmem>>
    %167 = tpu.memref_slice %arg4[%c23_i32_92] : memref<32x!tpu.dma_semaphore, #tpu.memory_space<semaphore_mem>> -> memref<1x!tpu.dma_semaphore, #tpu.memory_space<semaphore_mem>>
    %168 = tpu.memref_squeeze %167 : memref<1x!tpu.dma_semaphore, #tpu.memory_space<semaphore_mem>> -> memref<!tpu.dma_semaphore, #tpu.memory_space<semaphore_mem>>
    tpu.enqueue_dma source(%165 : memref<1x128xf32, #tpu.memory_space<any>>) target(%166 : memref<1x128xf32, #tpu.memory_space<vmem>>) target_semaphore(%168 : memref<!tpu.dma_semaphore, #tpu.memory_space<semaphore_mem>>)
    %c24_i32 = arith.constant 24 : i32
    %169 = arith.addi %0, %c24_i32 : i32
    %170 = arith.index_cast %169 : i32 to index
    %171 = memref.load %arg1[%170] : memref<32xi32, #tpu.memory_space<smem>>
    %c24_i32_96 = arith.constant 24 : i32
    %c0_i32_97 = arith.constant 0 : i32
    %172 = tpu.memref_slice %arg2[%171, %c0_i32_97] : memref<32x128xf32, #tpu.memory_space<any>> -> memref<1x128xf32, #tpu.memory_space<any>>
    %c24_i32_98 = arith.constant 24 : i32
    %c0_i32_99 = arith.constant 0 : i32
    %173 = tpu.memref_slice %arg3[%c24_i32_98, %c0_i32_99] : memref<32x128xf32, #tpu.memory_space<vmem>> -> memref<1x128xf32, #tpu.memory_space<vmem>>
    %174 = tpu.memref_slice %arg4[%c24_i32_96] : memref<32x!tpu.dma_semaphore, #tpu.memory_space<semaphore_mem>> -> memref<1x!tpu.dma_semaphore, #tpu.memory_space<semaphore_mem>>
    %175 = tpu.memref_squeeze %174 : memref<1x!tpu.dma_semaphore, #tpu.memory_space<semaphore_mem>> -> memref<!tpu.dma_semaphore, #tpu.memory_space<semaphore_mem>>
    tpu.enqueue_dma source(%172 : memref<1x128xf32, #tpu.memory_space<any>>) target(%173 : memref<1x128xf32, #tpu.memory_space<vmem>>) target_semaphore(%175 : memref<!tpu.dma_semaphore, #tpu.memory_space<semaphore_mem>>)
    %c25_i32 = arith.constant 25 : i32
    %176 = arith.addi %0, %c25_i32 : i32
    %177 = arith.index_cast %176 : i32 to index
    %178 = memref.load %arg1[%177] : memref<32xi32, #tpu.memory_space<smem>>
    %c25_i32_100 = arith.constant 25 : i32
    %c0_i32_101 = arith.constant 0 : i32
    %179 = tpu.memref_slice %arg2[%178, %c0_i32_101] : memref<32x128xf32, #tpu.memory_space<any>> -> memref<1x128xf32, #tpu.memory_space<any>>
    %c25_i32_102 = arith.constant 25 : i32
    %c0_i32_103 = arith.constant 0 : i32
    %180 = tpu.memref_slice %arg3[%c25_i32_102, %c0_i32_103] : memref<32x128xf32, #tpu.memory_space<vmem>> -> memref<1x128xf32, #tpu.memory_space<vmem>>
    %181 = tpu.memref_slice %arg4[%c25_i32_100] : memref<32x!tpu.dma_semaphore, #tpu.memory_space<semaphore_mem>> -> memref<1x!tpu.dma_semaphore, #tpu.memory_space<semaphore_mem>>
    %182 = tpu.memref_squeeze %181 : memref<1x!tpu.dma_semaphore, #tpu.memory_space<semaphore_mem>> -> memref<!tpu.dma_semaphore, #tpu.memory_space<semaphore_mem>>
    tpu.enqueue_dma source(%179 : memref<1x128xf32, #tpu.memory_space<any>>) target(%180 : memref<1x128xf32, #tpu.memory_space<vmem>>) target_semaphore(%182 : memref<!tpu.dma_semaphore, #tpu.memory_space<semaphore_mem>>)
    %c26_i32 = arith.constant 26 : i32
    %183 = arith.addi %0, %c26_i32 : i32
    %184 = arith.index_cast %183 : i32 to index
    %185 = memref.load %arg1[%184] : memref<32xi32, #tpu.memory_space<smem>>
    %c26_i32_104 = arith.constant 26 : i32
    %c0_i32_105 = arith.constant 0 : i32
    %186 = tpu.memref_slice %arg2[%185, %c0_i32_105] : memref<32x128xf32, #tpu.memory_space<any>> -> memref<1x128xf32, #tpu.memory_space<any>>
    %c26_i32_106 = arith.constant 26 : i32
    %c0_i32_107 = arith.constant 0 : i32
    %187 = tpu.memref_slice %arg3[%c26_i32_106, %c0_i32_107] : memref<32x128xf32, #tpu.memory_space<vmem>> -> memref<1x128xf32, #tpu.memory_space<vmem>>
    %188 = tpu.memref_slice %arg4[%c26_i32_104] : memref<32x!tpu.dma_semaphore, #tpu.memory_space<semaphore_mem>> -> memref<1x!tpu.dma_semaphore, #tpu.memory_space<semaphore_mem>>
    %189 = tpu.memref_squeeze %188 : memref<1x!tpu.dma_semaphore, #tpu.memory_space<semaphore_mem>> -> memref<!tpu.dma_semaphore, #tpu.memory_space<semaphore_mem>>
    tpu.enqueue_dma source(%186 : memref<1x128xf32, #tpu.memory_space<any>>) target(%187 : memref<1x128xf32, #tpu.memory_space<vmem>>) target_semaphore(%189 : memref<!tpu.dma_semaphore, #tpu.memory_space<semaphore_mem>>)
    %c27_i32 = arith.constant 27 : i32
    %190 = arith.addi %0, %c27_i32 : i32
    %191 = arith.index_cast %190 : i32 to index
    %192 = memref.load %arg1[%191] : memref<32xi32, #tpu.memory_space<smem>>
    %c27_i32_108 = arith.constant 27 : i32
    %c0_i32_109 = arith.constant 0 : i32
    %193 = tpu.memref_slice %arg2[%192, %c0_i32_109] : memref<32x128xf32, #tpu.memory_space<any>> -> memref<1x128xf32, #tpu.memory_space<any>>
    %c27_i32_110 = arith.constant 27 : i32
    %c0_i32_111 = arith.constant 0 : i32
    %194 = tpu.memref_slice %arg3[%c27_i32_110, %c0_i32_111] : memref<32x128xf32, #tpu.memory_space<vmem>> -> memref<1x128xf32, #tpu.memory_space<vmem>>
    %195 = tpu.memref_slice %arg4[%c27_i32_108] : memref<32x!tpu.dma_semaphore, #tpu.memory_space<semaphore_mem>> -> memref<1x!tpu.dma_semaphore, #tpu.memory_space<semaphore_mem>>
    %196 = tpu.memref_squeeze %195 : memref<1x!tpu.dma_semaphore, #tpu.memory_space<semaphore_mem>> -> memref<!tpu.dma_semaphore, #tpu.memory_space<semaphore_mem>>
    tpu.enqueue_dma source(%193 : memref<1x128xf32, #tpu.memory_space<any>>) target(%194 : memref<1x128xf32, #tpu.memory_space<vmem>>) target_semaphore(%196 : memref<!tpu.dma_semaphore, #tpu.memory_space<semaphore_mem>>)
    %c28_i32 = arith.constant 28 : i32
    %197 = arith.addi %0, %c28_i32 : i32
    %198 = arith.index_cast %197 : i32 to index
    %199 = memref.load %arg1[%198] : memref<32xi32, #tpu.memory_space<smem>>
    %c28_i32_112 = arith.constant 28 : i32
    %c0_i32_113 = arith.constant 0 : i32
    %200 = tpu.memref_slice %arg2[%199, %c0_i32_113] : memref<32x128xf32, #tpu.memory_space<any>> -> memref<1x128xf32, #tpu.memory_space<any>>
    %c28_i32_114 = arith.constant 28 : i32
    %c0_i32_115 = arith.constant 0 : i32
    %201 = tpu.memref_slice %arg3[%c28_i32_114, %c0_i32_115] : memref<32x128xf32, #tpu.memory_space<vmem>> -> memref<1x128xf32, #tpu.memory_space<vmem>>
    %202 = tpu.memref_slice %arg4[%c28_i32_112] : memref<32x!tpu.dma_semaphore, #tpu.memory_space<semaphore_mem>> -> memref<1x!tpu.dma_semaphore, #tpu.memory_space<semaphore_mem>>
    %203 = tpu.memref_squeeze %202 : memref<1x!tpu.dma_semaphore, #tpu.memory_space<semaphore_mem>> -> memref<!tpu.dma_semaphore, #tpu.memory_space<semaphore_mem>>
    tpu.enqueue_dma source(%200 : memref<1x128xf32, #tpu.memory_space<any>>) target(%201 : memref<1x128xf32, #tpu.memory_space<vmem>>) target_semaphore(%203 : memref<!tpu.dma_semaphore, #tpu.memory_space<semaphore_mem>>)
    %c29_i32 = arith.constant 29 : i32
    %204 = arith.addi %0, %c29_i32 : i32
    %205 = arith.index_cast %204 : i32 to index
    %206 = memref.load %arg1[%205] : memref<32xi32, #tpu.memory_space<smem>>
    %c29_i32_116 = arith.constant 29 : i32
    %c0_i32_117 = arith.constant 0 : i32
    %207 = tpu.memref_slice %arg2[%206, %c0_i32_117] : memref<32x128xf32, #tpu.memory_space<any>> -> memref<1x128xf32, #tpu.memory_space<any>>
    %c29_i32_118 = arith.constant 29 : i32
    %c0_i32_119 = arith.constant 0 : i32
    %208 = tpu.memref_slice %arg3[%c29_i32_118, %c0_i32_119] : memref<32x128xf32, #tpu.memory_space<vmem>> -> memref<1x128xf32, #tpu.memory_space<vmem>>
    %209 = tpu.memref_slice %arg4[%c29_i32_116] : memref<32x!tpu.dma_semaphore, #tpu.memory_space<semaphore_mem>> -> memref<1x!tpu.dma_semaphore, #tpu.memory_space<semaphore_mem>>
    %210 = tpu.memref_squeeze %209 : memref<1x!tpu.dma_semaphore, #tpu.memory_space<semaphore_mem>> -> memref<!tpu.dma_semaphore, #tpu.memory_space<semaphore_mem>>
    tpu.enqueue_dma source(%207 : memref<1x128xf32, #tpu.memory_space<any>>) target(%208 : memref<1x128xf32, #tpu.memory_space<vmem>>) target_semaphore(%210 : memref<!tpu.dma_semaphore, #tpu.memory_space<semaphore_mem>>)
    %c30_i32 = arith.constant 30 : i32
    %211 = arith.addi %0, %c30_i32 : i32
    %212 = arith.index_cast %211 : i32 to index
    %213 = memref.load %arg1[%212] : memref<32xi32, #tpu.memory_space<smem>>
    %c30_i32_120 = arith.constant 30 : i32
    %c0_i32_121 = arith.constant 0 : i32
    %214 = tpu.memref_slice %arg2[%213, %c0_i32_121] : memref<32x128xf32, #tpu.memory_space<any>> -> memref<1x128xf32, #tpu.memory_space<any>>
    %c30_i32_122 = arith.constant 30 : i32
    %c0_i32_123 = arith.constant 0 : i32
    %215 = tpu.memref_slice %arg3[%c30_i32_122, %c0_i32_123] : memref<32x128xf32, #tpu.memory_space<vmem>> -> memref<1x128xf32, #tpu.memory_space<vmem>>
    %216 = tpu.memref_slice %arg4[%c30_i32_120] : memref<32x!tpu.dma_semaphore, #tpu.memory_space<semaphore_mem>> -> memref<1x!tpu.dma_semaphore, #tpu.memory_space<semaphore_mem>>
    %217 = tpu.memref_squeeze %216 : memref<1x!tpu.dma_semaphore, #tpu.memory_space<semaphore_mem>> -> memref<!tpu.dma_semaphore, #tpu.memory_space<semaphore_mem>>
    tpu.enqueue_dma source(%214 : memref<1x128xf32, #tpu.memory_space<any>>) target(%215 : memref<1x128xf32, #tpu.memory_space<vmem>>) target_semaphore(%217 : memref<!tpu.dma_semaphore, #tpu.memory_space<semaphore_mem>>)
    %c31_i32 = arith.constant 31 : i32
    %218 = arith.addi %0, %c31_i32 : i32
    %219 = arith.index_cast %218 : i32 to index
    %220 = memref.load %arg1[%219] : memref<32xi32, #tpu.memory_space<smem>>
    %c31_i32_124 = arith.constant 31 : i32
    %c0_i32_125 = arith.constant 0 : i32
    %221 = tpu.memref_slice %arg2[%220, %c0_i32_125] : memref<32x128xf32, #tpu.memory_space<any>> -> memref<1x128xf32, #tpu.memory_space<any>>
    %c31_i32_126 = arith.constant 31 : i32
    %c0_i32_127 = arith.constant 0 : i32
    %222 = tpu.memref_slice %arg3[%c31_i32_126, %c0_i32_127] : memref<32x128xf32, #tpu.memory_space<vmem>> -> memref<1x128xf32, #tpu.memory_space<vmem>>
    %223 = tpu.memref_slice %arg4[%c31_i32_124] : memref<32x!tpu.dma_semaphore, #tpu.memory_space<semaphore_mem>> -> memref<1x!tpu.dma_semaphore, #tpu.memory_space<semaphore_mem>>
    %224 = tpu.memref_squeeze %223 : memref<1x!tpu.dma_semaphore, #tpu.memory_space<semaphore_mem>> -> memref<!tpu.dma_semaphore, #tpu.memory_space<semaphore_mem>>
    tpu.enqueue_dma source(%221 : memref<1x128xf32, #tpu.memory_space<any>>) target(%222 : memref<1x128xf32, #tpu.memory_space<vmem>>) target_semaphore(%224 : memref<!tpu.dma_semaphore, #tpu.memory_space<semaphore_mem>>)
    %c0_i32_128 = arith.constant 0 : i32
    %c0_i32_129 = arith.constant 0 : i32
    %225 = tpu.memref_slice %arg2[%3, %c0_i32_129] : memref<32x128xf32, #tpu.memory_space<any>> -> memref<1x128xf32, #tpu.memory_space<any>>
    %c0_i32_130 = arith.constant 0 : i32
    %c0_i32_131 = arith.constant 0 : i32
    %226 = tpu.memref_slice %arg3[%c0_i32_130, %c0_i32_131] : memref<32x128xf32, #tpu.memory_space<vmem>> -> memref<1x128xf32, #tpu.memory_space<vmem>>
    %227 = tpu.memref_slice %arg4[%c0_i32_128] : memref<32x!tpu.dma_semaphore, #tpu.memory_space<semaphore_mem>> -> memref<1x!tpu.dma_semaphore, #tpu.memory_space<semaphore_mem>>
    %228 = tpu.memref_squeeze %227 : memref<1x!tpu.dma_semaphore, #tpu.memory_space<semaphore_mem>> -> memref<!tpu.dma_semaphore, #tpu.memory_space<semaphore_mem>>
    tpu.wait_dma2 semaphore(%228 : memref<!tpu.dma_semaphore, #tpu.memory_space<semaphore_mem>>) src(%225 : memref<1x128xf32, #tpu.memory_space<any>>) dst(%226 : memref<1x128xf32, #tpu.memory_space<vmem>>)
    %c1_i32_132 = arith.constant 1 : i32
    %c0_i32_133 = arith.constant 0 : i32
    %229 = tpu.memref_slice %arg2[%10, %c0_i32_133] : memref<32x128xf32, #tpu.memory_space<any>> -> memref<1x128xf32, #tpu.memory_space<any>>
    %c1_i32_134 = arith.constant 1 : i32
    %c0_i32_135 = arith.constant 0 : i32
    %230 = tpu.memref_slice %arg3[%c1_i32_134, %c0_i32_135] : memref<32x128xf32, #tpu.memory_space<vmem>> -> memref<1x128xf32, #tpu.memory_space<vmem>>
    %231 = tpu.memref_slice %arg4[%c1_i32_132] : memref<32x!tpu.dma_semaphore, #tpu.memory_space<semaphore_mem>> -> memref<1x!tpu.dma_semaphore, #tpu.memory_space<semaphore_mem>>
    %232 = tpu.memref_squeeze %231 : memref<1x!tpu.dma_semaphore, #tpu.memory_space<semaphore_mem>> -> memref<!tpu.dma_semaphore, #tpu.memory_space<semaphore_mem>>
    tpu.wait_dma2 semaphore(%232 : memref<!tpu.dma_semaphore, #tpu.memory_space<semaphore_mem>>) src(%229 : memref<1x128xf32, #tpu.memory_space<any>>) dst(%230 : memref<1x128xf32, #tpu.memory_space<vmem>>)
    %c2_i32_136 = arith.constant 2 : i32
    %c0_i32_137 = arith.constant 0 : i32
    %233 = tpu.memref_slice %arg2[%17, %c0_i32_137] : memref<32x128xf32, #tpu.memory_space<any>> -> memref<1x128xf32, #tpu.memory_space<any>>
    %c2_i32_138 = arith.constant 2 : i32
    %c0_i32_139 = arith.constant 0 : i32
    %234 = tpu.memref_slice %arg3[%c2_i32_138, %c0_i32_139] : memref<32x128xf32, #tpu.memory_space<vmem>> -> memref<1x128xf32, #tpu.memory_space<vmem>>
    %235 = tpu.memref_slice %arg4[%c2_i32_136] : memref<32x!tpu.dma_semaphore, #tpu.memory_space<semaphore_mem>> -> memref<1x!tpu.dma_semaphore, #tpu.memory_space<semaphore_mem>>
    %236 = tpu.memref_squeeze %235 : memref<1x!tpu.dma_semaphore, #tpu.memory_space<semaphore_mem>> -> memref<!tpu.dma_semaphore, #tpu.memory_space<semaphore_mem>>
    tpu.wait_dma2 semaphore(%236 : memref<!tpu.dma_semaphore, #tpu.memory_space<semaphore_mem>>) src(%233 : memref<1x128xf32, #tpu.memory_space<any>>) dst(%234 : memref<1x128xf32, #tpu.memory_space<vmem>>)
    %c3_i32_140 = arith.constant 3 : i32
    %c0_i32_141 = arith.constant 0 : i32
    %237 = tpu.memref_slice %arg2[%24, %c0_i32_141] : memref<32x128xf32, #tpu.memory_space<any>> -> memref<1x128xf32, #tpu.memory_space<any>>
    %c3_i32_142 = arith.constant 3 : i32
    %c0_i32_143 = arith.constant 0 : i32
    %238 = tpu.memref_slice %arg3[%c3_i32_142, %c0_i32_143] : memref<32x128xf32, #tpu.memory_space<vmem>> -> memref<1x128xf32, #tpu.memory_space<vmem>>
    %239 = tpu.memref_slice %arg4[%c3_i32_140] : memref<32x!tpu.dma_semaphore, #tpu.memory_space<semaphore_mem>> -> memref<1x!tpu.dma_semaphore, #tpu.memory_space<semaphore_mem>>
    %240 = tpu.memref_squeeze %239 : memref<1x!tpu.dma_semaphore, #tpu.memory_space<semaphore_mem>> -> memref<!tpu.dma_semaphore, #tpu.memory_space<semaphore_mem>>
    tpu.wait_dma2 semaphore(%240 : memref<!tpu.dma_semaphore, #tpu.memory_space<semaphore_mem>>) src(%237 : memref<1x128xf32, #tpu.memory_space<any>>) dst(%238 : memref<1x128xf32, #tpu.memory_space<vmem>>)
    %c4_i32_144 = arith.constant 4 : i32
    %c0_i32_145 = arith.constant 0 : i32
    %241 = tpu.memref_slice %arg2[%31, %c0_i32_145] : memref<32x128xf32, #tpu.memory_space<any>> -> memref<1x128xf32, #tpu.memory_space<any>>
    %c4_i32_146 = arith.constant 4 : i32
    %c0_i32_147 = arith.constant 0 : i32
    %242 = tpu.memref_slice %arg3[%c4_i32_146, %c0_i32_147] : memref<32x128xf32, #tpu.memory_space<vmem>> -> memref<1x128xf32, #tpu.memory_space<vmem>>
    %243 = tpu.memref_slice %arg4[%c4_i32_144] : memref<32x!tpu.dma_semaphore, #tpu.memory_space<semaphore_mem>> -> memref<1x!tpu.dma_semaphore, #tpu.memory_space<semaphore_mem>>
    %244 = tpu.memref_squeeze %243 : memref<1x!tpu.dma_semaphore, #tpu.memory_space<semaphore_mem>> -> memref<!tpu.dma_semaphore, #tpu.memory_space<semaphore_mem>>
    tpu.wait_dma2 semaphore(%244 : memref<!tpu.dma_semaphore, #tpu.memory_space<semaphore_mem>>) src(%241 : memref<1x128xf32, #tpu.memory_space<any>>) dst(%242 : memref<1x128xf32, #tpu.memory_space<vmem>>)
    %c5_i32_148 = arith.constant 5 : i32
    %c0_i32_149 = arith.constant 0 : i32
    %245 = tpu.memref_slice %arg2[%38, %c0_i32_149] : memref<32x128xf32, #tpu.memory_space<any>> -> memref<1x128xf32, #tpu.memory_space<any>>
    %c5_i32_150 = arith.constant 5 : i32
    %c0_i32_151 = arith.constant 0 : i32
    %246 = tpu.memref_slice %arg3[%c5_i32_150, %c0_i32_151] : memref<32x128xf32, #tpu.memory_space<vmem>> -> memref<1x128xf32, #tpu.memory_space<vmem>>
    %247 = tpu.memref_slice %arg4[%c5_i32_148] : memref<32x!tpu.dma_semaphore, #tpu.memory_space<semaphore_mem>> -> memref<1x!tpu.dma_semaphore, #tpu.memory_space<semaphore_mem>>
    %248 = tpu.memref_squeeze %247 : memref<1x!tpu.dma_semaphore, #tpu.memory_space<semaphore_mem>> -> memref<!tpu.dma_semaphore, #tpu.memory_space<semaphore_mem>>
    tpu.wait_dma2 semaphore(%248 : memref<!tpu.dma_semaphore, #tpu.memory_space<semaphore_mem>>) src(%245 : memref<1x128xf32, #tpu.memory_space<any>>) dst(%246 : memref<1x128xf32, #tpu.memory_space<vmem>>)
    %c6_i32_152 = arith.constant 6 : i32
    %c0_i32_153 = arith.constant 0 : i32
    %249 = tpu.memref_slice %arg2[%45, %c0_i32_153] : memref<32x128xf32, #tpu.memory_space<any>> -> memref<1x128xf32, #tpu.memory_space<any>>
    %c6_i32_154 = arith.constant 6 : i32
    %c0_i32_155 = arith.constant 0 : i32
    %250 = tpu.memref_slice %arg3[%c6_i32_154, %c0_i32_155] : memref<32x128xf32, #tpu.memory_space<vmem>> -> memref<1x128xf32, #tpu.memory_space<vmem>>
    %251 = tpu.memref_slice %arg4[%c6_i32_152] : memref<32x!tpu.dma_semaphore, #tpu.memory_space<semaphore_mem>> -> memref<1x!tpu.dma_semaphore, #tpu.memory_space<semaphore_mem>>
    %252 = tpu.memref_squeeze %251 : memref<1x!tpu.dma_semaphore, #tpu.memory_space<semaphore_mem>> -> memref<!tpu.dma_semaphore, #tpu.memory_space<semaphore_mem>>
    tpu.wait_dma2 semaphore(%252 : memref<!tpu.dma_semaphore, #tpu.memory_space<semaphore_mem>>) src(%249 : memref<1x128xf32, #tpu.memory_space<any>>) dst(%250 : memref<1x128xf32, #tpu.memory_space<vmem>>)
    %c7_i32_156 = arith.constant 7 : i32
    %c0_i32_157 = arith.constant 0 : i32
    %253 = tpu.memref_slice %arg2[%52, %c0_i32_157] : memref<32x128xf32, #tpu.memory_space<any>> -> memref<1x128xf32, #tpu.memory_space<any>>
    %c7_i32_158 = arith.constant 7 : i32
    %c0_i32_159 = arith.constant 0 : i32
    %254 = tpu.memref_slice %arg3[%c7_i32_158, %c0_i32_159] : memref<32x128xf32, #tpu.memory_space<vmem>> -> memref<1x128xf32, #tpu.memory_space<vmem>>
    %255 = tpu.memref_slice %arg4[%c7_i32_156] : memref<32x!tpu.dma_semaphore, #tpu.memory_space<semaphore_mem>> -> memref<1x!tpu.dma_semaphore, #tpu.memory_space<semaphore_mem>>
    %256 = tpu.memref_squeeze %255 : memref<1x!tpu.dma_semaphore, #tpu.memory_space<semaphore_mem>> -> memref<!tpu.dma_semaphore, #tpu.memory_space<semaphore_mem>>
    tpu.wait_dma2 semaphore(%256 : memref<!tpu.dma_semaphore, #tpu.memory_space<semaphore_mem>>) src(%253 : memref<1x128xf32, #tpu.memory_space<any>>) dst(%254 : memref<1x128xf32, #tpu.memory_space<vmem>>)
    %c8_i32_160 = arith.constant 8 : i32
    %c0_i32_161 = arith.constant 0 : i32
    %257 = tpu.memref_slice %arg2[%59, %c0_i32_161] : memref<32x128xf32, #tpu.memory_space<any>> -> memref<1x128xf32, #tpu.memory_space<any>>
    %c8_i32_162 = arith.constant 8 : i32
    %c0_i32_163 = arith.constant 0 : i32
    %258 = tpu.memref_slice %arg3[%c8_i32_162, %c0_i32_163] : memref<32x128xf32, #tpu.memory_space<vmem>> -> memref<1x128xf32, #tpu.memory_space<vmem>>
    %259 = tpu.memref_slice %arg4[%c8_i32_160] : memref<32x!tpu.dma_semaphore, #tpu.memory_space<semaphore_mem>> -> memref<1x!tpu.dma_semaphore, #tpu.memory_space<semaphore_mem>>
    %260 = tpu.memref_squeeze %259 : memref<1x!tpu.dma_semaphore, #tpu.memory_space<semaphore_mem>> -> memref<!tpu.dma_semaphore, #tpu.memory_space<semaphore_mem>>
    tpu.wait_dma2 semaphore(%260 : memref<!tpu.dma_semaphore, #tpu.memory_space<semaphore_mem>>) src(%257 : memref<1x128xf32, #tpu.memory_space<any>>) dst(%258 : memref<1x128xf32, #tpu.memory_space<vmem>>)
    %c9_i32_164 = arith.constant 9 : i32
    %c0_i32_165 = arith.constant 0 : i32
    %261 = tpu.memref_slice %arg2[%66, %c0_i32_165] : memref<32x128xf32, #tpu.memory_space<any>> -> memref<1x128xf32, #tpu.memory_space<any>>
    %c9_i32_166 = arith.constant 9 : i32
    %c0_i32_167 = arith.constant 0 : i32
    %262 = tpu.memref_slice %arg3[%c9_i32_166, %c0_i32_167] : memref<32x128xf32, #tpu.memory_space<vmem>> -> memref<1x128xf32, #tpu.memory_space<vmem>>
    %263 = tpu.memref_slice %arg4[%c9_i32_164] : memref<32x!tpu.dma_semaphore, #tpu.memory_space<semaphore_mem>> -> memref<1x!tpu.dma_semaphore, #tpu.memory_space<semaphore_mem>>
    %264 = tpu.memref_squeeze %263 : memref<1x!tpu.dma_semaphore, #tpu.memory_space<semaphore_mem>> -> memref<!tpu.dma_semaphore, #tpu.memory_space<semaphore_mem>>
    tpu.wait_dma2 semaphore(%264 : memref<!tpu.dma_semaphore, #tpu.memory_space<semaphore_mem>>) src(%261 : memref<1x128xf32, #tpu.memory_space<any>>) dst(%262 : memref<1x128xf32, #tpu.memory_space<vmem>>)
    %c10_i32_168 = arith.constant 10 : i32
    %c0_i32_169 = arith.constant 0 : i32
    %265 = tpu.memref_slice %arg2[%73, %c0_i32_169] : memref<32x128xf32, #tpu.memory_space<any>> -> memref<1x128xf32, #tpu.memory_space<any>>
    %c10_i32_170 = arith.constant 10 : i32
    %c0_i32_171 = arith.constant 0 : i32
    %266 = tpu.memref_slice %arg3[%c10_i32_170, %c0_i32_171] : memref<32x128xf32, #tpu.memory_space<vmem>> -> memref<1x128xf32, #tpu.memory_space<vmem>>
    %267 = tpu.memref_slice %arg4[%c10_i32_168] : memref<32x!tpu.dma_semaphore, #tpu.memory_space<semaphore_mem>> -> memref<1x!tpu.dma_semaphore, #tpu.memory_space<semaphore_mem>>
    %268 = tpu.memref_squeeze %267 : memref<1x!tpu.dma_semaphore, #tpu.memory_space<semaphore_mem>> -> memref<!tpu.dma_semaphore, #tpu.memory_space<semaphore_mem>>
    tpu.wait_dma2 semaphore(%268 : memref<!tpu.dma_semaphore, #tpu.memory_space<semaphore_mem>>) src(%265 : memref<1x128xf32, #tpu.memory_space<any>>) dst(%266 : memref<1x128xf32, #tpu.memory_space<vmem>>)
    %c11_i32_172 = arith.constant 11 : i32
    %c0_i32_173 = arith.constant 0 : i32
    %269 = tpu.memref_slice %arg2[%80, %c0_i32_173] : memref<32x128xf32, #tpu.memory_space<any>> -> memref<1x128xf32, #tpu.memory_space<any>>
    %c11_i32_174 = arith.constant 11 : i32
    %c0_i32_175 = arith.constant 0 : i32
    %270 = tpu.memref_slice %arg3[%c11_i32_174, %c0_i32_175] : memref<32x128xf32, #tpu.memory_space<vmem>> -> memref<1x128xf32, #tpu.memory_space<vmem>>
    %271 = tpu.memref_slice %arg4[%c11_i32_172] : memref<32x!tpu.dma_semaphore, #tpu.memory_space<semaphore_mem>> -> memref<1x!tpu.dma_semaphore, #tpu.memory_space<semaphore_mem>>
    %272 = tpu.memref_squeeze %271 : memref<1x!tpu.dma_semaphore, #tpu.memory_space<semaphore_mem>> -> memref<!tpu.dma_semaphore, #tpu.memory_space<semaphore_mem>>
    tpu.wait_dma2 semaphore(%272 : memref<!tpu.dma_semaphore, #tpu.memory_space<semaphore_mem>>) src(%269 : memref<1x128xf32, #tpu.memory_space<any>>) dst(%270 : memref<1x128xf32, #tpu.memory_space<vmem>>)
    %c12_i32_176 = arith.constant 12 : i32
    %c0_i32_177 = arith.constant 0 : i32
    %273 = tpu.memref_slice %arg2[%87, %c0_i32_177] : memref<32x128xf32, #tpu.memory_space<any>> -> memref<1x128xf32, #tpu.memory_space<any>>
    %c12_i32_178 = arith.constant 12 : i32
    %c0_i32_179 = arith.constant 0 : i32
    %274 = tpu.memref_slice %arg3[%c12_i32_178, %c0_i32_179] : memref<32x128xf32, #tpu.memory_space<vmem>> -> memref<1x128xf32, #tpu.memory_space<vmem>>
    %275 = tpu.memref_slice %arg4[%c12_i32_176] : memref<32x!tpu.dma_semaphore, #tpu.memory_space<semaphore_mem>> -> memref<1x!tpu.dma_semaphore, #tpu.memory_space<semaphore_mem>>
    %276 = tpu.memref_squeeze %275 : memref<1x!tpu.dma_semaphore, #tpu.memory_space<semaphore_mem>> -> memref<!tpu.dma_semaphore, #tpu.memory_space<semaphore_mem>>
    tpu.wait_dma2 semaphore(%276 : memref<!tpu.dma_semaphore, #tpu.memory_space<semaphore_mem>>) src(%273 : memref<1x128xf32, #tpu.memory_space<any>>) dst(%274 : memref<1x128xf32, #tpu.memory_space<vmem>>)
    %c13_i32_180 = arith.constant 13 : i32
    %c0_i32_181 = arith.constant 0 : i32
    %277 = tpu.memref_slice %arg2[%94, %c0_i32_181] : memref<32x128xf32, #tpu.memory_space<any>> -> memref<1x128xf32, #tpu.memory_space<any>>
    %c13_i32_182 = arith.constant 13 : i32
    %c0_i32_183 = arith.constant 0 : i32
    %278 = tpu.memref_slice %arg3[%c13_i32_182, %c0_i32_183] : memref<32x128xf32, #tpu.memory_space<vmem>> -> memref<1x128xf32, #tpu.memory_space<vmem>>
    %279 = tpu.memref_slice %arg4[%c13_i32_180] : memref<32x!tpu.dma_semaphore, #tpu.memory_space<semaphore_mem>> -> memref<1x!tpu.dma_semaphore, #tpu.memory_space<semaphore_mem>>
    %280 = tpu.memref_squeeze %279 : memref<1x!tpu.dma_semaphore, #tpu.memory_space<semaphore_mem>> -> memref<!tpu.dma_semaphore, #tpu.memory_space<semaphore_mem>>
    tpu.wait_dma2 semaphore(%280 : memref<!tpu.dma_semaphore, #tpu.memory_space<semaphore_mem>>) src(%277 : memref<1x128xf32, #tpu.memory_space<any>>) dst(%278 : memref<1x128xf32, #tpu.memory_space<vmem>>)
    %c14_i32_184 = arith.constant 14 : i32
    %c0_i32_185 = arith.constant 0 : i32
    %281 = tpu.memref_slice %arg2[%101, %c0_i32_185] : memref<32x128xf32, #tpu.memory_space<any>> -> memref<1x128xf32, #tpu.memory_space<any>>
    %c14_i32_186 = arith.constant 14 : i32
    %c0_i32_187 = arith.constant 0 : i32
    %282 = tpu.memref_slice %arg3[%c14_i32_186, %c0_i32_187] : memref<32x128xf32, #tpu.memory_space<vmem>> -> memref<1x128xf32, #tpu.memory_space<vmem>>
    %283 = tpu.memref_slice %arg4[%c14_i32_184] : memref<32x!tpu.dma_semaphore, #tpu.memory_space<semaphore_mem>> -> memref<1x!tpu.dma_semaphore, #tpu.memory_space<semaphore_mem>>
    %284 = tpu.memref_squeeze %283 : memref<1x!tpu.dma_semaphore, #tpu.memory_space<semaphore_mem>> -> memref<!tpu.dma_semaphore, #tpu.memory_space<semaphore_mem>>
    tpu.wait_dma2 semaphore(%284 : memref<!tpu.dma_semaphore, #tpu.memory_space<semaphore_mem>>) src(%281 : memref<1x128xf32, #tpu.memory_space<any>>) dst(%282 : memref<1x128xf32, #tpu.memory_space<vmem>>)
    %c15_i32_188 = arith.constant 15 : i32
    %c0_i32_189 = arith.constant 0 : i32
    %285 = tpu.memref_slice %arg2[%108, %c0_i32_189] : memref<32x128xf32, #tpu.memory_space<any>> -> memref<1x128xf32, #tpu.memory_space<any>>
    %c15_i32_190 = arith.constant 15 : i32
    %c0_i32_191 = arith.constant 0 : i32
    %286 = tpu.memref_slice %arg3[%c15_i32_190, %c0_i32_191] : memref<32x128xf32, #tpu.memory_space<vmem>> -> memref<1x128xf32, #tpu.memory_space<vmem>>
    %287 = tpu.memref_slice %arg4[%c15_i32_188] : memref<32x!tpu.dma_semaphore, #tpu.memory_space<semaphore_mem>> -> memref<1x!tpu.dma_semaphore, #tpu.memory_space<semaphore_mem>>
    %288 = tpu.memref_squeeze %287 : memref<1x!tpu.dma_semaphore, #tpu.memory_space<semaphore_mem>> -> memref<!tpu.dma_semaphore, #tpu.memory_space<semaphore_mem>>
    tpu.wait_dma2 semaphore(%288 : memref<!tpu.dma_semaphore, #tpu.memory_space<semaphore_mem>>) src(%285 : memref<1x128xf32, #tpu.memory_space<any>>) dst(%286 : memref<1x128xf32, #tpu.memory_space<vmem>>)
    %c16_i32_192 = arith.constant 16 : i32
    %c0_i32_193 = arith.constant 0 : i32
    %289 = tpu.memref_slice %arg2[%115, %c0_i32_193] : memref<32x128xf32, #tpu.memory_space<any>> -> memref<1x128xf32, #tpu.memory_space<any>>
    %c16_i32_194 = arith.constant 16 : i32
    %c0_i32_195 = arith.constant 0 : i32
    %290 = tpu.memref_slice %arg3[%c16_i32_194, %c0_i32_195] : memref<32x128xf32, #tpu.memory_space<vmem>> -> memref<1x128xf32, #tpu.memory_space<vmem>>
    %291 = tpu.memref_slice %arg4[%c16_i32_192] : memref<32x!tpu.dma_semaphore, #tpu.memory_space<semaphore_mem>> -> memref<1x!tpu.dma_semaphore, #tpu.memory_space<semaphore_mem>>
    %292 = tpu.memref_squeeze %291 : memref<1x!tpu.dma_semaphore, #tpu.memory_space<semaphore_mem>> -> memref<!tpu.dma_semaphore, #tpu.memory_space<semaphore_mem>>
    tpu.wait_dma2 semaphore(%292 : memref<!tpu.dma_semaphore, #tpu.memory_space<semaphore_mem>>) src(%289 : memref<1x128xf32, #tpu.memory_space<any>>) dst(%290 : memref<1x128xf32, #tpu.memory_space<vmem>>)
    %c17_i32_196 = arith.constant 17 : i32
    %c0_i32_197 = arith.constant 0 : i32
    %293 = tpu.memref_slice %arg2[%122, %c0_i32_197] : memref<32x128xf32, #tpu.memory_space<any>> -> memref<1x128xf32, #tpu.memory_space<any>>
    %c17_i32_198 = arith.constant 17 : i32
    %c0_i32_199 = arith.constant 0 : i32
    %294 = tpu.memref_slice %arg3[%c17_i32_198, %c0_i32_199] : memref<32x128xf32, #tpu.memory_space<vmem>> -> memref<1x128xf32, #tpu.memory_space<vmem>>
    %295 = tpu.memref_slice %arg4[%c17_i32_196] : memref<32x!tpu.dma_semaphore, #tpu.memory_space<semaphore_mem>> -> memref<1x!tpu.dma_semaphore, #tpu.memory_space<semaphore_mem>>
    %296 = tpu.memref_squeeze %295 : memref<1x!tpu.dma_semaphore, #tpu.memory_space<semaphore_mem>> -> memref<!tpu.dma_semaphore, #tpu.memory_space<semaphore_mem>>
    tpu.wait_dma2 semaphore(%296 : memref<!tpu.dma_semaphore, #tpu.memory_space<semaphore_mem>>) src(%293 : memref<1x128xf32, #tpu.memory_space<any>>) dst(%294 : memref<1x128xf32, #tpu.memory_space<vmem>>)
    %c18_i32_200 = arith.constant 18 : i32
    %c0_i32_201 = arith.constant 0 : i32
    %297 = tpu.memref_slice %arg2[%129, %c0_i32_201] : memref<32x128xf32, #tpu.memory_space<any>> -> memref<1x128xf32, #tpu.memory_space<any>>
    %c18_i32_202 = arith.constant 18 : i32
    %c0_i32_203 = arith.constant 0 : i32
    %298 = tpu.memref_slice %arg3[%c18_i32_202, %c0_i32_203] : memref<32x128xf32, #tpu.memory_space<vmem>> -> memref<1x128xf32, #tpu.memory_space<vmem>>
    %299 = tpu.memref_slice %arg4[%c18_i32_200] : memref<32x!tpu.dma_semaphore, #tpu.memory_space<semaphore_mem>> -> memref<1x!tpu.dma_semaphore, #tpu.memory_space<semaphore_mem>>
    %300 = tpu.memref_squeeze %299 : memref<1x!tpu.dma_semaphore, #tpu.memory_space<semaphore_mem>> -> memref<!tpu.dma_semaphore, #tpu.memory_space<semaphore_mem>>
    tpu.wait_dma2 semaphore(%300 : memref<!tpu.dma_semaphore, #tpu.memory_space<semaphore_mem>>) src(%297 : memref<1x128xf32, #tpu.memory_space<any>>) dst(%298 : memref<1x128xf32, #tpu.memory_space<vmem>>)
    %c19_i32_204 = arith.constant 19 : i32
    %c0_i32_205 = arith.constant 0 : i32
    %301 = tpu.memref_slice %arg2[%136, %c0_i32_205] : memref<32x128xf32, #tpu.memory_space<any>> -> memref<1x128xf32, #tpu.memory_space<any>>
    %c19_i32_206 = arith.constant 19 : i32
    %c0_i32_207 = arith.constant 0 : i32
    %302 = tpu.memref_slice %arg3[%c19_i32_206, %c0_i32_207] : memref<32x128xf32, #tpu.memory_space<vmem>> -> memref<1x128xf32, #tpu.memory_space<vmem>>
    %303 = tpu.memref_slice %arg4[%c19_i32_204] : memref<32x!tpu.dma_semaphore, #tpu.memory_space<semaphore_mem>> -> memref<1x!tpu.dma_semaphore, #tpu.memory_space<semaphore_mem>>
    %304 = tpu.memref_squeeze %303 : memref<1x!tpu.dma_semaphore, #tpu.memory_space<semaphore_mem>> -> memref<!tpu.dma_semaphore, #tpu.memory_space<semaphore_mem>>
    tpu.wait_dma2 semaphore(%304 : memref<!tpu.dma_semaphore, #tpu.memory_space<semaphore_mem>>) src(%301 : memref<1x128xf32, #tpu.memory_space<any>>) dst(%302 : memref<1x128xf32, #tpu.memory_space<vmem>>)
    %c20_i32_208 = arith.constant 20 : i32
    %c0_i32_209 = arith.constant 0 : i32
    %305 = tpu.memref_slice %arg2[%143, %c0_i32_209] : memref<32x128xf32, #tpu.memory_space<any>> -> memref<1x128xf32, #tpu.memory_space<any>>
    %c20_i32_210 = arith.constant 20 : i32
    %c0_i32_211 = arith.constant 0 : i32
    %306 = tpu.memref_slice %arg3[%c20_i32_210, %c0_i32_211] : memref<32x128xf32, #tpu.memory_space<vmem>> -> memref<1x128xf32, #tpu.memory_space<vmem>>
    %307 = tpu.memref_slice %arg4[%c20_i32_208] : memref<32x!tpu.dma_semaphore, #tpu.memory_space<semaphore_mem>> -> memref<1x!tpu.dma_semaphore, #tpu.memory_space<semaphore_mem>>
    %308 = tpu.memref_squeeze %307 : memref<1x!tpu.dma_semaphore, #tpu.memory_space<semaphore_mem>> -> memref<!tpu.dma_semaphore, #tpu.memory_space<semaphore_mem>>
    tpu.wait_dma2 semaphore(%308 : memref<!tpu.dma_semaphore, #tpu.memory_space<semaphore_mem>>) src(%305 : memref<1x128xf32, #tpu.memory_space<any>>) dst(%306 : memref<1x128xf32, #tpu.memory_space<vmem>>)
    %c21_i32_212 = arith.constant 21 : i32
    %c0_i32_213 = arith.constant 0 : i32
    %309 = tpu.memref_slice %arg2[%150, %c0_i32_213] : memref<32x128xf32, #tpu.memory_space<any>> -> memref<1x128xf32, #tpu.memory_space<any>>
    %c21_i32_214 = arith.constant 21 : i32
    %c0_i32_215 = arith.constant 0 : i32
    %310 = tpu.memref_slice %arg3[%c21_i32_214, %c0_i32_215] : memref<32x128xf32, #tpu.memory_space<vmem>> -> memref<1x128xf32, #tpu.memory_space<vmem>>
    %311 = tpu.memref_slice %arg4[%c21_i32_212] : memref<32x!tpu.dma_semaphore, #tpu.memory_space<semaphore_mem>> -> memref<1x!tpu.dma_semaphore, #tpu.memory_space<semaphore_mem>>
    %312 = tpu.memref_squeeze %311 : memref<1x!tpu.dma_semaphore, #tpu.memory_space<semaphore_mem>> -> memref<!tpu.dma_semaphore, #tpu.memory_space<semaphore_mem>>
    tpu.wait_dma2 semaphore(%312 : memref<!tpu.dma_semaphore, #tpu.memory_space<semaphore_mem>>) src(%309 : memref<1x128xf32, #tpu.memory_space<any>>) dst(%310 : memref<1x128xf32, #tpu.memory_space<vmem>>)
    %c22_i32_216 = arith.constant 22 : i32
    %c0_i32_217 = arith.constant 0 : i32
    %313 = tpu.memref_slice %arg2[%157, %c0_i32_217] : memref<32x128xf32, #tpu.memory_space<any>> -> memref<1x128xf32, #tpu.memory_space<any>>
    %c22_i32_218 = arith.constant 22 : i32
    %c0_i32_219 = arith.constant 0 : i32
    %314 = tpu.memref_slice %arg3[%c22_i32_218, %c0_i32_219] : memref<32x128xf32, #tpu.memory_space<vmem>> -> memref<1x128xf32, #tpu.memory_space<vmem>>
    %315 = tpu.memref_slice %arg4[%c22_i32_216] : memref<32x!tpu.dma_semaphore, #tpu.memory_space<semaphore_mem>> -> memref<1x!tpu.dma_semaphore, #tpu.memory_space<semaphore_mem>>
    %316 = tpu.memref_squeeze %315 : memref<1x!tpu.dma_semaphore, #tpu.memory_space<semaphore_mem>> -> memref<!tpu.dma_semaphore, #tpu.memory_space<semaphore_mem>>
    tpu.wait_dma2 semaphore(%316 : memref<!tpu.dma_semaphore, #tpu.memory_space<semaphore_mem>>) src(%313 : memref<1x128xf32, #tpu.memory_space<any>>) dst(%314 : memref<1x128xf32, #tpu.memory_space<vmem>>)
    %c23_i32_220 = arith.constant 23 : i32
    %c0_i32_221 = arith.constant 0 : i32
    %317 = tpu.memref_slice %arg2[%164, %c0_i32_221] : memref<32x128xf32, #tpu.memory_space<any>> -> memref<1x128xf32, #tpu.memory_space<any>>
    %c23_i32_222 = arith.constant 23 : i32
    %c0_i32_223 = arith.constant 0 : i32
    %318 = tpu.memref_slice %arg3[%c23_i32_222, %c0_i32_223] : memref<32x128xf32, #tpu.memory_space<vmem>> -> memref<1x128xf32, #tpu.memory_space<vmem>>
    %319 = tpu.memref_slice %arg4[%c23_i32_220] : memref<32x!tpu.dma_semaphore, #tpu.memory_space<semaphore_mem>> -> memref<1x!tpu.dma_semaphore, #tpu.memory_space<semaphore_mem>>
    %320 = tpu.memref_squeeze %319 : memref<1x!tpu.dma_semaphore, #tpu.memory_space<semaphore_mem>> -> memref<!tpu.dma_semaphore, #tpu.memory_space<semaphore_mem>>
    tpu.wait_dma2 semaphore(%320 : memref<!tpu.dma_semaphore, #tpu.memory_space<semaphore_mem>>) src(%317 : memref<1x128xf32, #tpu.memory_space<any>>) dst(%318 : memref<1x128xf32, #tpu.memory_space<vmem>>)
    %c24_i32_224 = arith.constant 24 : i32
    %c0_i32_225 = arith.constant 0 : i32
    %321 = tpu.memref_slice %arg2[%171, %c0_i32_225] : memref<32x128xf32, #tpu.memory_space<any>> -> memref<1x128xf32, #tpu.memory_space<any>>
    %c24_i32_226 = arith.constant 24 : i32
    %c0_i32_227 = arith.constant 0 : i32
    %322 = tpu.memref_slice %arg3[%c24_i32_226, %c0_i32_227] : memref<32x128xf32, #tpu.memory_space<vmem>> -> memref<1x128xf32, #tpu.memory_space<vmem>>
    %323 = tpu.memref_slice %arg4[%c24_i32_224] : memref<32x!tpu.dma_semaphore, #tpu.memory_space<semaphore_mem>> -> memref<1x!tpu.dma_semaphore, #tpu.memory_space<semaphore_mem>>
    %324 = tpu.memref_squeeze %323 : memref<1x!tpu.dma_semaphore, #tpu.memory_space<semaphore_mem>> -> memref<!tpu.dma_semaphore, #tpu.memory_space<semaphore_mem>>
    tpu.wait_dma2 semaphore(%324 : memref<!tpu.dma_semaphore, #tpu.memory_space<semaphore_mem>>) src(%321 : memref<1x128xf32, #tpu.memory_space<any>>) dst(%322 : memref<1x128xf32, #tpu.memory_space<vmem>>)
    %c25_i32_228 = arith.constant 25 : i32
    %c0_i32_229 = arith.constant 0 : i32
    %325 = tpu.memref_slice %arg2[%178, %c0_i32_229] : memref<32x128xf32, #tpu.memory_space<any>> -> memref<1x128xf32, #tpu.memory_space<any>>
    %c25_i32_230 = arith.constant 25 : i32
    %c0_i32_231 = arith.constant 0 : i32
    %326 = tpu.memref_slice %arg3[%c25_i32_230, %c0_i32_231] : memref<32x128xf32, #tpu.memory_space<vmem>> -> memref<1x128xf32, #tpu.memory_space<vmem>>
    %327 = tpu.memref_slice %arg4[%c25_i32_228] : memref<32x!tpu.dma_semaphore, #tpu.memory_space<semaphore_mem>> -> memref<1x!tpu.dma_semaphore, #tpu.memory_space<semaphore_mem>>
    %328 = tpu.memref_squeeze %327 : memref<1x!tpu.dma_semaphore, #tpu.memory_space<semaphore_mem>> -> memref<!tpu.dma_semaphore, #tpu.memory_space<semaphore_mem>>
    tpu.wait_dma2 semaphore(%328 : memref<!tpu.dma_semaphore, #tpu.memory_space<semaphore_mem>>) src(%325 : memref<1x128xf32, #tpu.memory_space<any>>) dst(%326 : memref<1x128xf32, #tpu.memory_space<vmem>>)
    %c26_i32_232 = arith.constant 26 : i32
    %c0_i32_233 = arith.constant 0 : i32
    %329 = tpu.memref_slice %arg2[%185, %c0_i32_233] : memref<32x128xf32, #tpu.memory_space<any>> -> memref<1x128xf32, #tpu.memory_space<any>>
    %c26_i32_234 = arith.constant 26 : i32
    %c0_i32_235 = arith.constant 0 : i32
    %330 = tpu.memref_slice %arg3[%c26_i32_234, %c0_i32_235] : memref<32x128xf32, #tpu.memory_space<vmem>> -> memref<1x128xf32, #tpu.memory_space<vmem>>
    %331 = tpu.memref_slice %arg4[%c26_i32_232] : memref<32x!tpu.dma_semaphore, #tpu.memory_space<semaphore_mem>> -> memref<1x!tpu.dma_semaphore, #tpu.memory_space<semaphore_mem>>
    %332 = tpu.memref_squeeze %331 : memref<1x!tpu.dma_semaphore, #tpu.memory_space<semaphore_mem>> -> memref<!tpu.dma_semaphore, #tpu.memory_space<semaphore_mem>>
    tpu.wait_dma2 semaphore(%332 : memref<!tpu.dma_semaphore, #tpu.memory_space<semaphore_mem>>) src(%329 : memref<1x128xf32, #tpu.memory_space<any>>) dst(%330 : memref<1x128xf32, #tpu.memory_space<vmem>>)
    %c27_i32_236 = arith.constant 27 : i32
    %c0_i32_237 = arith.constant 0 : i32
    %333 = tpu.memref_slice %arg2[%192, %c0_i32_237] : memref<32x128xf32, #tpu.memory_space<any>> -> memref<1x128xf32, #tpu.memory_space<any>>
    %c27_i32_238 = arith.constant 27 : i32
    %c0_i32_239 = arith.constant 0 : i32
    %334 = tpu.memref_slice %arg3[%c27_i32_238, %c0_i32_239] : memref<32x128xf32, #tpu.memory_space<vmem>> -> memref<1x128xf32, #tpu.memory_space<vmem>>
    %335 = tpu.memref_slice %arg4[%c27_i32_236] : memref<32x!tpu.dma_semaphore, #tpu.memory_space<semaphore_mem>> -> memref<1x!tpu.dma_semaphore, #tpu.memory_space<semaphore_mem>>
    %336 = tpu.memref_squeeze %335 : memref<1x!tpu.dma_semaphore, #tpu.memory_space<semaphore_mem>> -> memref<!tpu.dma_semaphore, #tpu.memory_space<semaphore_mem>>
    tpu.wait_dma2 semaphore(%336 : memref<!tpu.dma_semaphore, #tpu.memory_space<semaphore_mem>>) src(%333 : memref<1x128xf32, #tpu.memory_space<any>>) dst(%334 : memref<1x128xf32, #tpu.memory_space<vmem>>)
    %c28_i32_240 = arith.constant 28 : i32
    %c0_i32_241 = arith.constant 0 : i32
    %337 = tpu.memref_slice %arg2[%199, %c0_i32_241] : memref<32x128xf32, #tpu.memory_space<any>> -> memref<1x128xf32, #tpu.memory_space<any>>
    %c28_i32_242 = arith.constant 28 : i32
    %c0_i32_243 = arith.constant 0 : i32
    %338 = tpu.memref_slice %arg3[%c28_i32_242, %c0_i32_243] : memref<32x128xf32, #tpu.memory_space<vmem>> -> memref<1x128xf32, #tpu.memory_space<vmem>>
    %339 = tpu.memref_slice %arg4[%c28_i32_240] : memref<32x!tpu.dma_semaphore, #tpu.memory_space<semaphore_mem>> -> memref<1x!tpu.dma_semaphore, #tpu.memory_space<semaphore_mem>>
    %340 = tpu.memref_squeeze %339 : memref<1x!tpu.dma_semaphore, #tpu.memory_space<semaphore_mem>> -> memref<!tpu.dma_semaphore, #tpu.memory_space<semaphore_mem>>
    tpu.wait_dma2 semaphore(%340 : memref<!tpu.dma_semaphore, #tpu.memory_space<semaphore_mem>>) src(%337 : memref<1x128xf32, #tpu.memory_space<any>>) dst(%338 : memref<1x128xf32, #tpu.memory_space<vmem>>)
    %c29_i32_244 = arith.constant 29 : i32
    %c0_i32_245 = arith.constant 0 : i32
    %341 = tpu.memref_slice %arg2[%206, %c0_i32_245] : memref<32x128xf32, #tpu.memory_space<any>> -> memref<1x128xf32, #tpu.memory_space<any>>
    %c29_i32_246 = arith.constant 29 : i32
    %c0_i32_247 = arith.constant 0 : i32
    %342 = tpu.memref_slice %arg3[%c29_i32_246, %c0_i32_247] : memref<32x128xf32, #tpu.memory_space<vmem>> -> memref<1x128xf32, #tpu.memory_space<vmem>>
    %343 = tpu.memref_slice %arg4[%c29_i32_244] : memref<32x!tpu.dma_semaphore, #tpu.memory_space<semaphore_mem>> -> memref<1x!tpu.dma_semaphore, #tpu.memory_space<semaphore_mem>>
    %344 = tpu.memref_squeeze %343 : memref<1x!tpu.dma_semaphore, #tpu.memory_space<semaphore_mem>> -> memref<!tpu.dma_semaphore, #tpu.memory_space<semaphore_mem>>
    tpu.wait_dma2 semaphore(%344 : memref<!tpu.dma_semaphore, #tpu.memory_space<semaphore_mem>>) src(%341 : memref<1x128xf32, #tpu.memory_space<any>>) dst(%342 : memref<1x128xf32, #tpu.memory_space<vmem>>)
    %c30_i32_248 = arith.constant 30 : i32
    %c0_i32_249 = arith.constant 0 : i32
    %345 = tpu.memref_slice %arg2[%213, %c0_i32_249] : memref<32x128xf32, #tpu.memory_space<any>> -> memref<1x128xf32, #tpu.memory_space<any>>
    %c30_i32_250 = arith.constant 30 : i32
    %c0_i32_251 = arith.constant 0 : i32
    %346 = tpu.memref_slice %arg3[%c30_i32_250, %c0_i32_251] : memref<32x128xf32, #tpu.memory_space<vmem>> -> memref<1x128xf32, #tpu.memory_space<vmem>>
    %347 = tpu.memref_slice %arg4[%c30_i32_248] : memref<32x!tpu.dma_semaphore, #tpu.memory_space<semaphore_mem>> -> memref<1x!tpu.dma_semaphore, #tpu.memory_space<semaphore_mem>>
    %348 = tpu.memref_squeeze %347 : memref<1x!tpu.dma_semaphore, #tpu.memory_space<semaphore_mem>> -> memref<!tpu.dma_semaphore, #tpu.memory_space<semaphore_mem>>
    tpu.wait_dma2 semaphore(%348 : memref<!tpu.dma_semaphore, #tpu.memory_space<semaphore_mem>>) src(%345 : memref<1x128xf32, #tpu.memory_space<any>>) dst(%346 : memref<1x128xf32, #tpu.memory_space<vmem>>)
    %c31_i32_252 = arith.constant 31 : i32
    %c0_i32_253 = arith.constant 0 : i32
    %349 = tpu.memref_slice %arg2[%220, %c0_i32_253] : memref<32x128xf32, #tpu.memory_space<any>> -> memref<1x128xf32, #tpu.memory_space<any>>
    %c31_i32_254 = arith.constant 31 : i32
    %c0_i32_255 = arith.constant 0 : i32
    %350 = tpu.memref_slice %arg3[%c31_i32_254, %c0_i32_255] : memref<32x128xf32, #tpu.memory_space<vmem>> -> memref<1x128xf32, #tpu.memory_space<vmem>>
    %351 = tpu.memref_slice %arg4[%c31_i32_252] : memref<32x!tpu.dma_semaphore, #tpu.memory_space<semaphore_mem>> -> memref<1x!tpu.dma_semaphore, #tpu.memory_space<semaphore_mem>>
    %352 = tpu.memref_squeeze %351 : memref<1x!tpu.dma_semaphore, #tpu.memory_space<semaphore_mem>> -> memref<!tpu.dma_semaphore, #tpu.memory_space<semaphore_mem>>
    tpu.wait_dma2 semaphore(%352 : memref<!tpu.dma_semaphore, #tpu.memory_space<semaphore_mem>>) src(%349 : memref<1x128xf32, #tpu.memory_space<any>>) dst(%350 : memref<1x128xf32, #tpu.memory_space<vmem>>)
    return
  }
  func.func @transform_1(%arg0: i32, %arg1: memref<32xi32, #tpu.memory_space<smem>>) -> (i32, i32) {
    %c0_i32 = arith.constant 0 : i32
    %c0_i32_0 = arith.constant 0 : i32
    return %arg0, %c0_i32 : i32, i32
  }
}

module attributes {stable_mosaic.version = 11 : i64} {
  func.func @_linear_kernel(%arg0: i32, %arg1: i32, %arg2: i32, %arg3: memref<16x128xbf16, #tpu.memory_space<vmem>>, %arg4: memref<128x128xbf16, #tpu.memory_space<vmem>>, %arg5: memref<1x128xf32, #tpu.memory_space<vmem>>, %arg6: memref<16x128xbf16, #tpu.memory_space<vmem>>, %arg7: memref<16x128xf32, #tpu.memory_space<vmem>>) attributes {dimension_semantics = [#tpu.dimension_semantics<parallel>, #tpu.dimension_semantics<parallel>, #tpu.dimension_semantics<arbitrary>], iteration_bounds = array<i64: 1, 1, 1>, scalar_prefetch = 0 : i64, scratch_operands = 1 : i64, tpu.core_type = #tpu.core_type<tc>, window_params = [{transform_indices = @transform_0, window_bounds = array<i64: 16, 128>}, {transform_indices = @transform_1, window_bounds = array<i64: 128, 128>}, {transform_indices = @transform_2, window_bounds = array<i64: 1, 128>}, {transform_indices = @transform_3, window_bounds = array<i64: 16, 128>}]} {
    %c0_i32 = arith.constant 0 : i32
    %0 = arith.cmpi eq, %arg2, %c0_i32 : i32
    %1 = arith.extui %0 : i1 to i32
    %c0_i32_0 = arith.constant 0 : i32
    %2 = arith.cmpi ne, %1, %c0_i32_0 : i32
    scf.if %2 {
      %cst_10 = arith.constant 0.000000e+00 : f32
      %12 = vector.broadcast %cst_10 : f32 to vector<16x128xf32>
      %c0_11 = arith.constant 0 : index
      %c0_12 = arith.constant 0 : index
      %13 = vector.load %arg7[%c0_11, %c0_12] : memref<16x128xf32, #tpu.memory_space<vmem>>, vector<16x128xf32>
      tpu.vector_store %arg7[%c0_11, %c0_12], %12 {strides = array<i32>} : memref<16x128xf32, #tpu.memory_space<vmem>>, vector<16x128xf32>,
    } else {
    }
    %c0 = arith.constant 0 : index
    %c0_1 = arith.constant 0 : index
    %3 = vector.load %arg7[%c0, %c0_1] : memref<16x128xf32, #tpu.memory_space<vmem>>, vector<16x128xf32>
    %c0_2 = arith.constant 0 : index
    %c0_3 = arith.constant 0 : index
    %4 = vector.load %arg3[%c0_2, %c0_3] : memref<16x128xbf16, #tpu.memory_space<vmem>>, vector<16x128xbf16>
    %c0_4 = arith.constant 0 : index
    %c0_5 = arith.constant 0 : index
    %5 = vector.load %arg4[%c0_4, %c0_5] : memref<128x128xbf16, #tpu.memory_space<vmem>>, vector<128x128xbf16>
    %cst = arith.constant dense<0.000000e+00> : vector<16x128xf32>
    %6 = tpu.matmul %4, %5, %cst {dimension_numbers = #tpu.dot_dimension_numbers<[1], [0], [0], [1], [0, 0, 1, 1], [], []>} : vector<16x128xbf16>, vector<128x128xbf16>, vector<16x128xf32> -> vector<16x128xf32>
    %7 = arith.addf %3, %6 : vector<16x128xf32>
    %c0_6 = arith.constant 0 : index
    %c0_7 = arith.constant 0 : index
    %8 = vector.load %arg7[%c0_6, %c0_7] : memref<16x128xf32, #tpu.memory_space<vmem>>, vector<16x128xf32>
    tpu.vector_store %arg7[%c0_6, %c0_7], %7 {strides = array<i32>} : memref<16x128xf32, #tpu.memory_space<vmem>>, vector<16x128xf32>,
    %c0_i32_8 = arith.constant 0 : i32
    %9 = arith.cmpi eq, %arg2, %c0_i32_8 : i32
    %10 = arith.extui %9 : i1 to i32
    %c0_i32_9 = arith.constant 0 : i32
    %11 = arith.cmpi ne, %10, %c0_i32_9 : i32
    scf.if %11 {
      %c0_10 = arith.constant 0 : index
      %c0_11 = arith.constant 0 : index
      %12 = vector.load %arg7[%c0_10, %c0_11] : memref<16x128xf32, #tpu.memory_space<vmem>>, vector<16x128xf32>
      %c0_12 = arith.constant 0 : index
      %c0_13 = arith.constant 0 : index
      %13 = vector.load %arg5[%c0_12, %c0_13] : memref<1x128xf32, #tpu.memory_space<vmem>>, vector<1x128xf32>
      %14 = vector.broadcast %13 : vector<1x128xf32> to vector<16x128xf32>
      %15 = arith.addf %12, %14 : vector<16x128xf32>
      %16 = arith.truncf %15 : vector<16x128xf32> to vector<16x128xbf16>
      %c0_14 = arith.constant 0 : index
      %c0_15 = arith.constant 0 : index
      %17 = vector.load %arg6[%c0_14, %c0_15] : memref<16x128xbf16, #tpu.memory_space<vmem>>, vector<16x128xbf16>
      tpu.vector_store %arg6[%c0_14, %c0_15], %16 {strides = array<i32>} : memref<16x128xbf16, #tpu.memory_space<vmem>>, vector<16x128xbf16>,
    } else {
    }
    return
  }
  func.func @transform_0(%arg0: i32, %arg1: i32, %arg2: i32) -> (i32, i32) {
    %c0_i32 = arith.constant 0 : i32
    return %arg0, %arg2 : i32, i32
  }
  func.func @transform_1(%arg0: i32, %arg1: i32, %arg2: i32) -> (i32, i32) {
    %c0_i32 = arith.constant 0 : i32
    return %arg2, %arg1 : i32, i32
  }
  func.func @transform_2(%arg0: i32, %arg1: i32, %arg2: i32) -> (i32, i32) {
    %c0_i32 = arith.constant 0 : i32
    %c0_i32_0 = arith.constant 0 : i32
    return %c0_i32, %arg1 : i32, i32
  }
  func.func @transform_3(%arg0: i32, %arg1: i32, %arg2: i32) -> (i32, i32) {
    %c0_i32 = arith.constant 0 : i32
    return %arg0, %arg1 : i32, i32
  }
}

module attributes {stable_mosaic.version = 11 : i64} {
  func.func @_linear_kernel(%arg0: i32, %arg1: i32, %arg2: i32, %arg3: memref<16x128xbf16, #tpu.memory_space<vmem>>, %arg4: memref<128x128xbf16, #tpu.memory_space<vmem>>, %arg5: memref<1x128xf32, #tpu.memory_space<vmem>>, %arg6: memref<16x128xf32, #tpu.memory_space<vmem>>, %arg7: memref<16x128xf32, #tpu.memory_space<vmem>>) attributes {dimension_semantics = [#tpu.dimension_semantics<parallel>, #tpu.dimension_semantics<parallel>, #tpu.dimension_semantics<arbitrary>], iteration_bounds = array<i64: 1, 1, 1>, scalar_prefetch = 0 : i64, scratch_operands = 1 : i64, tpu.core_type = #tpu.core_type<tc>, window_params = [{transform_indices = @transform_0, window_bounds = array<i64: 16, 128>}, {transform_indices = @transform_1, window_bounds = array<i64: 128, 128>}, {transform_indices = @transform_2, window_bounds = array<i64: 1, 128>}, {transform_indices = @transform_3, window_bounds = array<i64: 16, 128>}]} {
    %c0_i32 = arith.constant 0 : i32
    %0 = arith.cmpi eq, %arg2, %c0_i32 : i32
    %1 = arith.extui %0 : i1 to i32
    %c0_i32_0 = arith.constant 0 : i32
    %2 = arith.cmpi ne, %1, %c0_i32_0 : i32
    scf.if %2 {
      %cst_10 = arith.constant 0.000000e+00 : f32
      %12 = vector.broadcast %cst_10 : f32 to vector<16x128xf32>
      %c0_11 = arith.constant 0 : index
      %c0_12 = arith.constant 0 : index
      %13 = vector.load %arg7[%c0_11, %c0_12] : memref<16x128xf32, #tpu.memory_space<vmem>>, vector<16x128xf32>
      tpu.vector_store %arg7[%c0_11, %c0_12], %12 {strides = array<i32>} : memref<16x128xf32, #tpu.memory_space<vmem>>, vector<16x128xf32>,
    } else {
    }
    %c0 = arith.constant 0 : index
    %c0_1 = arith.constant 0 : index
    %3 = vector.load %arg7[%c0, %c0_1] : memref<16x128xf32, #tpu.memory_space<vmem>>, vector<16x128xf32>
    %c0_2 = arith.constant 0 : index
    %c0_3 = arith.constant 0 : index
    %4 = vector.load %arg3[%c0_2, %c0_3] : memref<16x128xbf16, #tpu.memory_space<vmem>>, vector<16x128xbf16>
    %c0_4 = arith.constant 0 : index
    %c0_5 = arith.constant 0 : index
    %5 = vector.load %arg4[%c0_4, %c0_5] : memref<128x128xbf16, #tpu.memory_space<vmem>>, vector<128x128xbf16>
    %cst = arith.constant dense<0.000000e+00> : vector<16x128xf32>
    %6 = tpu.matmul %4, %5, %cst {dimension_numbers = #tpu.dot_dimension_numbers<[1], [0], [0], [1], [0, 0, 1, 1], [], []>} : vector<16x128xbf16>, vector<128x128xbf16>, vector<16x128xf32> -> vector<16x128xf32>
    %7 = arith.addf %3, %6 : vector<16x128xf32>
    %c0_6 = arith.constant 0 : index
    %c0_7 = arith.constant 0 : index
    %8 = vector.load %arg7[%c0_6, %c0_7] : memref<16x128xf32, #tpu.memory_space<vmem>>, vector<16x128xf32>
    tpu.vector_store %arg7[%c0_6, %c0_7], %7 {strides = array<i32>} : memref<16x128xf32, #tpu.memory_space<vmem>>, vector<16x128xf32>,
    %c0_i32_8 = arith.constant 0 : i32
    %9 = arith.cmpi eq, %arg2, %c0_i32_8 : i32
    %10 = arith.extui %9 : i1 to i32
    %c0_i32_9 = arith.constant 0 : i32
    %11 = arith.cmpi ne, %10, %c0_i32_9 : i32
    scf.if %11 {
      %c0_10 = arith.constant 0 : index
      %c0_11 = arith.constant 0 : index
      %12 = vector.load %arg7[%c0_10, %c0_11] : memref<16x128xf32, #tpu.memory_space<vmem>>, vector<16x128xf32>
      %c0_12 = arith.constant 0 : index
      %c0_13 = arith.constant 0 : index
      %13 = vector.load %arg5[%c0_12, %c0_13] : memref<1x128xf32, #tpu.memory_space<vmem>>, vector<1x128xf32>
      %14 = vector.broadcast %13 : vector<1x128xf32> to vector<16x128xf32>
      %15 = arith.addf %12, %14 : vector<16x128xf32>
      %c0_14 = arith.constant 0 : index
      %c0_15 = arith.constant 0 : index
      %16 = vector.load %arg6[%c0_14, %c0_15] : memref<16x128xf32, #tpu.memory_space<vmem>>, vector<16x128xf32>
      tpu.vector_store %arg6[%c0_14, %c0_15], %15 {strides = array<i32>} : memref<16x128xf32, #tpu.memory_space<vmem>>, vector<16x128xf32>,
    } else {
    }
    return
  }
  func.func @transform_0(%arg0: i32, %arg1: i32, %arg2: i32) -> (i32, i32) {
    %c0_i32 = arith.constant 0 : i32
    return %arg0, %arg2 : i32, i32
  }
  func.func @transform_1(%arg0: i32, %arg1: i32, %arg2: i32) -> (i32, i32) {
    %c0_i32 = arith.constant 0 : i32
    return %arg2, %arg1 : i32, i32
  }
  func.func @transform_2(%arg0: i32, %arg1: i32, %arg2: i32) -> (i32, i32) {
    %c0_i32 = arith.constant 0 : i32
    %c0_i32_0 = arith.constant 0 : i32
    return %c0_i32, %arg1 : i32, i32
  }
  func.func @transform_3(%arg0: i32, %arg1: i32, %arg2: i32) -> (i32, i32) {
    %c0_i32 = arith.constant 0 : i32
    return %arg0, %arg1 : i32, i32
  }
}

</mosaic_0001>

<llo_original>
// kernel: rnn_model_forward.11
$region0: #{rnn_model_forward.11}
  #allocation0 [shape = 'u32[]', space=smem, size = 0x4, offset = 0x4, fixed_abs, tag = 'smem constant byte address 0x4 - core index']
  #allocation1 [shape = 'u32[144,128]{1,0:T(1,128)}', space=vmem, size = 0x12000, scoped, tag = 'internal scratch']
  #allocation2 [shape = 'f32[16,128]{1,0:T(8,128)}', space=vmem, size = 0x2000, scoped, tag = 'scratch operand']
  %s0 = inlined_call_operand.vmem [shape: bf16[16,128], index: 0, kind: input, shape index: {}]
  %s1 = inlined_call_operand.vmem [shape: bf16[128,128], index: 1, kind: input, shape index: {}]
  %s2 = inlined_call_operand.vmem [shape: f32[1,128], index: 2, kind: input, shape index: {}]
  %s3 = inlined_call_operand.hbm [shape: f32[16,128], index: 3, kind: output, shape index: {}]
  %s4 = sld [smem:[#allocation0]]
  $region30: #{rnn_model_forward.11} parent=0
    _
  %s6 = ssub.s32 1, %s4
  %s7 = scalar_select 0, %s6, %s4
  $region1: #{rnn_model_forward.11} parent=0
    #allocation3 [shape = 'u8[8192]{0}', space=vmem, size = 0x2000, scoped, tag = 'output window, operand 0, single buffered']
    #allocation4 [shape = 's32[1]{0}', space=sflag, size = 0x4, scoped, tag = 'scoped memory for rnn_model_forward.11']
    %8 = vsyncpa [#allocation4], 0
    // Predicated region
    $region2: #{rnn_model_forward.11} parent=1 // pred_check
      _
    $region3: #{rnn_model_forward.11} parent=1 // pred_check_branch
      %10 = sbr.rel (0) target = $region5
    $region4: #{rnn_model_forward.11} parent=1 // pred_region
      _
    $region5: #{rnn_model_forward.11} parent=1 // pred_fallthru
      _
    // Predicated region
    $region6: #{rnn_model_forward.11} parent=1 // pred_check
      _
    $region7: #{rnn_model_forward.11} parent=1 // pred_check_branch
      %12 = sbr.rel (0) target = $region9
    $region8: #{rnn_model_forward.11} parent=1 // pred_region
      _
    $region9: #{rnn_model_forward.11} parent=1 // pred_fallthru
      _
    // Predicated region
    $region10: #{rnn_model_forward.11} parent=1 // pred_check
      _
    $region11: #{rnn_model_forward.11} parent=1 // pred_check_branch
      %14 = sbr.rel (0) target = $region13
    $region12: #{rnn_model_forward.11} parent=1 // pred_region
      _
    $region13: #{rnn_model_forward.11} parent=1 // pred_fallthru
      _
    %p16 = scmp.eq.s32.totalorder 0, 0
    // Predicated region
    $region14: #{rnn_model_forward.11} parent=1 // pred_check
      %p17 = pneg %p16
    $region15: #{rnn_model_forward.11} parent=1 // pred_check_branch
      %19 = sbr.rel (%p17) target = $region17
    $region16: #{rnn_model_forward.11} parent=1 // pred_region
      %20 = vst [vmem:[#allocation2] sm:$0xff] 0.0
      %21 = vst [vmem:[#allocation2 + $0x8] sm:$0xff] 0.0
    $region17: #{rnn_model_forward.11} parent=1 // pred_fallthru
      _
    %v22 = vld [vmem:[#allocation2] sm:$0xff]
    %v23 = vld [vmem:[#allocation2 + $0x8] sm:$0xff]
    %v24 = vld [vmem:[%s0] sm:$0xf]
    %v25 = vld [vmem:[%s0 + $0x4] sm:$0xf]
    %v26 = vld [vmem:[%s1] sm:$0xf]
    %v27 = vld [vmem:[%s1 + $0x4] sm:$0xf]
    %v28 = vld [vmem:[%s1 + $0x8] sm:$0xf]
    %v29 = vld [vmem:[%s1 + $0xc] sm:$0xf]
    %v30 = vld [vmem:[%s1 + $0x10] sm:$0xf]
    %v31 = vld [vmem:[%s1 + $0x14] sm:$0xf]
    %v32 = vld [vmem:[%s1 + $0x18] sm:$0xf]
    %v33 = vld [vmem:[%s1 + $0x1c] sm:$0xf]
    %v34 = vld [vmem:[%s1 + $0x20] sm:$0xf]
    %v35 = vld [vmem:[%s1 + $0x24] sm:$0xf]
    %v36 = vld [vmem:[%s1 + $0x28] sm:$0xf]
    %v37 = vld [vmem:[%s1 + $0x2c] sm:$0xf]
    %v38 = vld [vmem:[%s1 + $0x30] sm:$0xf]
    %v39 = vld [vmem:[%s1 + $0x34] sm:$0xf]
    %v40 = vld [vmem:[%s1 + $0x38] sm:$0xf]
    %v41 = vld [vmem:[%s1 + $0x3c] sm:$0xf]
    %v44 = vunpack.c.l.b16 %v24
    %v45 = vunpack.c.l.b16 %v25
    %v46 = vpack.c.b16 %v45, %v44
    %v64 = vunpack.c.l.b16 %v26
    %v65 = vunpack.c.l.b16 %v27
    %v66 = vunpack.c.l.b16 %v28
    %v67 = vunpack.c.l.b16 %v29
    %v68 = vunpack.c.l.b16 %v30
    %v69 = vunpack.c.l.b16 %v31
    %v70 = vunpack.c.l.b16 %v32
    %v71 = vunpack.c.l.b16 %v33
    %v72 = vunpack.c.l.b16 %v34
    %v73 = vunpack.c.l.b16 %v35
    %v74 = vunpack.c.l.b16 %v36
    %v75 = vunpack.c.l.b16 %v37
    %v76 = vunpack.c.l.b16 %v38
    %v77 = vunpack.c.l.b16 %v39
    %v78 = vunpack.c.l.b16 %v40
    %v79 = vunpack.c.l.b16 %v41
    %v80 = vpack.c.b16 %v65, %v64
    %v81 = vpack.c.b16 %v67, %v66
    %v82 = vpack.c.b16 %v69, %v68
    %v83 = vpack.c.b16 %v71, %v70
    %v84 = vpack.c.b16 %v73, %v72
    %v85 = vpack.c.b16 %v75, %v74
    %v86 = vpack.c.b16 %v77, %v76
    %v87 = vpack.c.b16 %v79, %v78
    %96 = vmatprep.subr.bf16.mxu0 0
    %97 = vmatpush1.bf16.msra.mxu0 %v80
    %98 = vmatprep.subr.bf16.mxu0 0
    %99 = vmatpush1.bf16.msra.mxu0 %v81
    %100 = vmatprep.subr.bf16.mxu0 0
    %101 = vmatpush1.bf16.msra.mxu0 %v82
    %102 = vmatprep.subr.bf16.mxu0 0
    %103 = vmatpush1.bf16.msra.mxu0 %v83
    %104 = vmatprep.subr.bf16.mxu0 0
    %105 = vmatpush1.bf16.msra.mxu0 %v84
    %106 = vmatprep.subr.bf16.mxu0 0
    %107 = vmatpush1.bf16.msra.mxu0 %v85
    %108 = vmatprep.subr.bf16.mxu0 0
    %109 = vmatpush1.bf16.msra.mxu0 %v86
    %110 = vmatprep.subr.bf16.mxu0 0
    %111 = vmatpush1.bf16.msra.mxu0 %v87
    %112 = vmatprep.subr.bf16.mxu0 0
    %113 = vmatpush1.bf16.msra.mxu0 0
    %114 = vmatprep.subr.bf16.mxu0 0
    %115 = vmatpush1.bf16.msra.mxu0 0
    %116 = vmatprep.subr.bf16.mxu0 0
    %117 = vmatpush1.bf16.msra.mxu0 0
    %118 = vmatprep.subr.bf16.mxu0 0
    %119 = vmatpush1.bf16.msra.mxu0 0
    %120 = vmatprep.subr.bf16.mxu0 0
    %121 = vmatpush1.bf16.msra.mxu0 0
    %122 = vmatprep.subr.bf16.mxu0 0
    %123 = vmatpush1.bf16.msra.mxu0 0
    %124 = vmatprep.subr.bf16.mxu0 0
    %125 = vmatpush1.bf16.msra.mxu0 0
    %126 = vmatprep.subr.bf16.mxu0 0
    %127 = vmatpush1.bf16.msra.mxu0 0
    %128 = vmatprep.mubr.bf16.mxu0 0
    %129 = vmatmul.mubr.bf16.gmra.mrb[0].mxu0 %v46
    %v130 = vpop.f32.mrb[0].mxu0
    %v131 = vadd.f32 0.0, %v130
    %v132 = vpop.f32.mrb[0].mxu0
    %v133 = vpop.f32.mrb[0].mxu0
    %v134 = vadd.f32 0.0, %v133
    %v135 = vpop.f32.mrb[0].mxu0
    %136 = vdwg.mxu0
    %v137 = vadd.f32 %v22, %v131
    %v138 = vadd.f32 %v23, %v134
    %139 = vst [vmem:[#allocation2] sm:$0xff] %v137
    %140 = vst [vmem:[#allocation2 + $0x8] sm:$0xff] %v138
    // Predicated region
    $region18: #{rnn_model_forward.11} parent=1 // pred_check
      %p141 = pneg %p16
    $region19: #{rnn_model_forward.11} parent=1 // pred_check_branch
      %143 = sbr.rel (%p141) target = $region21
    $region20: #{rnn_model_forward.11} parent=1 // pred_region
      %v144 = vld [vmem:[#allocation2] sm:$0xff]
      %v145 = vld [vmem:[#allocation2 + $0x8] sm:$0xff]
      %v146 = vld [vmem:[%s2] sm:$0x1]
      %v148 = vlaneseq
      %v149 = vshrl.u32 %v148, 7
      %v150 = vsub.s32 0, %v149
      %v151 = vrot.slane %v146, %v150
      %v153 = vadd.f32 %v144, %v151
      %v154 = vadd.f32 %v145, %v151
      %155 = vst [vmem:[#allocation3] sm:$0xff] %v153
      %156 = vst [vmem:[#allocation3 + $0x8] sm:$0xff] %v154
    $region21: #{rnn_model_forward.11} parent=1 // pred_fallthru
      _
    // Predicated region
    $region22: #{rnn_model_forward.11} parent=1 // pred_check
      _
    $region23: #{rnn_model_forward.11} parent=1 // pred_check_branch
      %158 = sbr.rel (0) target = $region25
    $region24: #{rnn_model_forward.11} parent=1 // pred_region
      %s160 = ssub.s32 256, 256
      %161 = vsyncadd [#allocation4], %s160
      %s162 = sshll.u32 [#allocation3], 4
      %s163 = int_to_ptr.vmem [resolvable:$true] %s162
      %168 = dma.vmem_to_hbm [thread:$0]  %s163, 256, %s3, [#allocation4], 128, 128, 8
    $region25: #{rnn_model_forward.11} parent=1 // pred_fallthru
      _
    // Predicated region
    $region26: #{rnn_model_forward.11} parent=1 // pred_check
      _
    $region27: #{rnn_model_forward.11} parent=1 // pred_check_branch
      %170 = sbr.rel (0) target = $region29
    $region28: #{rnn_model_forward.11} parent=1 // pred_region
      %171 = dma.done [#allocation4], 256
    $region29: #{rnn_model_forward.11} parent=1 // pred_fallthru
      _
    %172 = vsyncpa [#allocation4], 1

// kernel: rnn_model_forward.7
$region0: #{rnn_model_forward.7}
  #allocation0 [shape = 'u32[]', space=smem, size = 0x4, offset = 0x4, fixed_abs, tag = 'smem constant byte address 0x4 - core index']
  #allocation1 [shape = 'u32[144,128]{1,0:T(1,128)}', space=vmem, size = 0x12000, scoped, tag = 'internal scratch']
  #allocation2 [shape = 'f32[16,128]{1,0:T(8,128)}', space=vmem, size = 0x2000, scoped, tag = 'scratch operand']
  %s0 = inlined_call_operand.vmem [shape: bf16[16,128], index: 0, kind: input, shape index: {}]
  %s1 = inlined_call_operand.vmem [shape: bf16[128,128], index: 1, kind: input, shape index: {}]
  %s2 = inlined_call_operand.vmem [shape: f32[1,128], index: 2, kind: input, shape index: {}]
  %s3 = inlined_call_operand.vmem [shape: bf16[16,128], index: 3, kind: output, shape index: {}]
  %s4 = sld [smem:[#allocation0]]
  $region30: #{rnn_model_forward.7} parent=0
    _
  %s6 = ssub.s32 1, %s4
  %s7 = scalar_select 0, %s6, %s4
  // Predicated region
  $region2: #{rnn_model_forward.7} parent=0 // pred_check
    _
  $region3: #{rnn_model_forward.7} parent=0 // pred_check_branch
    %9 = sbr.rel (0) target = $region5
  $region4: #{rnn_model_forward.7} parent=0 // pred_region
    _
  $region5: #{rnn_model_forward.7} parent=0 // pred_fallthru
    _
  // Predicated region
  $region6: #{rnn_model_forward.7} parent=0 // pred_check
    _
  $region7: #{rnn_model_forward.7} parent=0 // pred_check_branch
    %11 = sbr.rel (0) target = $region9
  $region8: #{rnn_model_forward.7} parent=0 // pred_region
    _
  $region9: #{rnn_model_forward.7} parent=0 // pred_fallthru
    _
  // Predicated region
  $region10: #{rnn_model_forward.7} parent=0 // pred_check
    _
  $region11: #{rnn_model_forward.7} parent=0 // pred_check_branch
    %13 = sbr.rel (0) target = $region13
  $region12: #{rnn_model_forward.7} parent=0 // pred_region
    _
  $region13: #{rnn_model_forward.7} parent=0 // pred_fallthru
    _
  %p15 = scmp.eq.s32.totalorder 0, 0
  // Predicated region
  $region14: #{rnn_model_forward.7} parent=0 // pred_check
    %p16 = pneg %p15
  $region15: #{rnn_model_forward.7} parent=0 // pred_check_branch
    %18 = sbr.rel (%p16) target = $region17
  $region16: #{rnn_model_forward.7} parent=0 // pred_region
    %19 = vst [vmem:[#allocation2] sm:$0xff] 0.0
    %20 = vst [vmem:[#allocation2 + $0x8] sm:$0xff] 0.0
  $region17: #{rnn_model_forward.7} parent=0 // pred_fallthru
    _
  %v21 = vld [vmem:[#allocation2] sm:$0xff]
  %v22 = vld [vmem:[#allocation2 + $0x8] sm:$0xff]
  %v23 = vld [vmem:[%s0] sm:$0xf]
  %v24 = vld [vmem:[%s0 + $0x4] sm:$0xf]
  %v25 = vld [vmem:[%s1] sm:$0xf]
  %v26 = vld [vmem:[%s1 + $0x4] sm:$0xf]
  %v27 = vld [vmem:[%s1 + $0x8] sm:$0xf]
  %v28 = vld [vmem:[%s1 + $0xc] sm:$0xf]
  %v29 = vld [vmem:[%s1 + $0x10] sm:$0xf]
  %v30 = vld [vmem:[%s1 + $0x14] sm:$0xf]
  %v31 = vld [vmem:[%s1 + $0x18] sm:$0xf]
  %v32 = vld [vmem:[%s1 + $0x1c] sm:$0xf]
  %v33 = vld [vmem:[%s1 + $0x20] sm:$0xf]
  %v34 = vld [vmem:[%s1 + $0x24] sm:$0xf]
  %v35 = vld [vmem:[%s1 + $0x28] sm:$0xf]
  %v36 = vld [vmem:[%s1 + $0x2c] sm:$0xf]
  %v37 = vld [vmem:[%s1 + $0x30] sm:$0xf]
  %v38 = vld [vmem:[%s1 + $0x34] sm:$0xf]
  %v39 = vld [vmem:[%s1 + $0x38] sm:$0xf]
  %v40 = vld [vmem:[%s1 + $0x3c] sm:$0xf]
  %v43 = vunpack.c.l.b16 %v23
  %v44 = vunpack.c.l.b16 %v24
  %v45 = vpack.c.b16 %v44, %v43
  %v63 = vunpack.c.l.b16 %v25
  %v64 = vunpack.c.l.b16 %v26
  %v65 = vunpack.c.l.b16 %v27
  %v66 = vunpack.c.l.b16 %v28
  %v67 = vunpack.c.l.b16 %v29
  %v68 = vunpack.c.l.b16 %v30
  %v69 = vunpack.c.l.b16 %v31
  %v70 = vunpack.c.l.b16 %v32
  %v71 = vunpack.c.l.b16 %v33
  %v72 = vunpack.c.l.b16 %v34
  %v73 = vunpack.c.l.b16 %v35
  %v74 = vunpack.c.l.b16 %v36
  %v75 = vunpack.c.l.b16 %v37
  %v76 = vunpack.c.l.b16 %v38
  %v77 = vunpack.c.l.b16 %v39
  %v78 = vunpack.c.l.b16 %v40
  %v79 = vpack.c.b16 %v64, %v63
  %v80 = vpack.c.b16 %v66, %v65
  %v81 = vpack.c.b16 %v68, %v67
  %v82 = vpack.c.b16 %v70, %v69
  %v83 = vpack.c.b16 %v72, %v71
  %v84 = vpack.c.b16 %v74, %v73
  %v85 = vpack.c.b16 %v76, %v75
  %v86 = vpack.c.b16 %v78, %v77
  %95 = vmatprep.subr.bf16.mxu0 0
  %96 = vmatpush1.bf16.msra.mxu0 %v79
  %97 = vmatprep.subr.bf16.mxu0 0
  %98 = vmatpush1.bf16.msra.mxu0 %v80
  %99 = vmatprep.subr.bf16.mxu0 0
  %100 = vmatpush1.bf16.msra.mxu0 %v81
  %101 = vmatprep.subr.bf16.mxu0 0
  %102 = vmatpush1.bf16.msra.mxu0 %v82
  %103 = vmatprep.subr.bf16.mxu0 0
  %104 = vmatpush1.bf16.msra.mxu0 %v83
  %105 = vmatprep.subr.bf16.mxu0 0
  %106 = vmatpush1.bf16.msra.mxu0 %v84
  %107 = vmatprep.subr.bf16.mxu0 0
  %108 = vmatpush1.bf16.msra.mxu0 %v85
  %109 = vmatprep.subr.bf16.mxu0 0
  %110 = vmatpush1.bf16.msra.mxu0 %v86
  %111 = vmatprep.subr.bf16.mxu0 0
  %112 = vmatpush1.bf16.msra.mxu0 0
  %113 = vmatprep.subr.bf16.mxu0 0
  %114 = vmatpush1.bf16.msra.mxu0 0
  %115 = vmatprep.subr.bf16.mxu0 0
  %116 = vmatpush1.bf16.msra.mxu0 0
  %117 = vmatprep.subr.bf16.mxu0 0
  %118 = vmatpush1.bf16.msra.mxu0 0
  %119 = vmatprep.subr.bf16.mxu0 0
  %120 = vmatpush1.bf16.msra.mxu0 0
  %121 = vmatprep.subr.bf16.mxu0 0
  %122 = vmatpush1.bf16.msra.mxu0 0
  %123 = vmatprep.subr.bf16.mxu0 0
  %124 = vmatpush1.bf16.msra.mxu0 0
  %125 = vmatprep.subr.bf16.mxu0 0
  %126 = vmatpush1.bf16.msra.mxu0 0
  %127 = vmatprep.mubr.bf16.mxu0 0
  %128 = vmatmul.mubr.bf16.gmra.mrb[0].mxu0 %v45
  %v129 = vpop.f32.mrb[0].mxu0
  %v130 = vadd.f32 0.0, %v129
  %v131 = vpop.f32.mrb[0].mxu0
  %v132 = vpop.f32.mrb[0].mxu0
  %v133 = vadd.f32 0.0, %v132
  %v134 = vpop.f32.mrb[0].mxu0
  %135 = vdwg.mxu0
  %v136 = vadd.f32 %v21, %v130
  %v137 = vadd.f32 %v22, %v133
  %138 = vst [vmem:[#allocation2] sm:$0xff] %v136
  %139 = vst [vmem:[#allocation2 + $0x8] sm:$0xff] %v137
  // Predicated region
  $region18: #{rnn_model_forward.7} parent=0 // pred_check
    %p140 = pneg %p15
  $region19: #{rnn_model_forward.7} parent=0 // pred_check_branch
    %142 = sbr.rel (%p140) target = $region21
  $region20: #{rnn_model_forward.7} parent=0 // pred_region
    %v143 = vld [vmem:[#allocation2] sm:$0xff]
    %v144 = vld [vmem:[#allocation2 + $0x8] sm:$0xff]
    %v145 = vld [vmem:[%s2] sm:$0x1]
    %v147 = vlaneseq
    %v148 = vshrl.u32 %v147, 7
    %v149 = vsub.s32 0, %v148
    %v150 = vrot.slane %v145, %v149
    %v152 = vadd.f32 %v143, %v150
    %v153 = vadd.f32 %v144, %v150
    %v154 = vpack.c.bf16 %v153, %v152
    %v156 = vunpack.c.l.b16 %v154
    %v157 = vunpack.c.h.b16 %v154
    %v158 = vpack.c.b16 %v156, %v156
    %v159 = vpack.c.b16 %v157, %v157
    %162 = vst [vmem:[%s3] sm:$0xf] %v158
    %163 = vst [vmem:[%s3 + $0x4] sm:$0xf] %v159
  $region21: #{rnn_model_forward.7} parent=0 // pred_fallthru
    _
  // Predicated region
  $region22: #{rnn_model_forward.7} parent=0 // pred_check
    _
  $region23: #{rnn_model_forward.7} parent=0 // pred_check_branch
    %165 = sbr.rel (0) target = $region25
  $region24: #{rnn_model_forward.7} parent=0 // pred_region
    _
  $region25: #{rnn_model_forward.7} parent=0 // pred_fallthru
    _
  // Predicated region
  $region26: #{rnn_model_forward.7} parent=0 // pred_check
    _
  $region27: #{rnn_model_forward.7} parent=0 // pred_check_branch
    %167 = sbr.rel (0) target = $region29
  $region28: #{rnn_model_forward.7} parent=0 // pred_region
    _
  $region29: #{rnn_model_forward.7} parent=0 // pred_fallthru
    _

// kernel: rnn_model_forward.8
$region0: #{rnn_model_forward.8}
  #allocation0 [shape = 'u32[]', space=smem, size = 0x4, offset = 0x4, fixed_abs, tag = 'smem constant byte address 0x4 - core index']
  #allocation1 [shape = 'u32[144,128]{1,0:T(1,128)}', space=vmem, size = 0x12000, scoped, tag = 'internal scratch']
  #allocation2 [shape = 'f32[2,32]{1,0:T(2,128)}', space=vmem, size = 0x400, scoped, tag = 'scratch operand']
  %s0 = inlined_call_operand.vmem [shape: bf16[8,2,32], index: 0, kind: input, shape index: {}]
  %s1 = inlined_call_operand.vmem [shape: f32[2,32], index: 1, kind: input, shape index: {}]
  %s2 = inlined_call_operand.vmem [shape: bf16[32,32], index: 2, kind: input, shape index: {}]
  %s3 = inlined_call_operand.vmem [shape: bf16[8,2,32], index: 3, kind: output, shape index: {0}]
  %s4 = inlined_call_operand.vmem [shape: f32[2,32], index: 4, kind: output, shape index: {1}]
  %5 = xla_tuple %s3, %s4
  %s6 = sld [smem:[#allocation0]]
  $region38: #{rnn_model_forward.8} parent=0
    _
  %s8 = ssub.s32 1, %s6
  %s9 = scalar_select 0, %s8, %s6
  // Predicated region
  $region2: #{rnn_model_forward.8} parent=0 // pred_check
    _
  $region3: #{rnn_model_forward.8} parent=0 // pred_check_branch
    %11 = sbr.rel (0) target = $region5
  $region4: #{rnn_model_forward.8} parent=0 // pred_region
    _
  $region5: #{rnn_model_forward.8} parent=0 // pred_fallthru
    _
  // Predicated region
  $region6: #{rnn_model_forward.8} parent=0 // pred_check
    _
  $region7: #{rnn_model_forward.8} parent=0 // pred_check_branch
    %13 = sbr.rel (0) target = $region9
  $region8: #{rnn_model_forward.8} parent=0 // pred_region
    _
  $region9: #{rnn_model_forward.8} parent=0 // pred_fallthru
    _
  // Predicated region
  $region10: #{rnn_model_forward.8} parent=0 // pred_check
    _
  $region11: #{rnn_model_forward.8} parent=0 // pred_check_branch
    %15 = sbr.rel (0) target = $region13
  $region12: #{rnn_model_forward.8} parent=0 // pred_region
    _
  $region13: #{rnn_model_forward.8} parent=0 // pred_fallthru
    _
  %p17 = scmp.eq.s32.totalorder 0, 0
  // Predicated region
  $region14: #{rnn_model_forward.8} parent=0 // pred_check
    %p18 = pneg %p17
  $region15: #{rnn_model_forward.8} parent=0 // pred_check_branch
    %20 = sbr.rel (%p18) target = $region17
  $region16: #{rnn_model_forward.8} parent=0 // pred_region
    %v21 = vld [vmem:[%s1] sm:$0x3]
    %vm22 = vcmask 254976
    %23 = vst.msk [vmem:[#allocation2] sm:$0x3] %vm22, %v21
  $region17: #{rnn_model_forward.8} parent=0 // pred_fallthru
    _
  %v24 = vld [vmem:[%s2] sm:$0xf]
  %v25 = vld [vmem:[%s2 + $0x4] sm:$0xf]
  %v26 = vld [vmem:[%s2 + $0x8] sm:$0xf]
  %v27 = vld [vmem:[%s2 + $0xc] sm:$0xf]
  %v28 = vld [vmem:[#allocation2] sm:$0x3]
  %v29 = vld [vmem:[%s0] sm:$0x1]
  %v30 = vunpack.c.l.bf16 %v29
  %v31 = vpack.c.bf16 %v28, %v28
  %v36 = vunpack.c.l.b16 %v24
  %v37 = vunpack.c.l.b16 %v25
  %v38 = vunpack.c.l.b16 %v26
  %v39 = vunpack.c.l.b16 %v27
  %v40 = vpack.c.b16 %v37, %v36
  %v41 = vpack.c.b16 %v39, %v38
  %vm44 = vcmask 261120
  %v46 = vsel %vm44, %v31, 0
  %48 = vmatprep.subr.bf16.mxu0 0
  %49 = vmatpush1.bf16.msra.mxu0 %v40
  %50 = vmatprep.subr.bf16.mxu0 0
  %51 = vmatpush1.bf16.msra.mxu0 %v41
  %52 = vmatprep.subr.bf16.mxu0 0
  %53 = vmatpush1.bf16.msra.mxu0 0
  %54 = vmatprep.subr.bf16.mxu0 0
  %55 = vmatpush1.bf16.msra.mxu0 0
  %56 = vmatprep.subr.bf16.mxu0 0
  %57 = vmatpush1.bf16.msra.mxu0 0
  %58 = vmatprep.subr.bf16.mxu0 0
  %59 = vmatpush1.bf16.msra.mxu0 0
  %60 = vmatprep.subr.bf16.mxu0 0
  %61 = vmatpush1.bf16.msra.mxu0 0
  %62 = vmatprep.subr.bf16.mxu0 0
  %63 = vmatpush1.bf16.msra.mxu0 0
  %64 = vmatprep.subr.bf16.mxu0 0
  %65 = vmatpush1.bf16.msra.mxu0 0
  %66 = vmatprep.subr.bf16.mxu0 0
  %67 = vmatpush1.bf16.msra.mxu0 0
  %68 = vmatprep.subr.bf16.mxu0 0
  %69 = vmatpush1.bf16.msra.mxu0 0
  %70 = vmatprep.subr.bf16.mxu0 0
  %71 = vmatpush1.bf16.msra.mxu0 0
  %72 = vmatprep.subr.bf16.mxu0 0
  %73 = vmatpush1.bf16.msra.mxu0 0
  %74 = vmatprep.subr.bf16.mxu0 0
  %75 = vmatpush1.bf16.msra.mxu0 0
  %76 = vmatprep.subr.bf16.mxu0 0
  %77 = vmatpush1.bf16.msra.mxu0 0
  %78 = vmatprep.subr.bf16.mxu0 0
  %79 = vmatpush1.bf16.msra.mxu0 0
  %80 = vmatprep.mubr.bf16.mxu0 0
  %81 = vmatmul.mubr.bf16.gmra.mrb[0].mxu0 %v46
  %v82 = vpop.f32.mrb[0].mxu0
  %v83 = vadd.f32 0.0, %v82
  %v84 = vpop.f32.mrb[0].mxu0
  %v85 = vpop.f32.mrb[0].mxu0
  %v86 = vpop.f32.mrb[0].mxu0
  %87 = vdwg.mxu0
  %v88 = vadd.f32 %v30, %v83
  %v89 = vtanh.pop %v88
  %v90 = vpack.c.bf16 %v89, %v89
  %vm91 = vcmask 253952
  %92 = vst.msk [vmem:[%s3] sm:$0x1] %vm91, %v90
  %s93 = scalar_lea.vmem %s0, 1
  %v94 = vld [vmem:[%s93] sm:$0x1]
  %v95 = vunpack.c.l.bf16 %v94
  %v97 = vsel %vm44, %v90, 0
  %99 = vmatprep.subr.bf16.mxu0 0
  %100 = vmatpush1.bf16.msra.mxu0 %v40
  %101 = vmatprep.subr.bf16.mxu0 0
  %102 = vmatpush1.bf16.msra.mxu0 %v41
  %103 = vmatprep.subr.bf16.mxu0 0
  %104 = vmatpush1.bf16.msra.mxu0 0
  %105 = vmatprep.subr.bf16.mxu0 0
  %106 = vmatpush1.bf16.msra.mxu0 0
  %107 = vmatprep.subr.bf16.mxu0 0
  %108 = vmatpush1.bf16.msra.mxu0 0
  %109 = vmatprep.subr.bf16.mxu0 0
  %110 = vmatpush1.bf16.msra.mxu0 0
  %111 = vmatprep.subr.bf16.mxu0 0
  %112 = vmatpush1.bf16.msra.mxu0 0
  %113 = vmatprep.subr.bf16.mxu0 0
  %114 = vmatpush1.bf16.msra.mxu0 0
  %115 = vmatprep.subr.bf16.mxu0 0
  %116 = vmatpush1.bf16.msra.mxu0 0
  %117 = vmatprep.subr.bf16.mxu0 0
  %118 = vmatpush1.bf16.msra.mxu0 0
  %119 = vmatprep.subr.bf16.mxu0 0
  %120 = vmatpush1.bf16.msra.mxu0 0
  %121 = vmatprep.subr.bf16.mxu0 0
  %122 = vmatpush1.bf16.msra.mxu0 0
  %123 = vmatprep.subr.bf16.mxu0 0
  %124 = vmatpush1.bf16.msra.mxu0 0
  %125 = vmatprep.subr.bf16.mxu0 0
  %126 = vmatpush1.bf16.msra.mxu0 0
  %127 = vmatprep.subr.bf16.mxu0 0
  %128 = vmatpush1.bf16.msra.mxu0 0
  %129 = vmatprep.subr.bf16.mxu0 0
  %130 = vmatpush1.bf16.msra.mxu0 0
  %131 = vmatprep.mubr.bf16.mxu0 0
  %132 = vmatmul.mubr.bf16.gmra.mrb[0].mxu0 %v97
  %v133 = vpop.f32.mrb[0].mxu0
  %v134 = vadd.f32 0.0, %v133
  %v135 = vpop.f32.mrb[0].mxu0
  %v136 = vpop.f32.mrb[0].mxu0
  %v137 = vpop.f32.mrb[0].mxu0
  %138 = vdwg.mxu0
  %v139 = vadd.f32 %v95, %v134
  %v140 = vtanh.pop %v139
  %v141 = vpack.c.bf16 %v140, %v140
  %s142 = scalar_lea.vmem %s3, 1
  %143 = vst.msk [vmem:[%s142] sm:$0x1] %vm91, %v141
  %s144 = scalar_lea.vmem %s0, 2
  %v145 = vld [vmem:[%s144] sm:$0x1]
  %v146 = vunpack.c.l.bf16 %v145
  %v148 = vsel %vm44, %v141, 0
  %150 = vmatprep.subr.bf16.mxu0 0
  %151 = vmatpush1.bf16.msra.mxu0 %v40
  %152 = vmatprep.subr.bf16.mxu0 0
  %153 = vmatpush1.bf16.msra.mxu0 %v41
  %154 = vmatprep.subr.bf16.mxu0 0
  %155 = vmatpush1.bf16.msra.mxu0 0
  %156 = vmatprep.subr.bf16.mxu0 0
  %157 = vmatpush1.bf16.msra.mxu0 0
  %158 = vmatprep.subr.bf16.mxu0 0
  %159 = vmatpush1.bf16.msra.mxu0 0
  %160 = vmatprep.subr.bf16.mxu0 0
  %161 = vmatpush1.bf16.msra.mxu0 0
  %162 = vmatprep.subr.bf16.mxu0 0
  %163 = vmatpush1.bf16.msra.mxu0 0
  %164 = vmatprep.subr.bf16.mxu0 0
  %165 = vmatpush1.bf16.msra.mxu0 0
  %166 = vmatprep.subr.bf16.mxu0 0
  %167 = vmatpush1.bf16.msra.mxu0 0
  %168 = vmatprep.subr.bf16.mxu0 0
  %169 = vmatpush1.bf16.msra.mxu0 0
  %170 = vmatprep.subr.bf16.mxu0 0
  %171 = vmatpush1.bf16.msra.mxu0 0
  %172 = vmatprep.subr.bf16.mxu0 0
  %173 = vmatpush1.bf16.msra.mxu0 0
  %174 = vmatprep.subr.bf16.mxu0 0
  %175 = vmatpush1.bf16.msra.mxu0 0
  %176 = vmatprep.subr.bf16.mxu0 0
  %177 = vmatpush1.bf16.msra.mxu0 0
  %178 = vmatprep.subr.bf16.mxu0 0
  %179 = vmatpush1.bf16.msra.mxu0 0
  %180 = vmatprep.subr.bf16.mxu0 0
  %181 = vmatpush1.bf16.msra.mxu0 0
  %182 = vmatprep.mubr.bf16.mxu0 0
  %183 = vmatmul.mubr.bf16.gmra.mrb[0].mxu0 %v148
  %v184 = vpop.f32.mrb[0].mxu0
  %v185 = vadd.f32 0.0, %v184
  %v186 = vpop.f32.mrb[0].mxu0
  %v187 = vpop.f32.mrb[0].mxu0
  %v188 = vpop.f32.mrb[0].mxu0
  %189 = vdwg.mxu0
  %v190 = vadd.f32 %v146, %v185
  %v191 = vtanh.pop %v190
  %v192 = vpack.c.bf16 %v191, %v191
  %s193 = scalar_lea.vmem %s3, 2
  %194 = vst.msk [vmem:[%s193] sm:$0x1] %vm91, %v192
  %s195 = scalar_lea.vmem %s0, 3
  %v196 = vld [vmem:[%s195] sm:$0x1]
  %v197 = vunpack.c.l.bf16 %v196
  %v199 = vsel %vm44, %v192, 0
  %201 = vmatprep.subr.bf16.mxu0 0
  %202 = vmatpush1.bf16.msra.mxu0 %v40
  %203 = vmatprep.subr.bf16.mxu0 0
  %204 = vmatpush1.bf16.msra.mxu0 %v41
  %205 = vmatprep.subr.bf16.mxu0 0
  %206 = vmatpush1.bf16.msra.mxu0 0
  %207 = vmatprep.subr.bf16.mxu0 0
  %208 = vmatpush1.bf16.msra.mxu0 0
  %209 = vmatprep.subr.bf16.mxu0 0
  %210 = vmatpush1.bf16.msra.mxu0 0
  %211 = vmatprep.subr.bf16.mxu0 0
  %212 = vmatpush1.bf16.msra.mxu0 0
  %213 = vmatprep.subr.bf16.mxu0 0
  %214 = vmatpush1.bf16.msra.mxu0 0
  %215 = vmatprep.subr.bf16.mxu0 0
  %216 = vmatpush1.bf16.msra.mxu0 0
  %217 = vmatprep.subr.bf16.mxu0 0
  %218 = vmatpush1.bf16.msra.mxu0 0
  %219 = vmatprep.subr.bf16.mxu0 0
  %220 = vmatpush1.bf16.msra.mxu0 0
  %221 = vmatprep.subr.bf16.mxu0 0
  %222 = vmatpush1.bf16.msra.mxu0 0
  %223 = vmatprep.subr.bf16.mxu0 0
  %224 = vmatpush1.bf16.msra.mxu0 0
  %225 = vmatprep.subr.bf16.mxu0 0
  %226 = vmatpush1.bf16.msra.mxu0 0
  %227 = vmatprep.subr.bf16.mxu0 0
  %228 = vmatpush1.bf16.msra.mxu0 0
  %229 = vmatprep.subr.bf16.mxu0 0
  %230 = vmatpush1.bf16.msra.mxu0 0
  %231 = vmatprep.subr.bf16.mxu0 0
  %232 = vmatpush1.bf16.msra.mxu0 0
  %233 = vmatprep.mubr.bf16.mxu0 0
  %234 = vmatmul.mubr.bf16.gmra.mrb[0].mxu0 %v199
  %v235 = vpop.f32.mrb[0].mxu0
  %v236 = vadd.f32 0.0, %v235
  %v237 = vpop.f32.mrb[0].mxu0
  %v238 = vpop.f32.mrb[0].mxu0
  %v239 = vpop.f32.mrb[0].mxu0
  %240 = vdwg.mxu0
  %v241 = vadd.f32 %v197, %v236
  %v242 = vtanh.pop %v241
  %v243 = vpack.c.bf16 %v242, %v242
  %s244 = scalar_lea.vmem %s3, 3
  %245 = vst.msk [vmem:[%s244] sm:$0x1] %vm91, %v243
  %s246 = scalar_lea.vmem %s0, 4
  %v247 = vld [vmem:[%s246] sm:$0x1]
  %v248 = vunpack.c.l.bf16 %v247
  %v250 = vsel %vm44, %v243, 0
  %252 = vmatprep.subr.bf16.mxu0 0
  %253 = vmatpush1.bf16.msra.mxu0 %v40
  %254 = vmatprep.subr.bf16.mxu0 0
  %255 = vmatpush1.bf16.msra.mxu0 %v41
  %256 = vmatprep.subr.bf16.mxu0 0
  %257 = vmatpush1.bf16.msra.mxu0 0
  %258 = vmatprep.subr.bf16.mxu0 0
  %259 = vmatpush1.bf16.msra.mxu0 0
  %260 = vmatprep.subr.bf16.mxu0 0
  %261 = vmatpush1.bf16.msra.mxu0 0
  %262 = vmatprep.subr.bf16.mxu0 0
  %263 = vmatpush1.bf16.msra.mxu0 0
  %264 = vmatprep.subr.bf16.mxu0 0
  %265 = vmatpush1.bf16.msra.mxu0 0
  %266 = vmatprep.subr.bf16.mxu0 0
  %267 = vmatpush1.bf16.msra.mxu0 0
  %268 = vmatprep.subr.bf16.mxu0 0
  %269 = vmatpush1.bf16.msra.mxu0 0
  %270 = vmatprep.subr.bf16.mxu0 0
  %271 = vmatpush1.bf16.msra.mxu0 0
  %272 = vmatprep.subr.bf16.mxu0 0
  %273 = vmatpush1.bf16.msra.mxu0 0
  %274 = vmatprep.subr.bf16.mxu0 0
  %275 = vmatpush1.bf16.msra.mxu0 0
  %276 = vmatprep.subr.bf16.mxu0 0
  %277 = vmatpush1.bf16.msra.mxu0 0
  %278 = vmatprep.subr.bf16.mxu0 0
  %279 = vmatpush1.bf16.msra.mxu0 0
  %280 = vmatprep.subr.bf16.mxu0 0
  %281 = vmatpush1.bf16.msra.mxu0 0
  %282 = vmatprep.subr.bf16.mxu0 0
  %283 = vmatpush1.bf16.msra.mxu0 0
  %284 = vmatprep.mubr.bf16.mxu0 0
  %285 = vmatmul.mubr.bf16.gmra.mrb[0].mxu0 %v250
  %v286 = vpop.f32.mrb[0].mxu0
  %v287 = vadd.f32 0.0, %v286
  %v288 = vpop.f32.mrb[0].mxu0
  %v289 = vpop.f32.mrb[0].mxu0
  %v290 = vpop.f32.mrb[0].mxu0
  %291 = vdwg.mxu0
  %v292 = vadd.f32 %v248, %v287
  %v293 = vtanh.pop %v292
  %v294 = vpack.c.bf16 %v293, %v293
  %s295 = scalar_lea.vmem %s3, 4
  %296 = vst.msk [vmem:[%s295] sm:$0x1] %vm91, %v294
  %s297 = scalar_lea.vmem %s0, 5
  %v298 = vld [vmem:[%s297] sm:$0x1]
  %v299 = vunpack.c.l.bf16 %v298
  %v301 = vsel %vm44, %v294, 0
  %303 = vmatprep.subr.bf16.mxu0 0
  %304 = vmatpush1.bf16.msra.mxu0 %v40
  %305 = vmatprep.subr.bf16.mxu0 0
  %306 = vmatpush1.bf16.msra.mxu0 %v41
  %307 = vmatprep.subr.bf16.mxu0 0
  %308 = vmatpush1.bf16.msra.mxu0 0
  %309 = vmatprep.subr.bf16.mxu0 0
  %310 = vmatpush1.bf16.msra.mxu0 0
  %311 = vmatprep.subr.bf16.mxu0 0
  %312 = vmatpush1.bf16.msra.mxu0 0
  %313 = vmatprep.subr.bf16.mxu0 0
  %314 = vmatpush1.bf16.msra.mxu0 0
  %315 = vmatprep.subr.bf16.mxu0 0
  %316 = vmatpush1.bf16.msra.mxu0 0
  %317 = vmatprep.subr.bf16.mxu0 0
  %318 = vmatpush1.bf16.msra.mxu0 0
  %319 = vmatprep.subr.bf16.mxu0 0
  %320 = vmatpush1.bf16.msra.mxu0 0
  %321 = vmatprep.subr.bf16.mxu0 0
  %322 = vmatpush1.bf16.msra.mxu0 0
  %323 = vmatprep.subr.bf16.mxu0 0
  %324 = vmatpush1.bf16.msra.mxu0 0
  %325 = vmatprep.subr.bf16.mxu0 0
  %326 = vmatpush1.bf16.msra.mxu0 0
  %327 = vmatprep.subr.bf16.mxu0 0
  %328 = vmatpush1.bf16.msra.mxu0 0
  %329 = vmatprep.subr.bf16.mxu0 0
  %330 = vmatpush1.bf16.msra.mxu0 0
  %331 = vmatprep.subr.bf16.mxu0 0
  %332 = vmatpush1.bf16.msra.mxu0 0
  %333 = vmatprep.subr.bf16.mxu0 0
  %334 = vmatpush1.bf16.msra.mxu0 0
  %335 = vmatprep.mubr.bf16.mxu0 0
  %336 = vmatmul.mubr.bf16.gmra.mrb[0].mxu0 %v301
  %v337 = vpop.f32.mrb[0].mxu0
  %v338 = vadd.f32 0.0, %v337
  %v339 = vpop.f32.mrb[0].mxu0
  %v340 = vpop.f32.mrb[0].mxu0
  %v341 = vpop.f32.mrb[0].mxu0
  %342 = vdwg.mxu0
  %v343 = vadd.f32 %v299, %v338
  %v344 = vtanh.pop %v343
  %v345 = vpack.c.bf16 %v344, %v344
  %s346 = scalar_lea.vmem %s3, 5
  %347 = vst.msk [vmem:[%s346] sm:$0x1] %vm91, %v345
  %s348 = scalar_lea.vmem %s0, 6
  %v349 = vld [vmem:[%s348] sm:$0x1]
  %v350 = vunpack.c.l.bf16 %v349
  %v352 = vsel %vm44, %v345, 0
  %354 = vmatprep.subr.bf16.mxu0 0
  %355 = vmatpush1.bf16.msra.mxu0 %v40
  %356 = vmatprep.subr.bf16.mxu0 0
  %357 = vmatpush1.bf16.msra.mxu0 %v41
  %358 = vmatprep.subr.bf16.mxu0 0
  %359 = vmatpush1.bf16.msra.mxu0 0
  %360 = vmatprep.subr.bf16.mxu0 0
  %361 = vmatpush1.bf16.msra.mxu0 0
  %362 = vmatprep.subr.bf16.mxu0 0
  %363 = vmatpush1.bf16.msra.mxu0 0
  %364 = vmatprep.subr.bf16.mxu0 0
  %365 = vmatpush1.bf16.msra.mxu0 0
  %366 = vmatprep.subr.bf16.mxu0 0
  %367 = vmatpush1.bf16.msra.mxu0 0
  %368 = vmatprep.subr.bf16.mxu0 0
  %369 = vmatpush1.bf16.msra.mxu0 0
  %370 = vmatprep.subr.bf16.mxu0 0
  %371 = vmatpush1.bf16.msra.mxu0 0
  %372 = vmatprep.subr.bf16.mxu0 0
  %373 = vmatpush1.bf16.msra.mxu0 0
  %374 = vmatprep.subr.bf16.mxu0 0
  %375 = vmatpush1.bf16.msra.mxu0 0
  %376 = vmatprep.subr.bf16.mxu0 0
  %377 = vmatpush1.bf16.msra.mxu0 0
  %378 = vmatprep.subr.bf16.mxu0 0
  %379 = vmatpush1.bf16.msra.mxu0 0
  %380 = vmatprep.subr.bf16.mxu0 0
  %381 = vmatpush1.bf16.msra.mxu0 0
  %382 = vmatprep.subr.bf16.mxu0 0
  %383 = vmatpush1.bf16.msra.mxu0 0
  %384 = vmatprep.subr.bf16.mxu0 0
  %385 = vmatpush1.bf16.msra.mxu0 0
  %386 = vmatprep.mubr.bf16.mxu0 0
  %387 = vmatmul.mubr.bf16.gmra.mrb[0].mxu0 %v352
  %v388 = vpop.f32.mrb[0].mxu0
  %v389 = vadd.f32 0.0, %v388
  %v390 = vpop.f32.mrb[0].mxu0
  %v391 = vpop.f32.mrb[0].mxu0
  %v392 = vpop.f32.mrb[0].mxu0
  %393 = vdwg.mxu0
  %v394 = vadd.f32 %v350, %v389
  %v395 = vtanh.pop %v394
  %v396 = vpack.c.bf16 %v395, %v395
  %s397 = scalar_lea.vmem %s3, 6
  %398 = vst.msk [vmem:[%s397] sm:$0x1] %vm91, %v396
  %s399 = scalar_lea.vmem %s0, 7
  %v400 = vld [vmem:[%s399] sm:$0x1]
  %v401 = vunpack.c.l.bf16 %v400
  %v403 = vsel %vm44, %v396, 0
  %405 = vmatprep.subr.bf16.mxu0 0
  %406 = vmatpush1.bf16.msra.mxu0 %v40
  %407 = vmatprep.subr.bf16.mxu0 0
  %408 = vmatpush1.bf16.msra.mxu0 %v41
  %409 = vmatprep.subr.bf16.mxu0 0
  %410 = vmatpush1.bf16.msra.mxu0 0
  %411 = vmatprep.subr.bf16.mxu0 0
  %412 = vmatpush1.bf16.msra.mxu0 0
  %413 = vmatprep.subr.bf16.mxu0 0
  %414 = vmatpush1.bf16.msra.mxu0 0
  %415 = vmatprep.subr.bf16.mxu0 0
  %416 = vmatpush1.bf16.msra.mxu0 0
  %417 = vmatprep.subr.bf16.mxu0 0
  %418 = vmatpush1.bf16.msra.mxu0 0
  %419 = vmatprep.subr.bf16.mxu0 0
  %420 = vmatpush1.bf16.msra.mxu0 0
  %421 = vmatprep.subr.bf16.mxu0 0
  %422 = vmatpush1.bf16.msra.mxu0 0
  %423 = vmatprep.subr.bf16.mxu0 0
  %424 = vmatpush1.bf16.msra.mxu0 0
  %425 = vmatprep.subr.bf16.mxu0 0
  %426 = vmatpush1.bf16.msra.mxu0 0
  %427 = vmatprep.subr.bf16.mxu0 0
  %428 = vmatpush1.bf16.msra.mxu0 0
  %429 = vmatprep.subr.bf16.mxu0 0
  %430 = vmatpush1.bf16.msra.mxu0 0
  %431 = vmatprep.subr.bf16.mxu0 0
  %432 = vmatpush1.bf16.msra.mxu0 0
  %433 = vmatprep.subr.bf16.mxu0 0
  %434 = vmatpush1.bf16.msra.mxu0 0
  %435 = vmatprep.subr.bf16.mxu0 0
  %436 = vmatpush1.bf16.msra.mxu0 0
  %437 = vmatprep.mubr.bf16.mxu0 0
  %438 = vmatmul.mubr.bf16.gmra.mrb[0].mxu0 %v403
  %v439 = vpop.f32.mrb[0].mxu0
  %v440 = vadd.f32 0.0, %v439
  %v441 = vpop.f32.mrb[0].mxu0
  %v442 = vpop.f32.mrb[0].mxu0
  %v443 = vpop.f32.mrb[0].mxu0
  %444 = vdwg.mxu0
  %v445 = vadd.f32 %v401, %v440
  %v446 = vtanh.pop %v445
  %v447 = vpack.c.bf16 %v446, %v446
  %s448 = scalar_lea.vmem %s3, 7
  %449 = vst.msk [vmem:[%s448] sm:$0x1] %vm91, %v447
  %vm450 = vcmask 254976
  %451 = vst.msk [vmem:[#allocation2] sm:$0x3] %vm450, %v446
  // Predicated region
  $region18: #{rnn_model_forward.8} parent=0 // pred_check
    %p452 = pneg %p17
  $region19: #{rnn_model_forward.8} parent=0 // pred_check_branch
    %454 = sbr.rel (%p452) target = $region21
  $region20: #{rnn_model_forward.8} parent=0 // pred_region
    %455 = vst.msk [vmem:[%s4] sm:$0x3] %vm450, %v446
  $region21: #{rnn_model_forward.8} parent=0 // pred_fallthru
    _
  // Predicated region
  $region22: #{rnn_model_forward.8} parent=0 // pred_check
    _
  $region23: #{rnn_model_forward.8} parent=0 // pred_check_branch
    %457 = sbr.rel (0) target = $region25
  $region24: #{rnn_model_forward.8} parent=0 // pred_region
    _
  $region25: #{rnn_model_forward.8} parent=0 // pred_fallthru
    _
  // Predicated region
  $region26: #{rnn_model_forward.8} parent=0 // pred_check
    _
  $region27: #{rnn_model_forward.8} parent=0 // pred_check_branch
    %459 = sbr.rel (0) target = $region29
  $region28: #{rnn_model_forward.8} parent=0 // pred_region
    _
  $region29: #{rnn_model_forward.8} parent=0 // pred_fallthru
    _
  // Predicated region
  $region30: #{rnn_model_forward.8} parent=0 // pred_check
    _
  $region31: #{rnn_model_forward.8} parent=0 // pred_check_branch
    %461 = sbr.rel (0) target = $region33
  $region32: #{rnn_model_forward.8} parent=0 // pred_region
    _
  $region33: #{rnn_model_forward.8} parent=0 // pred_fallthru
    _
  // Predicated region
  $region34: #{rnn_model_forward.8} parent=0 // pred_check
    _
  $region35: #{rnn_model_forward.8} parent=0 // pred_check_branch
    %463 = sbr.rel (0) target = $region37
  $region36: #{rnn_model_forward.8} parent=0 // pred_region
    _
  $region37: #{rnn_model_forward.8} parent=0 // pred_fallthru
    _

// kernel: rnn_model_forward.6
$region0: #{rnn_model_forward.6}
  #allocation0 [shape = 'u32[]', space=smem, size = 0x4, offset = 0x4, fixed_abs, tag = 'smem constant byte address 0x4 - core index']
  #allocation1 [shape = 'u32[144,128]{1,0:T(1,128)}', space=vmem, size = 0x12000, scoped, tag = 'internal scratch']
  #allocation2 [shape = 's32[32]{0}', space=sflag, size = 0x80, scoped, tag = 'scratch operand']
  #allocation3 [shape = 's32[1]{0}', space=sflag, size = 0x4, scoped, tag = 'scoped memory for rnn_model_forward.6']
  #allocation4 [shape = 'u8[512]{0}', space=smem, size = 0x200, scoped, tag = 'prefetched SMEM operand 0']
  #allocation5 [shape = 's32[]', space=sflag, size = 0x4, offset = 0, fixed_abs, tag = 'sflag constant byte address 0x0 - dummy sync flag']
  #allocation6 [shape = 's32[]', space=sflag, size = 0x4, offset = 0, fixed_abs, tag = 'sflag constant byte address 0x0 - dummy sync flag']
  #allocation7 [shape = 's32[]', space=sflag, size = 0x4, offset = 0, fixed_abs, tag = 'sflag constant byte address 0x0 - dummy sync flag']
  #allocation8 [shape = 's32[]', space=sflag, size = 0x4, offset = 0, fixed_abs, tag = 'sflag constant byte address 0x0 - dummy sync flag']
  #allocation9 [shape = 's32[]', space=sflag, size = 0x4, offset = 0, fixed_abs, tag = 'sflag constant byte address 0x0 - dummy sync flag']
  #allocation10 [shape = 's32[]', space=sflag, size = 0x4, offset = 0, fixed_abs, tag = 'sflag constant byte address 0x0 - dummy sync flag']
  #allocation11 [shape = 's32[]', space=sflag, size = 0x4, offset = 0, fixed_abs, tag = 'sflag constant byte address 0x0 - dummy sync flag']
  #allocation12 [shape = 's32[]', space=sflag, size = 0x4, offset = 0, fixed_abs, tag = 'sflag constant byte address 0x0 - dummy sync flag']
  #allocation13 [shape = 's32[]', space=sflag, size = 0x4, offset = 0, fixed_abs, tag = 'sflag constant byte address 0x0 - dummy sync flag']
  #allocation14 [shape = 's32[]', space=sflag, size = 0x4, offset = 0, fixed_abs, tag = 'sflag constant byte address 0x0 - dummy sync flag']
  #allocation15 [shape = 's32[]', space=sflag, size = 0x4, offset = 0, fixed_abs, tag = 'sflag constant byte address 0x0 - dummy sync flag']
  #allocation16 [shape = 's32[]', space=sflag, size = 0x4, offset = 0, fixed_abs, tag = 'sflag constant byte address 0x0 - dummy sync flag']
  #allocation17 [shape = 's32[]', space=sflag, size = 0x4, offset = 0, fixed_abs, tag = 'sflag constant byte address 0x0 - dummy sync flag']
  #allocation18 [shape = 's32[]', space=sflag, size = 0x4, offset = 0, fixed_abs, tag = 'sflag constant byte address 0x0 - dummy sync flag']
  #allocation19 [shape = 's32[]', space=sflag, size = 0x4, offset = 0, fixed_abs, tag = 'sflag constant byte address 0x0 - dummy sync flag']
  #allocation20 [shape = 's32[]', space=sflag, size = 0x4, offset = 0, fixed_abs, tag = 'sflag constant byte address 0x0 - dummy sync flag']
  #allocation21 [shape = 's32[]', space=sflag, size = 0x4, offset = 0, fixed_abs, tag = 'sflag constant byte address 0x0 - dummy sync flag']
  #allocation22 [shape = 's32[]', space=sflag, size = 0x4, offset = 0, fixed_abs, tag = 'sflag constant byte address 0x0 - dummy sync flag']
  #allocation23 [shape = 's32[]', space=sflag, size = 0x4, offset = 0, fixed_abs, tag = 'sflag constant byte address 0x0 - dummy sync flag']
  #allocation24 [shape = 's32[]', space=sflag, size = 0x4, offset = 0, fixed_abs, tag = 'sflag constant byte address 0x0 - dummy sync flag']
  #allocation25 [shape = 's32[]', space=sflag, size = 0x4, offset = 0, fixed_abs, tag = 'sflag constant byte address 0x0 - dummy sync flag']
  #allocation26 [shape = 's32[]', space=sflag, size = 0x4, offset = 0, fixed_abs, tag = 'sflag constant byte address 0x0 - dummy sync flag']
  #allocation27 [shape = 's32[]', space=sflag, size = 0x4, offset = 0, fixed_abs, tag = 'sflag constant byte address 0x0 - dummy sync flag']
  #allocation28 [shape = 's32[]', space=sflag, size = 0x4, offset = 0, fixed_abs, tag = 'sflag constant byte address 0x0 - dummy sync flag']
  #allocation29 [shape = 's32[]', space=sflag, size = 0x4, offset = 0, fixed_abs, tag = 'sflag constant byte address 0x0 - dummy sync flag']
  #allocation30 [shape = 's32[]', space=sflag, size = 0x4, offset = 0, fixed_abs, tag = 'sflag constant byte address 0x0 - dummy sync flag']
  #allocation31 [shape = 's32[]', space=sflag, size = 0x4, offset = 0, fixed_abs, tag = 'sflag constant byte address 0x0 - dummy sync flag']
  #allocation32 [shape = 's32[]', space=sflag, size = 0x4, offset = 0, fixed_abs, tag = 'sflag constant byte address 0x0 - dummy sync flag']
  #allocation33 [shape = 's32[]', space=sflag, size = 0x4, offset = 0, fixed_abs, tag = 'sflag constant byte address 0x0 - dummy sync flag']
  #allocation34 [shape = 's32[]', space=sflag, size = 0x4, offset = 0, fixed_abs, tag = 'sflag constant byte address 0x0 - dummy sync flag']
  #allocation35 [shape = 's32[]', space=sflag, size = 0x4, offset = 0, fixed_abs, tag = 'sflag constant byte address 0x0 - dummy sync flag']
  #allocation36 [shape = 's32[]', space=sflag, size = 0x4, offset = 0, fixed_abs, tag = 'sflag constant byte address 0x0 - dummy sync flag']
  %s0 = inlined_call_operand.vmem [shape: s32[32], index: 0, kind: input, shape index: {}]
  %s1 = inlined_call_operand.vmem [shape: f32[32,128], index: 1, kind: input, shape index: {}]
  %s2 = inlined_call_operand.vmem [shape: f32[32,128], index: 2, kind: output, shape index: {}]
  %s3 = sld [smem:[#allocation0]]
  $region970: #{rnn_model_forward.6} parent=0
    _
  %s5 = ssub.s32 1, %s3
  %s6 = scalar_select 0, %s5, %s3
  %s7 = sshll.u32 %s0, 4
  %s8 = int_to_ptr.vmem [resolvable:$true] %s7
  %10 = dma.vmem_to_smem %s8, 16, [#allocation4], [#allocation3]
  %11 = dma.done [#allocation3], 16
  %12 = sfence
  %s13 = smul.u32 0, 32
  %s14 = sld [smem:[#allocation4 + %s13]]
  %s15 = scalar_lea.vmem %s1, %s14
  %p17 = scmp.lt.u32.totalorder 1, 8
  %p18 = pneg %p17
  // Predicated region
  $region2: #{rnn_model_forward.6} parent=0 // pred_check
    _
  $region3: #{rnn_model_forward.6} parent=0 // pred_check_branch
    %20 = sbr.rel (%p17) target = $region5
  $region4: #{rnn_model_forward.6} parent=0 // pred_region
    %s35 = sand.u32 1, 7
    %p36 = scmp.eq.s32.totalorder %s35, 0
    %p37 = pneg %p36
    // Predicated region
    $region17: #{rnn_model_forward.6} parent=4 // pred_check
      _
    $region18: #{rnn_model_forward.6} parent=4 // pred_check_branch
      %39 = sbr.rel (%p36) target = $region20
    $region19: #{rnn_model_forward.6} parent=4 // pred_region
      %s40 = sand.u32 1, 7
      %s41 = ssub.s32 1, %s40
      %s42 = scalar_lea.vmem %s15, %s41
      %s43 = ssub.s32 1, %s40
      %s44 = scalar_lea.vmem %s2, %s43
      %s45 = sshllo.u32 0, %s40
      loop: start=0, step=1, limit=1
      $region21: #{rnn_model_forward.6} parent=19 // loop_pre_header
        _
      $region22: #{rnn_model_forward.6} parent=19 // loop_header
        %s47 = sphi 0, %s51
        %p48 = scmp.ge.s32.totalorder %s47, 1
        %s52 = sphi %s42, %s42
        %s53 = sphi %s44, %s44
      $region23: #{rnn_model_forward.6} parent=19 // loop_header_branch
        %50 = sbr.rel (%p48) target = $region27
      $region24: #{rnn_model_forward.6} parent=19 // loop_body
        %v54 = vld [vmem:[%s52] sm:%s45]
        %55 = vst [vmem:[%s53] sm:%s45] %v54
      $region25: #{rnn_model_forward.6} parent=19 // loop_footer
        %s51 = sadd.s32 1, %s47
      $region26: #{rnn_model_forward.6} parent=19 // loop_footer_branch
        %46 = sbr.rel target = $region22
      $region27: #{rnn_model_forward.6} parent=19 // loop_exit
        _
    $region20: #{rnn_model_forward.6} parent=4 // pred_fallthru
      _
  $region5: #{rnn_model_forward.6} parent=0 // pred_fallthru
    _
  // Predicated region
  $region6: #{rnn_model_forward.6} parent=0 // pred_check
    %p21 = pneg %p17
  $region7: #{rnn_model_forward.6} parent=0 // pred_check_branch
    %23 = sbr.rel (%p21) target = $region9
  $region8: #{rnn_model_forward.6} parent=0 // pred_region
    %s24 = sshllo.u32 0, 1
    loop: start=0, step=1, limit=1
    $region10: #{rnn_model_forward.6} parent=8 // loop_pre_header
      _
    $region11: #{rnn_model_forward.6} parent=8 // loop_header
      %s26 = sphi 0, %s30
      %p27 = scmp.ge.s32.totalorder %s26, 1
      %s31 = sphi %s15, %s15
      %s32 = sphi %s2, %s2
    $region12: #{rnn_model_forward.6} parent=8 // loop_header_branch
      %29 = sbr.rel (%p27) target = $region16
    $region13: #{rnn_model_forward.6} parent=8 // loop_body
      %v33 = vld [vmem:[%s31] sm:%s24]
      %34 = vst [vmem:[%s32] sm:%s24] %v33
    $region14: #{rnn_model_forward.6} parent=8 // loop_footer
      %s30 = sadd.s32 1, %s26
    $region15: #{rnn_model_forward.6} parent=8 // loop_footer_branch
      %25 = sbr.rel target = $region11
    $region16: #{rnn_model_forward.6} parent=8 // loop_exit
      _
  $region9: #{rnn_model_forward.6} parent=0 // pred_fallthru
    _
  // Predicated region
  $region28: #{rnn_model_forward.6} parent=0 // pred_check
    _
  $region29: #{rnn_model_forward.6} parent=0 // pred_check_branch
    %58 = sbr.rel (0) target = $region31
  $region30: #{rnn_model_forward.6} parent=0 // pred_region
    %59 = vsyncadd [#allocation2], 16
  $region31: #{rnn_model_forward.6} parent=0 // pred_fallthru
    _
  %s60 = sadd.s32 %s13, 1
  %s61 = sld [smem:[#allocation4 + %s60]]
  %s62 = scalar_lea.vmem %s1, %s61
  %s63 = scalar_lea.vmem %s2, 1
  %s64 = scalar_lea.sflag [#allocation2], 1
  %p66 = scmp.lt.u32.totalorder 1, 8
  %p67 = pneg %p66
  // Predicated region
  $region32: #{rnn_model_forward.6} parent=0 // pred_check
    _
  $region33: #{rnn_model_forward.6} parent=0 // pred_check_branch
    %69 = sbr.rel (%p66) target = $region35
  $region34: #{rnn_model_forward.6} parent=0 // pred_region
    %s84 = sand.u32 1, 7
    %p85 = scmp.eq.s32.totalorder %s84, 0
    %p86 = pneg %p85
    // Predicated region
    $region47: #{rnn_model_forward.6} parent=34 // pred_check
      _
    $region48: #{rnn_model_forward.6} parent=34 // pred_check_branch
      %88 = sbr.rel (%p85) target = $region50
    $region49: #{rnn_model_forward.6} parent=34 // pred_region
      %s89 = sand.u32 1, 7
      %s90 = ssub.s32 1, %s89
      %s91 = scalar_lea.vmem %s62, %s90
      %s92 = ssub.s32 1, %s89
      %s93 = scalar_lea.vmem %s63, %s92
      %s94 = sshllo.u32 0, %s89
      loop: start=0, step=1, limit=1
      $region51: #{rnn_model_forward.6} parent=49 // loop_pre_header
        _
      $region52: #{rnn_model_forward.6} parent=49 // loop_header
        %s96 = sphi 0, %s100
        %p97 = scmp.ge.s32.totalorder %s96, 1
        %s101 = sphi %s91, %s91
        %s102 = sphi %s93, %s93
      $region53: #{rnn_model_forward.6} parent=49 // loop_header_branch
        %99 = sbr.rel (%p97) target = $region57
      $region54: #{rnn_model_forward.6} parent=49 // loop_body
        %v103 = vld [vmem:[%s101] sm:%s94]
        %104 = vst [vmem:[%s102] sm:%s94] %v103
      $region55: #{rnn_model_forward.6} parent=49 // loop_footer
        %s100 = sadd.s32 1, %s96
      $region56: #{rnn_model_forward.6} parent=49 // loop_footer_branch
        %95 = sbr.rel target = $region52
      $region57: #{rnn_model_forward.6} parent=49 // loop_exit
        _
    $region50: #{rnn_model_forward.6} parent=34 // pred_fallthru
      _
  $region35: #{rnn_model_forward.6} parent=0 // pred_fallthru
    _
  // Predicated region
  $region36: #{rnn_model_forward.6} parent=0 // pred_check
    %p70 = pneg %p66
  $region37: #{rnn_model_forward.6} parent=0 // pred_check_branch
    %72 = sbr.rel (%p70) target = $region39
  $region38: #{rnn_model_forward.6} parent=0 // pred_region
    %s73 = sshllo.u32 0, 1
    loop: start=0, step=1, limit=1
    $region40: #{rnn_model_forward.6} parent=38 // loop_pre_header
      _
    $region41: #{rnn_model_forward.6} parent=38 // loop_header
      %s75 = sphi 0, %s79
      %p76 = scmp.ge.s32.totalorder %s75, 1
      %s80 = sphi %s62, %s62
      %s81 = sphi %s63, %s63
    $region42: #{rnn_model_forward.6} parent=38 // loop_header_branch
      %78 = sbr.rel (%p76) target = $region46
    $region43: #{rnn_model_forward.6} parent=38 // loop_body
      %v82 = vld [vmem:[%s80] sm:%s73]
      %83 = vst [vmem:[%s81] sm:%s73] %v82
    $region44: #{rnn_model_forward.6} parent=38 // loop_footer
      %s79 = sadd.s32 1, %s75
    $region45: #{rnn_model_forward.6} parent=38 // loop_footer_branch
      %74 = sbr.rel target = $region41
    $region46: #{rnn_model_forward.6} parent=38 // loop_exit
      _
  $region39: #{rnn_model_forward.6} parent=0 // pred_fallthru
    _
  // Predicated region
  $region58: #{rnn_model_forward.6} parent=0 // pred_check
    _
  $region59: #{rnn_model_forward.6} parent=0 // pred_check_branch
    %107 = sbr.rel (0) target = $region61
  $region60: #{rnn_model_forward.6} parent=0 // pred_region
    %108 = vsyncadd %s64, 16
  $region61: #{rnn_model_forward.6} parent=0 // pred_fallthru
    _
  %s109 = sadd.s32 %s13, 2
  %s110 = sld [smem:[#allocation4 + %s109]]
  %s111 = scalar_lea.vmem %s1, %s110
  %s112 = scalar_lea.vmem %s2, 2
  %s113 = scalar_lea.sflag [#allocation2], 2
  %p115 = scmp.lt.u32.totalorder 1, 8
  %p116 = pneg %p115
  // Predicated region
  $region62: #{rnn_model_forward.6} parent=0 // pred_check
    _
  $region63: #{rnn_model_forward.6} parent=0 // pred_check_branch
    %118 = sbr.rel (%p115) target = $region65
  $region64: #{rnn_model_forward.6} parent=0 // pred_region
    %s133 = sand.u32 1, 7
    %p134 = scmp.eq.s32.totalorder %s133, 0
    %p135 = pneg %p134
    // Predicated region
    $region77: #{rnn_model_forward.6} parent=64 // pred_check
      _
    $region78: #{rnn_model_forward.6} parent=64 // pred_check_branch
      %137 = sbr.rel (%p134) target = $region80
    $region79: #{rnn_model_forward.6} parent=64 // pred_region
      %s138 = sand.u32 1, 7
      %s139 = ssub.s32 1, %s138
      %s140 = scalar_lea.vmem %s111, %s139
      %s141 = ssub.s32 1, %s138
      %s142 = scalar_lea.vmem %s112, %s141
      %s143 = sshllo.u32 0, %s138
      loop: start=0, step=1, limit=1
      $region81: #{rnn_model_forward.6} parent=79 // loop_pre_header
        _
      $region82: #{rnn_model_forward.6} parent=79 // loop_header
        %s145 = sphi 0, %s149
        %p146 = scmp.ge.s32.totalorder %s145, 1
        %s150 = sphi %s140, %s140
        %s151 = sphi %s142, %s142
      $region83: #{rnn_model_forward.6} parent=79 // loop_header_branch
        %148 = sbr.rel (%p146) target = $region87
      $region84: #{rnn_model_forward.6} parent=79 // loop_body
        %v152 = vld [vmem:[%s150] sm:%s143]
        %153 = vst [vmem:[%s151] sm:%s143] %v152
      $region85: #{rnn_model_forward.6} parent=79 // loop_footer
        %s149 = sadd.s32 1, %s145
      $region86: #{rnn_model_forward.6} parent=79 // loop_footer_branch
        %144 = sbr.rel target = $region82
      $region87: #{rnn_model_forward.6} parent=79 // loop_exit
        _
    $region80: #{rnn_model_forward.6} parent=64 // pred_fallthru
      _
  $region65: #{rnn_model_forward.6} parent=0 // pred_fallthru
    _
  // Predicated region
  $region66: #{rnn_model_forward.6} parent=0 // pred_check
    %p119 = pneg %p115
  $region67: #{rnn_model_forward.6} parent=0 // pred_check_branch
    %121 = sbr.rel (%p119) target = $region69
  $region68: #{rnn_model_forward.6} parent=0 // pred_region
    %s122 = sshllo.u32 0, 1
    loop: start=0, step=1, limit=1
    $region70: #{rnn_model_forward.6} parent=68 // loop_pre_header
      _
    $region71: #{rnn_model_forward.6} parent=68 // loop_header
      %s124 = sphi 0, %s128
      %p125 = scmp.ge.s32.totalorder %s124, 1
      %s129 = sphi %s111, %s111
      %s130 = sphi %s112, %s112
    $region72: #{rnn_model_forward.6} parent=68 // loop_header_branch
      %127 = sbr.rel (%p125) target = $region76
    $region73: #{rnn_model_forward.6} parent=68 // loop_body
      %v131 = vld [vmem:[%s129] sm:%s122]
      %132 = vst [vmem:[%s130] sm:%s122] %v131
    $region74: #{rnn_model_forward.6} parent=68 // loop_footer
      %s128 = sadd.s32 1, %s124
    $region75: #{rnn_model_forward.6} parent=68 // loop_footer_branch
      %123 = sbr.rel target = $region71
    $region76: #{rnn_model_forward.6} parent=68 // loop_exit
      _
  $region69: #{rnn_model_forward.6} parent=0 // pred_fallthru
    _
  // Predicated region
  $region88: #{rnn_model_forward.6} parent=0 // pred_check
    _
  $region89: #{rnn_model_forward.6} parent=0 // pred_check_branch
    %156 = sbr.rel (0) target = $region91
  $region90: #{rnn_model_forward.6} parent=0 // pred_region
    %157 = vsyncadd %s113, 16
  $region91: #{rnn_model_forward.6} parent=0 // pred_fallthru
    _
  %s158 = sadd.s32 %s13, 3
  %s159 = sld [smem:[#allocation4 + %s158]]
  %s160 = scalar_lea.vmem %s1, %s159
  %s161 = scalar_lea.vmem %s2, 3
  %s162 = scalar_lea.sflag [#allocation2], 3
  %p164 = scmp.lt.u32.totalorder 1, 8
  %p165 = pneg %p164
  // Predicated region
  $region92: #{rnn_model_forward.6} parent=0 // pred_check
    _
  $region93: #{rnn_model_forward.6} parent=0 // pred_check_branch
    %167 = sbr.rel (%p164) target = $region95
  $region94: #{rnn_model_forward.6} parent=0 // pred_region
    %s182 = sand.u32 1, 7
    %p183 = scmp.eq.s32.totalorder %s182, 0
    %p184 = pneg %p183
    // Predicated region
    $region107: #{rnn_model_forward.6} parent=94 // pred_check
      _
    $region108: #{rnn_model_forward.6} parent=94 // pred_check_branch
      %186 = sbr.rel (%p183) target = $region110
    $region109: #{rnn_model_forward.6} parent=94 // pred_region
      %s187 = sand.u32 1, 7
      %s188 = ssub.s32 1, %s187
      %s189 = scalar_lea.vmem %s160, %s188
      %s190 = ssub.s32 1, %s187
      %s191 = scalar_lea.vmem %s161, %s190
      %s192 = sshllo.u32 0, %s187
      loop: start=0, step=1, limit=1
      $region111: #{rnn_model_forward.6} parent=109 // loop_pre_header
        _
      $region112: #{rnn_model_forward.6} parent=109 // loop_header
        %s194 = sphi 0, %s198
        %p195 = scmp.ge.s32.totalorder %s194, 1
        %s199 = sphi %s189, %s189
        %s200 = sphi %s191, %s191
      $region113: #{rnn_model_forward.6} parent=109 // loop_header_branch
        %197 = sbr.rel (%p195) target = $region117
      $region114: #{rnn_model_forward.6} parent=109 // loop_body
        %v201 = vld [vmem:[%s199] sm:%s192]
        %202 = vst [vmem:[%s200] sm:%s192] %v201
      $region115: #{rnn_model_forward.6} parent=109 // loop_footer
        %s198 = sadd.s32 1, %s194
      $region116: #{rnn_model_forward.6} parent=109 // loop_footer_branch
        %193 = sbr.rel target = $region112
      $region117: #{rnn_model_forward.6} parent=109 // loop_exit
        _
    $region110: #{rnn_model_forward.6} parent=94 // pred_fallthru
      _
  $region95: #{rnn_model_forward.6} parent=0 // pred_fallthru
    _
  // Predicated region
  $region96: #{rnn_model_forward.6} parent=0 // pred_check
    %p168 = pneg %p164
  $region97: #{rnn_model_forward.6} parent=0 // pred_check_branch
    %170 = sbr.rel (%p168) target = $region99
  $region98: #{rnn_model_forward.6} parent=0 // pred_region
    %s171 = sshllo.u32 0, 1
    loop: start=0, step=1, limit=1
    $region100: #{rnn_model_forward.6} parent=98 // loop_pre_header
      _
    $region101: #{rnn_model_forward.6} parent=98 // loop_header
      %s173 = sphi 0, %s177
      %p174 = scmp.ge.s32.totalorder %s173, 1
      %s178 = sphi %s160, %s160
      %s179 = sphi %s161, %s161
    $region102: #{rnn_model_forward.6} parent=98 // loop_header_branch
      %176 = sbr.rel (%p174) target = $region106
    $region103: #{rnn_model_forward.6} parent=98 // loop_body
      %v180 = vld [vmem:[%s178] sm:%s171]
      %181 = vst [vmem:[%s179] sm:%s171] %v180
    $region104: #{rnn_model_forward.6} parent=98 // loop_footer
      %s177 = sadd.s32 1, %s173
    $region105: #{rnn_model_forward.6} parent=98 // loop_footer_branch
      %172 = sbr.rel target = $region101
    $region106: #{rnn_model_forward.6} parent=98 // loop_exit
      _
  $region99: #{rnn_model_forward.6} parent=0 // pred_fallthru
    _
  // Predicated region
  $region118: #{rnn_model_forward.6} parent=0 // pred_check
    _
  $region119: #{rnn_model_forward.6} parent=0 // pred_check_branch
    %205 = sbr.rel (0) target = $region121
  $region120: #{rnn_model_forward.6} parent=0 // pred_region
    %206 = vsyncadd %s162, 16
  $region121: #{rnn_model_forward.6} parent=0 // pred_fallthru
    _
  %s207 = sadd.s32 %s13, 4
  %s208 = sld [smem:[#allocation4 + %s207]]
  %s209 = scalar_lea.vmem %s1, %s208
  %s210 = scalar_lea.vmem %s2, 4
  %s211 = scalar_lea.sflag [#allocation2], 4
  %p213 = scmp.lt.u32.totalorder 1, 8
  %p214 = pneg %p213
  // Predicated region
  $region122: #{rnn_model_forward.6} parent=0 // pred_check
    _
  $region123: #{rnn_model_forward.6} parent=0 // pred_check_branch
    %216 = sbr.rel (%p213) target = $region125
  $region124: #{rnn_model_forward.6} parent=0 // pred_region
    %s231 = sand.u32 1, 7
    %p232 = scmp.eq.s32.totalorder %s231, 0
    %p233 = pneg %p232
    // Predicated region
    $region137: #{rnn_model_forward.6} parent=124 // pred_check
      _
    $region138: #{rnn_model_forward.6} parent=124 // pred_check_branch
      %235 = sbr.rel (%p232) target = $region140
    $region139: #{rnn_model_forward.6} parent=124 // pred_region
      %s236 = sand.u32 1, 7
      %s237 = ssub.s32 1, %s236
      %s238 = scalar_lea.vmem %s209, %s237
      %s239 = ssub.s32 1, %s236
      %s240 = scalar_lea.vmem %s210, %s239
      %s241 = sshllo.u32 0, %s236
      loop: start=0, step=1, limit=1
      $region141: #{rnn_model_forward.6} parent=139 // loop_pre_header
        _
      $region142: #{rnn_model_forward.6} parent=139 // loop_header
        %s243 = sphi 0, %s247
        %p244 = scmp.ge.s32.totalorder %s243, 1
        %s248 = sphi %s238, %s238
        %s249 = sphi %s240, %s240
      $region143: #{rnn_model_forward.6} parent=139 // loop_header_branch
        %246 = sbr.rel (%p244) target = $region147
      $region144: #{rnn_model_forward.6} parent=139 // loop_body
        %v250 = vld [vmem:[%s248] sm:%s241]
        %251 = vst [vmem:[%s249] sm:%s241] %v250
      $region145: #{rnn_model_forward.6} parent=139 // loop_footer
        %s247 = sadd.s32 1, %s243
      $region146: #{rnn_model_forward.6} parent=139 // loop_footer_branch
        %242 = sbr.rel target = $region142
      $region147: #{rnn_model_forward.6} parent=139 // loop_exit
        _
    $region140: #{rnn_model_forward.6} parent=124 // pred_fallthru
      _
  $region125: #{rnn_model_forward.6} parent=0 // pred_fallthru
    _
  // Predicated region
  $region126: #{rnn_model_forward.6} parent=0 // pred_check
    %p217 = pneg %p213
  $region127: #{rnn_model_forward.6} parent=0 // pred_check_branch
    %219 = sbr.rel (%p217) target = $region129
  $region128: #{rnn_model_forward.6} parent=0 // pred_region
    %s220 = sshllo.u32 0, 1
    loop: start=0, step=1, limit=1
    $region130: #{rnn_model_forward.6} parent=128 // loop_pre_header
      _
    $region131: #{rnn_model_forward.6} parent=128 // loop_header
      %s222 = sphi 0, %s226
      %p223 = scmp.ge.s32.totalorder %s222, 1
      %s227 = sphi %s209, %s209
      %s228 = sphi %s210, %s210
    $region132: #{rnn_model_forward.6} parent=128 // loop_header_branch
      %225 = sbr.rel (%p223) target = $region136
    $region133: #{rnn_model_forward.6} parent=128 // loop_body
      %v229 = vld [vmem:[%s227] sm:%s220]
      %230 = vst [vmem:[%s228] sm:%s220] %v229
    $region134: #{rnn_model_forward.6} parent=128 // loop_footer
      %s226 = sadd.s32 1, %s222
    $region135: #{rnn_model_forward.6} parent=128 // loop_footer_branch
      %221 = sbr.rel target = $region131
    $region136: #{rnn_model_forward.6} parent=128 // loop_exit
      _
  $region129: #{rnn_model_forward.6} parent=0 // pred_fallthru
    _
  // Predicated region
  $region148: #{rnn_model_forward.6} parent=0 // pred_check
    _
  $region149: #{rnn_model_forward.6} parent=0 // pred_check_branch
    %254 = sbr.rel (0) target = $region151
  $region150: #{rnn_model_forward.6} parent=0 // pred_region
    %255 = vsyncadd %s211, 16
  $region151: #{rnn_model_forward.6} parent=0 // pred_fallthru
    _
  %s256 = sadd.s32 %s13, 5
  %s257 = sld [smem:[#allocation4 + %s256]]
  %s258 = scalar_lea.vmem %s1, %s257
  %s259 = scalar_lea.vmem %s2, 5
  %s260 = scalar_lea.sflag [#allocation2], 5
  %p262 = scmp.lt.u32.totalorder 1, 8
  %p263 = pneg %p262
  // Predicated region
  $region152: #{rnn_model_forward.6} parent=0 // pred_check
    _
  $region153: #{rnn_model_forward.6} parent=0 // pred_check_branch
    %265 = sbr.rel (%p262) target = $region155
  $region154: #{rnn_model_forward.6} parent=0 // pred_region
    %s280 = sand.u32 1, 7
    %p281 = scmp.eq.s32.totalorder %s280, 0
    %p282 = pneg %p281
    // Predicated region
    $region167: #{rnn_model_forward.6} parent=154 // pred_check
      _
    $region168: #{rnn_model_forward.6} parent=154 // pred_check_branch
      %284 = sbr.rel (%p281) target = $region170
    $region169: #{rnn_model_forward.6} parent=154 // pred_region
      %s285 = sand.u32 1, 7
      %s286 = ssub.s32 1, %s285
      %s287 = scalar_lea.vmem %s258, %s286
      %s288 = ssub.s32 1, %s285
      %s289 = scalar_lea.vmem %s259, %s288
      %s290 = sshllo.u32 0, %s285
      loop: start=0, step=1, limit=1
      $region171: #{rnn_model_forward.6} parent=169 // loop_pre_header
        _
      $region172: #{rnn_model_forward.6} parent=169 // loop_header
        %s292 = sphi 0, %s296
        %p293 = scmp.ge.s32.totalorder %s292, 1
        %s297 = sphi %s287, %s287
        %s298 = sphi %s289, %s289
      $region173: #{rnn_model_forward.6} parent=169 // loop_header_branch
        %295 = sbr.rel (%p293) target = $region177
      $region174: #{rnn_model_forward.6} parent=169 // loop_body
        %v299 = vld [vmem:[%s297] sm:%s290]
        %300 = vst [vmem:[%s298] sm:%s290] %v299
      $region175: #{rnn_model_forward.6} parent=169 // loop_footer
        %s296 = sadd.s32 1, %s292
      $region176: #{rnn_model_forward.6} parent=169 // loop_footer_branch
        %291 = sbr.rel target = $region172
      $region177: #{rnn_model_forward.6} parent=169 // loop_exit
        _
    $region170: #{rnn_model_forward.6} parent=154 // pred_fallthru
      _
  $region155: #{rnn_model_forward.6} parent=0 // pred_fallthru
    _
  // Predicated region
  $region156: #{rnn_model_forward.6} parent=0 // pred_check
    %p266 = pneg %p262
  $region157: #{rnn_model_forward.6} parent=0 // pred_check_branch
    %268 = sbr.rel (%p266) target = $region159
  $region158: #{rnn_model_forward.6} parent=0 // pred_region
    %s269 = sshllo.u32 0, 1
    loop: start=0, step=1, limit=1
    $region160: #{rnn_model_forward.6} parent=158 // loop_pre_header
      _
    $region161: #{rnn_model_forward.6} parent=158 // loop_header
      %s271 = sphi 0, %s275
      %p272 = scmp.ge.s32.totalorder %s271, 1
      %s276 = sphi %s258, %s258
      %s277 = sphi %s259, %s259
    $region162: #{rnn_model_forward.6} parent=158 // loop_header_branch
      %274 = sbr.rel (%p272) target = $region166
    $region163: #{rnn_model_forward.6} parent=158 // loop_body
      %v278 = vld [vmem:[%s276] sm:%s269]
      %279 = vst [vmem:[%s277] sm:%s269] %v278
    $region164: #{rnn_model_forward.6} parent=158 // loop_footer
      %s275 = sadd.s32 1, %s271
    $region165: #{rnn_model_forward.6} parent=158 // loop_footer_branch
      %270 = sbr.rel target = $region161
    $region166: #{rnn_model_forward.6} parent=158 // loop_exit
      _
  $region159: #{rnn_model_forward.6} parent=0 // pred_fallthru
    _
  // Predicated region
  $region178: #{rnn_model_forward.6} parent=0 // pred_check
    _
  $region179: #{rnn_model_forward.6} parent=0 // pred_check_branch
    %303 = sbr.rel (0) target = $region181
  $region180: #{rnn_model_forward.6} parent=0 // pred_region
    %304 = vsyncadd %s260, 16
  $region181: #{rnn_model_forward.6} parent=0 // pred_fallthru
    _
  %s305 = sadd.s32 %s13, 6
  %s306 = sld [smem:[#allocation4 + %s305]]
  %s307 = scalar_lea.vmem %s1, %s306
  %s308 = scalar_lea.vmem %s2, 6
  %s309 = scalar_lea.sflag [#allocation2], 6
  %p311 = scmp.lt.u32.totalorder 1, 8
  %p312 = pneg %p311
  // Predicated region
  $region182: #{rnn_model_forward.6} parent=0 // pred_check
    _
  $region183: #{rnn_model_forward.6} parent=0 // pred_check_branch
    %314 = sbr.rel (%p311) target = $region185
  $region184: #{rnn_model_forward.6} parent=0 // pred_region
    %s329 = sand.u32 1, 7
    %p330 = scmp.eq.s32.totalorder %s329, 0
    %p331 = pneg %p330
    // Predicated region
    $region197: #{rnn_model_forward.6} parent=184 // pred_check
      _
    $region198: #{rnn_model_forward.6} parent=184 // pred_check_branch
      %333 = sbr.rel (%p330) target = $region200
    $region199: #{rnn_model_forward.6} parent=184 // pred_region
      %s334 = sand.u32 1, 7
      %s335 = ssub.s32 1, %s334
      %s336 = scalar_lea.vmem %s307, %s335
      %s337 = ssub.s32 1, %s334
      %s338 = scalar_lea.vmem %s308, %s337
      %s339 = sshllo.u32 0, %s334
      loop: start=0, step=1, limit=1
      $region201: #{rnn_model_forward.6} parent=199 // loop_pre_header
        _
      $region202: #{rnn_model_forward.6} parent=199 // loop_header
        %s341 = sphi 0, %s345
        %p342 = scmp.ge.s32.totalorder %s341, 1
        %s346 = sphi %s336, %s336
        %s347 = sphi %s338, %s338
      $region203: #{rnn_model_forward.6} parent=199 // loop_header_branch
        %344 = sbr.rel (%p342) target = $region207
      $region204: #{rnn_model_forward.6} parent=199 // loop_body
        %v348 = vld [vmem:[%s346] sm:%s339]
        %349 = vst [vmem:[%s347] sm:%s339] %v348
      $region205: #{rnn_model_forward.6} parent=199 // loop_footer
        %s345 = sadd.s32 1, %s341
      $region206: #{rnn_model_forward.6} parent=199 // loop_footer_branch
        %340 = sbr.rel target = $region202
      $region207: #{rnn_model_forward.6} parent=199 // loop_exit
        _
    $region200: #{rnn_model_forward.6} parent=184 // pred_fallthru
      _
  $region185: #{rnn_model_forward.6} parent=0 // pred_fallthru
    _
  // Predicated region
  $region186: #{rnn_model_forward.6} parent=0 // pred_check
    %p315 = pneg %p311
  $region187: #{rnn_model_forward.6} parent=0 // pred_check_branch
    %317 = sbr.rel (%p315) target = $region189
  $region188: #{rnn_model_forward.6} parent=0 // pred_region
    %s318 = sshllo.u32 0, 1
    loop: start=0, step=1, limit=1
    $region190: #{rnn_model_forward.6} parent=188 // loop_pre_header
      _
    $region191: #{rnn_model_forward.6} parent=188 // loop_header
      %s320 = sphi 0, %s324
      %p321 = scmp.ge.s32.totalorder %s320, 1
      %s325 = sphi %s307, %s307
      %s326 = sphi %s308, %s308
    $region192: #{rnn_model_forward.6} parent=188 // loop_header_branch
      %323 = sbr.rel (%p321) target = $region196
    $region193: #{rnn_model_forward.6} parent=188 // loop_body
      %v327 = vld [vmem:[%s325] sm:%s318]
      %328 = vst [vmem:[%s326] sm:%s318] %v327
    $region194: #{rnn_model_forward.6} parent=188 // loop_footer
      %s324 = sadd.s32 1, %s320
    $region195: #{rnn_model_forward.6} parent=188 // loop_footer_branch
      %319 = sbr.rel target = $region191
    $region196: #{rnn_model_forward.6} parent=188 // loop_exit
      _
  $region189: #{rnn_model_forward.6} parent=0 // pred_fallthru
    _
  // Predicated region
  $region208: #{rnn_model_forward.6} parent=0 // pred_check
    _
  $region209: #{rnn_model_forward.6} parent=0 // pred_check_branch
    %352 = sbr.rel (0) target = $region211
  $region210: #{rnn_model_forward.6} parent=0 // pred_region
    %353 = vsyncadd %s309, 16
  $region211: #{rnn_model_forward.6} parent=0 // pred_fallthru
    _
  %s354 = sadd.s32 %s13, 7
  %s355 = sld [smem:[#allocation4 + %s354]]
  %s356 = scalar_lea.vmem %s1, %s355
  %s357 = scalar_lea.vmem %s2, 7
  %s358 = scalar_lea.sflag [#allocation2], 7
  %p360 = scmp.lt.u32.totalorder 1, 8
  %p361 = pneg %p360
  // Predicated region
  $region212: #{rnn_model_forward.6} parent=0 // pred_check
    _
  $region213: #{rnn_model_forward.6} parent=0 // pred_check_branch
    %363 = sbr.rel (%p360) target = $region215
  $region214: #{rnn_model_forward.6} parent=0 // pred_region
    %s378 = sand.u32 1, 7
    %p379 = scmp.eq.s32.totalorder %s378, 0
    %p380 = pneg %p379
    // Predicated region
    $region227: #{rnn_model_forward.6} parent=214 // pred_check
      _
    $region228: #{rnn_model_forward.6} parent=214 // pred_check_branch
      %382 = sbr.rel (%p379) target = $region230
    $region229: #{rnn_model_forward.6} parent=214 // pred_region
      %s383 = sand.u32 1, 7
      %s384 = ssub.s32 1, %s383
      %s385 = scalar_lea.vmem %s356, %s384
      %s386 = ssub.s32 1, %s383
      %s387 = scalar_lea.vmem %s357, %s386
      %s388 = sshllo.u32 0, %s383
      loop: start=0, step=1, limit=1
      $region231: #{rnn_model_forward.6} parent=229 // loop_pre_header
        _
      $region232: #{rnn_model_forward.6} parent=229 // loop_header
        %s390 = sphi 0, %s394
        %p391 = scmp.ge.s32.totalorder %s390, 1
        %s395 = sphi %s385, %s385
        %s396 = sphi %s387, %s387
      $region233: #{rnn_model_forward.6} parent=229 // loop_header_branch
        %393 = sbr.rel (%p391) target = $region237
      $region234: #{rnn_model_forward.6} parent=229 // loop_body
        %v397 = vld [vmem:[%s395] sm:%s388]
        %398 = vst [vmem:[%s396] sm:%s388] %v397
      $region235: #{rnn_model_forward.6} parent=229 // loop_footer
        %s394 = sadd.s32 1, %s390
      $region236: #{rnn_model_forward.6} parent=229 // loop_footer_branch
        %389 = sbr.rel target = $region232
      $region237: #{rnn_model_forward.6} parent=229 // loop_exit
        _
    $region230: #{rnn_model_forward.6} parent=214 // pred_fallthru
      _
  $region215: #{rnn_model_forward.6} parent=0 // pred_fallthru
    _
  // Predicated region
  $region216: #{rnn_model_forward.6} parent=0 // pred_check
    %p364 = pneg %p360
  $region217: #{rnn_model_forward.6} parent=0 // pred_check_branch
    %366 = sbr.rel (%p364) target = $region219
  $region218: #{rnn_model_forward.6} parent=0 // pred_region
    %s367 = sshllo.u32 0, 1
    loop: start=0, step=1, limit=1
    $region220: #{rnn_model_forward.6} parent=218 // loop_pre_header
      _
    $region221: #{rnn_model_forward.6} parent=218 // loop_header
      %s369 = sphi 0, %s373
      %p370 = scmp.ge.s32.totalorder %s369, 1
      %s374 = sphi %s356, %s356
      %s375 = sphi %s357, %s357
    $region222: #{rnn_model_forward.6} parent=218 // loop_header_branch
      %372 = sbr.rel (%p370) target = $region226
    $region223: #{rnn_model_forward.6} parent=218 // loop_body
      %v376 = vld [vmem:[%s374] sm:%s367]
      %377 = vst [vmem:[%s375] sm:%s367] %v376
    $region224: #{rnn_model_forward.6} parent=218 // loop_footer
      %s373 = sadd.s32 1, %s369
    $region225: #{rnn_model_forward.6} parent=218 // loop_footer_branch
      %368 = sbr.rel target = $region221
    $region226: #{rnn_model_forward.6} parent=218 // loop_exit
      _
  $region219: #{rnn_model_forward.6} parent=0 // pred_fallthru
    _
  // Predicated region
  $region238: #{rnn_model_forward.6} parent=0 // pred_check
    _
  $region239: #{rnn_model_forward.6} parent=0 // pred_check_branch
    %401 = sbr.rel (0) target = $region241
  $region240: #{rnn_model_forward.6} parent=0 // pred_region
    %402 = vsyncadd %s358, 16
  $region241: #{rnn_model_forward.6} parent=0 // pred_fallthru
    _
  %s403 = sadd.s32 %s13, 8
  %s404 = sld [smem:[#allocation4 + %s403]]
  %s405 = scalar_lea.vmem %s1, %s404
  %s406 = scalar_lea.vmem %s2, 8
  %s407 = scalar_lea.sflag [#allocation2], 8
  %p409 = scmp.lt.u32.totalorder 1, 8
  %p410 = pneg %p409
  // Predicated region
  $region242: #{rnn_model_forward.6} parent=0 // pred_check
    _
  $region243: #{rnn_model_forward.6} parent=0 // pred_check_branch
    %412 = sbr.rel (%p409) target = $region245
  $region244: #{rnn_model_forward.6} parent=0 // pred_region
    %s427 = sand.u32 1, 7
    %p428 = scmp.eq.s32.totalorder %s427, 0
    %p429 = pneg %p428
    // Predicated region
    $region257: #{rnn_model_forward.6} parent=244 // pred_check
      _
    $region258: #{rnn_model_forward.6} parent=244 // pred_check_branch
      %431 = sbr.rel (%p428) target = $region260
    $region259: #{rnn_model_forward.6} parent=244 // pred_region
      %s432 = sand.u32 1, 7
      %s433 = ssub.s32 1, %s432
      %s434 = scalar_lea.vmem %s405, %s433
      %s435 = ssub.s32 1, %s432
      %s436 = scalar_lea.vmem %s406, %s435
      %s437 = sshllo.u32 0, %s432
      loop: start=0, step=1, limit=1
      $region261: #{rnn_model_forward.6} parent=259 // loop_pre_header
        _
      $region262: #{rnn_model_forward.6} parent=259 // loop_header
        %s439 = sphi 0, %s443
        %p440 = scmp.ge.s32.totalorder %s439, 1
        %s444 = sphi %s434, %s434
        %s445 = sphi %s436, %s436
      $region263: #{rnn_model_forward.6} parent=259 // loop_header_branch
        %442 = sbr.rel (%p440) target = $region267
      $region264: #{rnn_model_forward.6} parent=259 // loop_body
        %v446 = vld [vmem:[%s444] sm:%s437]
        %447 = vst [vmem:[%s445] sm:%s437] %v446
      $region265: #{rnn_model_forward.6} parent=259 // loop_footer
        %s443 = sadd.s32 1, %s439
      $region266: #{rnn_model_forward.6} parent=259 // loop_footer_branch
        %438 = sbr.rel target = $region262
      $region267: #{rnn_model_forward.6} parent=259 // loop_exit
        _
    $region260: #{rnn_model_forward.6} parent=244 // pred_fallthru
      _
  $region245: #{rnn_model_forward.6} parent=0 // pred_fallthru
    _
  // Predicated region
  $region246: #{rnn_model_forward.6} parent=0 // pred_check
    %p413 = pneg %p409
  $region247: #{rnn_model_forward.6} parent=0 // pred_check_branch
    %415 = sbr.rel (%p413) target = $region249
  $region248: #{rnn_model_forward.6} parent=0 // pred_region
    %s416 = sshllo.u32 0, 1
    loop: start=0, step=1, limit=1
    $region250: #{rnn_model_forward.6} parent=248 // loop_pre_header
      _
    $region251: #{rnn_model_forward.6} parent=248 // loop_header
      %s418 = sphi 0, %s422
      %p419 = scmp.ge.s32.totalorder %s418, 1
      %s423 = sphi %s405, %s405
      %s424 = sphi %s406, %s406
    $region252: #{rnn_model_forward.6} parent=248 // loop_header_branch
      %421 = sbr.rel (%p419) target = $region256
    $region253: #{rnn_model_forward.6} parent=248 // loop_body
      %v425 = vld [vmem:[%s423] sm:%s416]
      %426 = vst [vmem:[%s424] sm:%s416] %v425
    $region254: #{rnn_model_forward.6} parent=248 // loop_footer
      %s422 = sadd.s32 1, %s418
    $region255: #{rnn_model_forward.6} parent=248 // loop_footer_branch
      %417 = sbr.rel target = $region251
    $region256: #{rnn_model_forward.6} parent=248 // loop_exit
      _
  $region249: #{rnn_model_forward.6} parent=0 // pred_fallthru
    _
  // Predicated region
  $region268: #{rnn_model_forward.6} parent=0 // pred_check
    _
  $region269: #{rnn_model_forward.6} parent=0 // pred_check_branch
    %450 = sbr.rel (0) target = $region271
  $region270: #{rnn_model_forward.6} parent=0 // pred_region
    %451 = vsyncadd %s407, 16
  $region271: #{rnn_model_forward.6} parent=0 // pred_fallthru
    _
  %s452 = sadd.s32 %s13, 9
  %s453 = sld [smem:[#allocation4 + %s452]]
  %s454 = scalar_lea.vmem %s1, %s453
  %s455 = scalar_lea.vmem %s2, 9
  %s456 = scalar_lea.sflag [#allocation2], 9
  %p458 = scmp.lt.u32.totalorder 1, 8
  %p459 = pneg %p458
  // Predicated region
  $region272: #{rnn_model_forward.6} parent=0 // pred_check
    _
  $region273: #{rnn_model_forward.6} parent=0 // pred_check_branch
    %461 = sbr.rel (%p458) target = $region275
  $region274: #{rnn_model_forward.6} parent=0 // pred_region
    %s476 = sand.u32 1, 7
    %p477 = scmp.eq.s32.totalorder %s476, 0
    %p478 = pneg %p477
    // Predicated region
    $region287: #{rnn_model_forward.6} parent=274 // pred_check
      _
    $region288: #{rnn_model_forward.6} parent=274 // pred_check_branch
      %480 = sbr.rel (%p477) target = $region290
    $region289: #{rnn_model_forward.6} parent=274 // pred_region
      %s481 = sand.u32 1, 7
      %s482 = ssub.s32 1, %s481
      %s483 = scalar_lea.vmem %s454, %s482
      %s484 = ssub.s32 1, %s481
      %s485 = scalar_lea.vmem %s455, %s484
      %s486 = sshllo.u32 0, %s481
      loop: start=0, step=1, limit=1
      $region291: #{rnn_model_forward.6} parent=289 // loop_pre_header
        _
      $region292: #{rnn_model_forward.6} parent=289 // loop_header
        %s488 = sphi 0, %s492
        %p489 = scmp.ge.s32.totalorder %s488, 1
        %s493 = sphi %s483, %s483
        %s494 = sphi %s485, %s485
      $region293: #{rnn_model_forward.6} parent=289 // loop_header_branch
        %491 = sbr.rel (%p489) target = $region297
      $region294: #{rnn_model_forward.6} parent=289 // loop_body
        %v495 = vld [vmem:[%s493] sm:%s486]
        %496 = vst [vmem:[%s494] sm:%s486] %v495
      $region295: #{rnn_model_forward.6} parent=289 // loop_footer
        %s492 = sadd.s32 1, %s488
      $region296: #{rnn_model_forward.6} parent=289 // loop_footer_branch
        %487 = sbr.rel target = $region292
      $region297: #{rnn_model_forward.6} parent=289 // loop_exit
        _
    $region290: #{rnn_model_forward.6} parent=274 // pred_fallthru
      _
  $region275: #{rnn_model_forward.6} parent=0 // pred_fallthru
    _
  // Predicated region
  $region276: #{rnn_model_forward.6} parent=0 // pred_check
    %p462 = pneg %p458
  $region277: #{rnn_model_forward.6} parent=0 // pred_check_branch
    %464 = sbr.rel (%p462) target = $region279
  $region278: #{rnn_model_forward.6} parent=0 // pred_region
    %s465 = sshllo.u32 0, 1
    loop: start=0, step=1, limit=1
    $region280: #{rnn_model_forward.6} parent=278 // loop_pre_header
      _
    $region281: #{rnn_model_forward.6} parent=278 // loop_header
      %s467 = sphi 0, %s471
      %p468 = scmp.ge.s32.totalorder %s467, 1
      %s472 = sphi %s454, %s454
      %s473 = sphi %s455, %s455
    $region282: #{rnn_model_forward.6} parent=278 // loop_header_branch
      %470 = sbr.rel (%p468) target = $region286
    $region283: #{rnn_model_forward.6} parent=278 // loop_body
      %v474 = vld [vmem:[%s472] sm:%s465]
      %475 = vst [vmem:[%s473] sm:%s465] %v474
    $region284: #{rnn_model_forward.6} parent=278 // loop_footer
      %s471 = sadd.s32 1, %s467
    $region285: #{rnn_model_forward.6} parent=278 // loop_footer_branch
      %466 = sbr.rel target = $region281
    $region286: #{rnn_model_forward.6} parent=278 // loop_exit
      _
  $region279: #{rnn_model_forward.6} parent=0 // pred_fallthru
    _
  // Predicated region
  $region298: #{rnn_model_forward.6} parent=0 // pred_check
    _
  $region299: #{rnn_model_forward.6} parent=0 // pred_check_branch
    %499 = sbr.rel (0) target = $region301
  $region300: #{rnn_model_forward.6} parent=0 // pred_region
    %500 = vsyncadd %s456, 16
  $region301: #{rnn_model_forward.6} parent=0 // pred_fallthru
    _
  %s501 = sadd.s32 %s13, 10
  %s502 = sld [smem:[#allocation4 + %s501]]
  %s503 = scalar_lea.vmem %s1, %s502
  %s504 = scalar_lea.vmem %s2, 10
  %s505 = scalar_lea.sflag [#allocation2], 10
  %p507 = scmp.lt.u32.totalorder 1, 8
  %p508 = pneg %p507
  // Predicated region
  $region302: #{rnn_model_forward.6} parent=0 // pred_check
    _
  $region303: #{rnn_model_forward.6} parent=0 // pred_check_branch
    %510 = sbr.rel (%p507) target = $region305
  $region304: #{rnn_model_forward.6} parent=0 // pred_region
    %s525 = sand.u32 1, 7
    %p526 = scmp.eq.s32.totalorder %s525, 0
    %p527 = pneg %p526
    // Predicated region
    $region317: #{rnn_model_forward.6} parent=304 // pred_check
      _
    $region318: #{rnn_model_forward.6} parent=304 // pred_check_branch
      %529 = sbr.rel (%p526) target = $region320
    $region319: #{rnn_model_forward.6} parent=304 // pred_region
      %s530 = sand.u32 1, 7
      %s531 = ssub.s32 1, %s530
      %s532 = scalar_lea.vmem %s503, %s531
      %s533 = ssub.s32 1, %s530
      %s534 = scalar_lea.vmem %s504, %s533
      %s535 = sshllo.u32 0, %s530
      loop: start=0, step=1, limit=1
      $region321: #{rnn_model_forward.6} parent=319 // loop_pre_header
        _
      $region322: #{rnn_model_forward.6} parent=319 // loop_header
        %s537 = sphi 0, %s541
        %p538 = scmp.ge.s32.totalorder %s537, 1
        %s542 = sphi %s532, %s532
        %s543 = sphi %s534, %s534
      $region323: #{rnn_model_forward.6} parent=319 // loop_header_branch
        %540 = sbr.rel (%p538) target = $region327
      $region324: #{rnn_model_forward.6} parent=319 // loop_body
        %v544 = vld [vmem:[%s542] sm:%s535]
        %545 = vst [vmem:[%s543] sm:%s535] %v544
      $region325: #{rnn_model_forward.6} parent=319 // loop_footer
        %s541 = sadd.s32 1, %s537
      $region326: #{rnn_model_forward.6} parent=319 // loop_footer_branch
        %536 = sbr.rel target = $region322
      $region327: #{rnn_model_forward.6} parent=319 // loop_exit
        _
    $region320: #{rnn_model_forward.6} parent=304 // pred_fallthru
      _
  $region305: #{rnn_model_forward.6} parent=0 // pred_fallthru
    _
  // Predicated region
  $region306: #{rnn_model_forward.6} parent=0 // pred_check
    %p511 = pneg %p507
  $region307: #{rnn_model_forward.6} parent=0 // pred_check_branch
    %513 = sbr.rel (%p511) target = $region309
  $region308: #{rnn_model_forward.6} parent=0 // pred_region
    %s514 = sshllo.u32 0, 1
    loop: start=0, step=1, limit=1
    $region310: #{rnn_model_forward.6} parent=308 // loop_pre_header
      _
    $region311: #{rnn_model_forward.6} parent=308 // loop_header
      %s516 = sphi 0, %s520
      %p517 = scmp.ge.s32.totalorder %s516, 1
      %s521 = sphi %s503, %s503
      %s522 = sphi %s504, %s504
    $region312: #{rnn_model_forward.6} parent=308 // loop_header_branch
      %519 = sbr.rel (%p517) target = $region316
    $region313: #{rnn_model_forward.6} parent=308 // loop_body
      %v523 = vld [vmem:[%s521] sm:%s514]
      %524 = vst [vmem:[%s522] sm:%s514] %v523
    $region314: #{rnn_model_forward.6} parent=308 // loop_footer
      %s520 = sadd.s32 1, %s516
    $region315: #{rnn_model_forward.6} parent=308 // loop_footer_branch
      %515 = sbr.rel target = $region311
    $region316: #{rnn_model_forward.6} parent=308 // loop_exit
      _
  $region309: #{rnn_model_forward.6} parent=0 // pred_fallthru
    _
  // Predicated region
  $region328: #{rnn_model_forward.6} parent=0 // pred_check
    _
  $region329: #{rnn_model_forward.6} parent=0 // pred_check_branch
    %548 = sbr.rel (0) target = $region331
  $region330: #{rnn_model_forward.6} parent=0 // pred_region
    %549 = vsyncadd %s505, 16
  $region331: #{rnn_model_forward.6} parent=0 // pred_fallthru
    _
  %s550 = sadd.s32 %s13, 11
  %s551 = sld [smem:[#allocation4 + %s550]]
  %s552 = scalar_lea.vmem %s1, %s551
  %s553 = scalar_lea.vmem %s2, 11
  %s554 = scalar_lea.sflag [#allocation2], 11
  %p556 = scmp.lt.u32.totalorder 1, 8
  %p557 = pneg %p556
  // Predicated region
  $region332: #{rnn_model_forward.6} parent=0 // pred_check
    _
  $region333: #{rnn_model_forward.6} parent=0 // pred_check_branch
    %559 = sbr.rel (%p556) target = $region335
  $region334: #{rnn_model_forward.6} parent=0 // pred_region
    %s574 = sand.u32 1, 7
    %p575 = scmp.eq.s32.totalorder %s574, 0
    %p576 = pneg %p575
    // Predicated region
    $region347: #{rnn_model_forward.6} parent=334 // pred_check
      _
    $region348: #{rnn_model_forward.6} parent=334 // pred_check_branch
      %578 = sbr.rel (%p575) target = $region350
    $region349: #{rnn_model_forward.6} parent=334 // pred_region
      %s579 = sand.u32 1, 7
      %s580 = ssub.s32 1, %s579
      %s581 = scalar_lea.vmem %s552, %s580
      %s582 = ssub.s32 1, %s579
      %s583 = scalar_lea.vmem %s553, %s582
      %s584 = sshllo.u32 0, %s579
      loop: start=0, step=1, limit=1
      $region351: #{rnn_model_forward.6} parent=349 // loop_pre_header
        _
      $region352: #{rnn_model_forward.6} parent=349 // loop_header
        %s586 = sphi 0, %s590
        %p587 = scmp.ge.s32.totalorder %s586, 1
        %s591 = sphi %s581, %s581
        %s592 = sphi %s583, %s583
      $region353: #{rnn_model_forward.6} parent=349 // loop_header_branch
        %589 = sbr.rel (%p587) target = $region357
      $region354: #{rnn_model_forward.6} parent=349 // loop_body
        %v593 = vld [vmem:[%s591] sm:%s584]
        %594 = vst [vmem:[%s592] sm:%s584] %v593
      $region355: #{rnn_model_forward.6} parent=349 // loop_footer
        %s590 = sadd.s32 1, %s586
      $region356: #{rnn_model_forward.6} parent=349 // loop_footer_branch
        %585 = sbr.rel target = $region352
      $region357: #{rnn_model_forward.6} parent=349 // loop_exit
        _
    $region350: #{rnn_model_forward.6} parent=334 // pred_fallthru
      _
  $region335: #{rnn_model_forward.6} parent=0 // pred_fallthru
    _
  // Predicated region
  $region336: #{rnn_model_forward.6} parent=0 // pred_check
    %p560 = pneg %p556
  $region337: #{rnn_model_forward.6} parent=0 // pred_check_branch
    %562 = sbr.rel (%p560) target = $region339
  $region338: #{rnn_model_forward.6} parent=0 // pred_region
    %s563 = sshllo.u32 0, 1
    loop: start=0, step=1, limit=1
    $region340: #{rnn_model_forward.6} parent=338 // loop_pre_header
      _
    $region341: #{rnn_model_forward.6} parent=338 // loop_header
      %s565 = sphi 0, %s569
      %p566 = scmp.ge.s32.totalorder %s565, 1
      %s570 = sphi %s552, %s552
      %s571 = sphi %s553, %s553
    $region342: #{rnn_model_forward.6} parent=338 // loop_header_branch
      %568 = sbr.rel (%p566) target = $region346
    $region343: #{rnn_model_forward.6} parent=338 // loop_body
      %v572 = vld [vmem:[%s570] sm:%s563]
      %573 = vst [vmem:[%s571] sm:%s563] %v572
    $region344: #{rnn_model_forward.6} parent=338 // loop_footer
      %s569 = sadd.s32 1, %s565
    $region345: #{rnn_model_forward.6} parent=338 // loop_footer_branch
      %564 = sbr.rel target = $region341
    $region346: #{rnn_model_forward.6} parent=338 // loop_exit
      _
  $region339: #{rnn_model_forward.6} parent=0 // pred_fallthru
    _
  // Predicated region
  $region358: #{rnn_model_forward.6} parent=0 // pred_check
    _
  $region359: #{rnn_model_forward.6} parent=0 // pred_check_branch
    %597 = sbr.rel (0) target = $region361
  $region360: #{rnn_model_forward.6} parent=0 // pred_region
    %598 = vsyncadd %s554, 16
  $region361: #{rnn_model_forward.6} parent=0 // pred_fallthru
    _
  %s599 = sadd.s32 %s13, 12
  %s600 = sld [smem:[#allocation4 + %s599]]
  %s601 = scalar_lea.vmem %s1, %s600
  %s602 = scalar_lea.vmem %s2, 12
  %s603 = scalar_lea.sflag [#allocation2], 12
  %p605 = scmp.lt.u32.totalorder 1, 8
  %p606 = pneg %p605
  // Predicated region
  $region362: #{rnn_model_forward.6} parent=0 // pred_check
    _
  $region363: #{rnn_model_forward.6} parent=0 // pred_check_branch
    %608 = sbr.rel (%p605) target = $region365
  $region364: #{rnn_model_forward.6} parent=0 // pred_region
    %s623 = sand.u32 1, 7
    %p624 = scmp.eq.s32.totalorder %s623, 0
    %p625 = pneg %p624
    // Predicated region
    $region377: #{rnn_model_forward.6} parent=364 // pred_check
      _
    $region378: #{rnn_model_forward.6} parent=364 // pred_check_branch
      %627 = sbr.rel (%p624) target = $region380
    $region379: #{rnn_model_forward.6} parent=364 // pred_region
      %s628 = sand.u32 1, 7
      %s629 = ssub.s32 1, %s628
      %s630 = scalar_lea.vmem %s601, %s629
      %s631 = ssub.s32 1, %s628
      %s632 = scalar_lea.vmem %s602, %s631
      %s633 = sshllo.u32 0, %s628
      loop: start=0, step=1, limit=1
      $region381: #{rnn_model_forward.6} parent=379 // loop_pre_header
        _
      $region382: #{rnn_model_forward.6} parent=379 // loop_header
        %s635 = sphi 0, %s639
        %p636 = scmp.ge.s32.totalorder %s635, 1
        %s640 = sphi %s630, %s630
        %s641 = sphi %s632, %s632
      $region383: #{rnn_model_forward.6} parent=379 // loop_header_branch
        %638 = sbr.rel (%p636) target = $region387
      $region384: #{rnn_model_forward.6} parent=379 // loop_body
        %v642 = vld [vmem:[%s640] sm:%s633]
        %643 = vst [vmem:[%s641] sm:%s633] %v642
      $region385: #{rnn_model_forward.6} parent=379 // loop_footer
        %s639 = sadd.s32 1, %s635
      $region386: #{rnn_model_forward.6} parent=379 // loop_footer_branch
        %634 = sbr.rel target = $region382
      $region387: #{rnn_model_forward.6} parent=379 // loop_exit
        _
    $region380: #{rnn_model_forward.6} parent=364 // pred_fallthru
      _
  $region365: #{rnn_model_forward.6} parent=0 // pred_fallthru
    _
  // Predicated region
  $region366: #{rnn_model_forward.6} parent=0 // pred_check
    %p609 = pneg %p605
  $region367: #{rnn_model_forward.6} parent=0 // pred_check_branch
    %611 = sbr.rel (%p609) target = $region369
  $region368: #{rnn_model_forward.6} parent=0 // pred_region
    %s612 = sshllo.u32 0, 1
    loop: start=0, step=1, limit=1
    $region370: #{rnn_model_forward.6} parent=368 // loop_pre_header
      _
    $region371: #{rnn_model_forward.6} parent=368 // loop_header
      %s614 = sphi 0, %s618
      %p615 = scmp.ge.s32.totalorder %s614, 1
      %s619 = sphi %s601, %s601
      %s620 = sphi %s602, %s602
    $region372: #{rnn_model_forward.6} parent=368 // loop_header_branch
      %617 = sbr.rel (%p615) target = $region376
    $region373: #{rnn_model_forward.6} parent=368 // loop_body
      %v621 = vld [vmem:[%s619] sm:%s612]
      %622 = vst [vmem:[%s620] sm:%s612] %v621
    $region374: #{rnn_model_forward.6} parent=368 // loop_footer
      %s618 = sadd.s32 1, %s614
    $region375: #{rnn_model_forward.6} parent=368 // loop_footer_branch
      %613 = sbr.rel target = $region371
    $region376: #{rnn_model_forward.6} parent=368 // loop_exit
      _
  $region369: #{rnn_model_forward.6} parent=0 // pred_fallthru
    _
  // Predicated region
  $region388: #{rnn_model_forward.6} parent=0 // pred_check
    _
  $region389: #{rnn_model_forward.6} parent=0 // pred_check_branch
    %646 = sbr.rel (0) target = $region391
  $region390: #{rnn_model_forward.6} parent=0 // pred_region
    %647 = vsyncadd %s603, 16
  $region391: #{rnn_model_forward.6} parent=0 // pred_fallthru
    _
  %s648 = sadd.s32 %s13, 13
  %s649 = sld [smem:[#allocation4 + %s648]]
  %s650 = scalar_lea.vmem %s1, %s649
  %s651 = scalar_lea.vmem %s2, 13
  %s652 = scalar_lea.sflag [#allocation2], 13
  %p654 = scmp.lt.u32.totalorder 1, 8
  %p655 = pneg %p654
  // Predicated region
  $region392: #{rnn_model_forward.6} parent=0 // pred_check
    _
  $region393: #{rnn_model_forward.6} parent=0 // pred_check_branch
    %657 = sbr.rel (%p654) target = $region395
  $region394: #{rnn_model_forward.6} parent=0 // pred_region
    %s672 = sand.u32 1, 7
    %p673 = scmp.eq.s32.totalorder %s672, 0
    %p674 = pneg %p673
    // Predicated region
    $region407: #{rnn_model_forward.6} parent=394 // pred_check
      _
    $region408: #{rnn_model_forward.6} parent=394 // pred_check_branch
      %676 = sbr.rel (%p673) target = $region410
    $region409: #{rnn_model_forward.6} parent=394 // pred_region
      %s677 = sand.u32 1, 7
      %s678 = ssub.s32 1, %s677
      %s679 = scalar_lea.vmem %s650, %s678
      %s680 = ssub.s32 1, %s677
      %s681 = scalar_lea.vmem %s651, %s680
      %s682 = sshllo.u32 0, %s677
      loop: start=0, step=1, limit=1
      $region411: #{rnn_model_forward.6} parent=409 // loop_pre_header
        _
      $region412: #{rnn_model_forward.6} parent=409 // loop_header
        %s684 = sphi 0, %s688
        %p685 = scmp.ge.s32.totalorder %s684, 1
        %s689 = sphi %s679, %s679
        %s690 = sphi %s681, %s681
      $region413: #{rnn_model_forward.6} parent=409 // loop_header_branch
        %687 = sbr.rel (%p685) target = $region417
      $region414: #{rnn_model_forward.6} parent=409 // loop_body
        %v691 = vld [vmem:[%s689] sm:%s682]
        %692 = vst [vmem:[%s690] sm:%s682] %v691
      $region415: #{rnn_model_forward.6} parent=409 // loop_footer
        %s688 = sadd.s32 1, %s684
      $region416: #{rnn_model_forward.6} parent=409 // loop_footer_branch
        %683 = sbr.rel target = $region412
      $region417: #{rnn_model_forward.6} parent=409 // loop_exit
        _
    $region410: #{rnn_model_forward.6} parent=394 // pred_fallthru
      _
  $region395: #{rnn_model_forward.6} parent=0 // pred_fallthru
    _
  // Predicated region
  $region396: #{rnn_model_forward.6} parent=0 // pred_check
    %p658 = pneg %p654
  $region397: #{rnn_model_forward.6} parent=0 // pred_check_branch
    %660 = sbr.rel (%p658) target = $region399
  $region398: #{rnn_model_forward.6} parent=0 // pred_region
    %s661 = sshllo.u32 0, 1
    loop: start=0, step=1, limit=1
    $region400: #{rnn_model_forward.6} parent=398 // loop_pre_header
      _
    $region401: #{rnn_model_forward.6} parent=398 // loop_header
      %s663 = sphi 0, %s667
      %p664 = scmp.ge.s32.totalorder %s663, 1
      %s668 = sphi %s650, %s650
      %s669 = sphi %s651, %s651
    $region402: #{rnn_model_forward.6} parent=398 // loop_header_branch
      %666 = sbr.rel (%p664) target = $region406
    $region403: #{rnn_model_forward.6} parent=398 // loop_body
      %v670 = vld [vmem:[%s668] sm:%s661]
      %671 = vst [vmem:[%s669] sm:%s661] %v670
    $region404: #{rnn_model_forward.6} parent=398 // loop_footer
      %s667 = sadd.s32 1, %s663
    $region405: #{rnn_model_forward.6} parent=398 // loop_footer_branch
      %662 = sbr.rel target = $region401
    $region406: #{rnn_model_forward.6} parent=398 // loop_exit
      _
  $region399: #{rnn_model_forward.6} parent=0 // pred_fallthru
    _
  // Predicated region
  $region418: #{rnn_model_forward.6} parent=0 // pred_check
    _
  $region419: #{rnn_model_forward.6} parent=0 // pred_check_branch
    %695 = sbr.rel (0) target = $region421
  $region420: #{rnn_model_forward.6} parent=0 // pred_region
    %696 = vsyncadd %s652, 16
  $region421: #{rnn_model_forward.6} parent=0 // pred_fallthru
    _
  %s697 = sadd.s32 %s13, 14
  %s698 = sld [smem:[#allocation4 + %s697]]
  %s699 = scalar_lea.vmem %s1, %s698
  %s700 = scalar_lea.vmem %s2, 14
  %s701 = scalar_lea.sflag [#allocation2], 14
  %p703 = scmp.lt.u32.totalorder 1, 8
  %p704 = pneg %p703
  // Predicated region
  $region422: #{rnn_model_forward.6} parent=0 // pred_check
    _
  $region423: #{rnn_model_forward.6} parent=0 // pred_check_branch
    %706 = sbr.rel (%p703) target = $region425
  $region424: #{rnn_model_forward.6} parent=0 // pred_region
    %s721 = sand.u32 1, 7
    %p722 = scmp.eq.s32.totalorder %s721, 0
    %p723 = pneg %p722
    // Predicated region
    $region437: #{rnn_model_forward.6} parent=424 // pred_check
      _
    $region438: #{rnn_model_forward.6} parent=424 // pred_check_branch
      %725 = sbr.rel (%p722) target = $region440
    $region439: #{rnn_model_forward.6} parent=424 // pred_region
      %s726 = sand.u32 1, 7
      %s727 = ssub.s32 1, %s726
      %s728 = scalar_lea.vmem %s699, %s727
      %s729 = ssub.s32 1, %s726
      %s730 = scalar_lea.vmem %s700, %s729
      %s731 = sshllo.u32 0, %s726
      loop: start=0, step=1, limit=1
      $region441: #{rnn_model_forward.6} parent=439 // loop_pre_header
        _
      $region442: #{rnn_model_forward.6} parent=439 // loop_header
        %s733 = sphi 0, %s737
        %p734 = scmp.ge.s32.totalorder %s733, 1
        %s738 = sphi %s728, %s728
        %s739 = sphi %s730, %s730
      $region443: #{rnn_model_forward.6} parent=439 // loop_header_branch
        %736 = sbr.rel (%p734) target = $region447
      $region444: #{rnn_model_forward.6} parent=439 // loop_body
        %v740 = vld [vmem:[%s738] sm:%s731]
        %741 = vst [vmem:[%s739] sm:%s731] %v740
      $region445: #{rnn_model_forward.6} parent=439 // loop_footer
        %s737 = sadd.s32 1, %s733
      $region446: #{rnn_model_forward.6} parent=439 // loop_footer_branch
        %732 = sbr.rel target = $region442
      $region447: #{rnn_model_forward.6} parent=439 // loop_exit
        _
    $region440: #{rnn_model_forward.6} parent=424 // pred_fallthru
      _
  $region425: #{rnn_model_forward.6} parent=0 // pred_fallthru
    _
  // Predicated region
  $region426: #{rnn_model_forward.6} parent=0 // pred_check
    %p707 = pneg %p703
  $region427: #{rnn_model_forward.6} parent=0 // pred_check_branch
    %709 = sbr.rel (%p707) target = $region429
  $region428: #{rnn_model_forward.6} parent=0 // pred_region
    %s710 = sshllo.u32 0, 1
    loop: start=0, step=1, limit=1
    $region430: #{rnn_model_forward.6} parent=428 // loop_pre_header
      _
    $region431: #{rnn_model_forward.6} parent=428 // loop_header
      %s712 = sphi 0, %s716
      %p713 = scmp.ge.s32.totalorder %s712, 1
      %s717 = sphi %s699, %s699
      %s718 = sphi %s700, %s700
    $region432: #{rnn_model_forward.6} parent=428 // loop_header_branch
      %715 = sbr.rel (%p713) target = $region436
    $region433: #{rnn_model_forward.6} parent=428 // loop_body
      %v719 = vld [vmem:[%s717] sm:%s710]
      %720 = vst [vmem:[%s718] sm:%s710] %v719
    $region434: #{rnn_model_forward.6} parent=428 // loop_footer
      %s716 = sadd.s32 1, %s712
    $region435: #{rnn_model_forward.6} parent=428 // loop_footer_branch
      %711 = sbr.rel target = $region431
    $region436: #{rnn_model_forward.6} parent=428 // loop_exit
      _
  $region429: #{rnn_model_forward.6} parent=0 // pred_fallthru
    _
  // Predicated region
  $region448: #{rnn_model_forward.6} parent=0 // pred_check
    _
  $region449: #{rnn_model_forward.6} parent=0 // pred_check_branch
    %744 = sbr.rel (0) target = $region451
  $region450: #{rnn_model_forward.6} parent=0 // pred_region
    %745 = vsyncadd %s701, 16
  $region451: #{rnn_model_forward.6} parent=0 // pred_fallthru
    _
  %s746 = sadd.s32 %s13, 15
  %s747 = sld [smem:[#allocation4 + %s746]]
  %s748 = scalar_lea.vmem %s1, %s747
  %s749 = scalar_lea.vmem %s2, 15
  %s750 = scalar_lea.sflag [#allocation2], 15
  %p752 = scmp.lt.u32.totalorder 1, 8
  %p753 = pneg %p752
  // Predicated region
  $region452: #{rnn_model_forward.6} parent=0 // pred_check
    _
  $region453: #{rnn_model_forward.6} parent=0 // pred_check_branch
    %755 = sbr.rel (%p752) target = $region455
  $region454: #{rnn_model_forward.6} parent=0 // pred_region
    %s770 = sand.u32 1, 7
    %p771 = scmp.eq.s32.totalorder %s770, 0
    %p772 = pneg %p771
    // Predicated region
    $region467: #{rnn_model_forward.6} parent=454 // pred_check
      _
    $region468: #{rnn_model_forward.6} parent=454 // pred_check_branch
      %774 = sbr.rel (%p771) target = $region470
    $region469: #{rnn_model_forward.6} parent=454 // pred_region
      %s775 = sand.u32 1, 7
      %s776 = ssub.s32 1, %s775
      %s777 = scalar_lea.vmem %s748, %s776
      %s778 = ssub.s32 1, %s775
      %s779 = scalar_lea.vmem %s749, %s778
      %s780 = sshllo.u32 0, %s775
      loop: start=0, step=1, limit=1
      $region471: #{rnn_model_forward.6} parent=469 // loop_pre_header
        _
      $region472: #{rnn_model_forward.6} parent=469 // loop_header
        %s782 = sphi 0, %s786
        %p783 = scmp.ge.s32.totalorder %s782, 1
        %s787 = sphi %s777, %s777
        %s788 = sphi %s779, %s779
      $region473: #{rnn_model_forward.6} parent=469 // loop_header_branch
        %785 = sbr.rel (%p783) target = $region477
      $region474: #{rnn_model_forward.6} parent=469 // loop_body
        %v789 = vld [vmem:[%s787] sm:%s780]
        %790 = vst [vmem:[%s788] sm:%s780] %v789
      $region475: #{rnn_model_forward.6} parent=469 // loop_footer
        %s786 = sadd.s32 1, %s782
      $region476: #{rnn_model_forward.6} parent=469 // loop_footer_branch
        %781 = sbr.rel target = $region472
      $region477: #{rnn_model_forward.6} parent=469 // loop_exit
        _
    $region470: #{rnn_model_forward.6} parent=454 // pred_fallthru
      _
  $region455: #{rnn_model_forward.6} parent=0 // pred_fallthru
    _
  // Predicated region
  $region456: #{rnn_model_forward.6} parent=0 // pred_check
    %p756 = pneg %p752
  $region457: #{rnn_model_forward.6} parent=0 // pred_check_branch
    %758 = sbr.rel (%p756) target = $region459
  $region458: #{rnn_model_forward.6} parent=0 // pred_region
    %s759 = sshllo.u32 0, 1
    loop: start=0, step=1, limit=1
    $region460: #{rnn_model_forward.6} parent=458 // loop_pre_header
      _
    $region461: #{rnn_model_forward.6} parent=458 // loop_header
      %s761 = sphi 0, %s765
      %p762 = scmp.ge.s32.totalorder %s761, 1
      %s766 = sphi %s748, %s748
      %s767 = sphi %s749, %s749
    $region462: #{rnn_model_forward.6} parent=458 // loop_header_branch
      %764 = sbr.rel (%p762) target = $region466
    $region463: #{rnn_model_forward.6} parent=458 // loop_body
      %v768 = vld [vmem:[%s766] sm:%s759]
      %769 = vst [vmem:[%s767] sm:%s759] %v768
    $region464: #{rnn_model_forward.6} parent=458 // loop_footer
      %s765 = sadd.s32 1, %s761
    $region465: #{rnn_model_forward.6} parent=458 // loop_footer_branch
      %760 = sbr.rel target = $region461
    $region466: #{rnn_model_forward.6} parent=458 // loop_exit
      _
  $region459: #{rnn_model_forward.6} parent=0 // pred_fallthru
    _
  // Predicated region
  $region478: #{rnn_model_forward.6} parent=0 // pred_check
    _
  $region479: #{rnn_model_forward.6} parent=0 // pred_check_branch
    %793 = sbr.rel (0) target = $region481
  $region480: #{rnn_model_forward.6} parent=0 // pred_region
    %794 = vsyncadd %s750, 16
  $region481: #{rnn_model_forward.6} parent=0 // pred_fallthru
    _
  %s795 = sadd.s32 %s13, 16
  %s796 = sld [smem:[#allocation4 + %s795]]
  %s797 = scalar_lea.vmem %s1, %s796
  %s798 = scalar_lea.vmem %s2, 16
  %s799 = scalar_lea.sflag [#allocation2], 16
  %p801 = scmp.lt.u32.totalorder 1, 8
  %p802 = pneg %p801
  // Predicated region
  $region482: #{rnn_model_forward.6} parent=0 // pred_check
    _
  $region483: #{rnn_model_forward.6} parent=0 // pred_check_branch
    %804 = sbr.rel (%p801) target = $region485
  $region484: #{rnn_model_forward.6} parent=0 // pred_region
    %s819 = sand.u32 1, 7
    %p820 = scmp.eq.s32.totalorder %s819, 0
    %p821 = pneg %p820
    // Predicated region
    $region497: #{rnn_model_forward.6} parent=484 // pred_check
      _
    $region498: #{rnn_model_forward.6} parent=484 // pred_check_branch
      %823 = sbr.rel (%p820) target = $region500
    $region499: #{rnn_model_forward.6} parent=484 // pred_region
      %s824 = sand.u32 1, 7
      %s825 = ssub.s32 1, %s824
      %s826 = scalar_lea.vmem %s797, %s825
      %s827 = ssub.s32 1, %s824
      %s828 = scalar_lea.vmem %s798, %s827
      %s829 = sshllo.u32 0, %s824
      loop: start=0, step=1, limit=1
      $region501: #{rnn_model_forward.6} parent=499 // loop_pre_header
        _
      $region502: #{rnn_model_forward.6} parent=499 // loop_header
        %s831 = sphi 0, %s835
        %p832 = scmp.ge.s32.totalorder %s831, 1
        %s836 = sphi %s826, %s826
        %s837 = sphi %s828, %s828
      $region503: #{rnn_model_forward.6} parent=499 // loop_header_branch
        %834 = sbr.rel (%p832) target = $region507
      $region504: #{rnn_model_forward.6} parent=499 // loop_body
        %v838 = vld [vmem:[%s836] sm:%s829]
        %839 = vst [vmem:[%s837] sm:%s829] %v838
      $region505: #{rnn_model_forward.6} parent=499 // loop_footer
        %s835 = sadd.s32 1, %s831
      $region506: #{rnn_model_forward.6} parent=499 // loop_footer_branch
        %830 = sbr.rel target = $region502
      $region507: #{rnn_model_forward.6} parent=499 // loop_exit
        _
    $region500: #{rnn_model_forward.6} parent=484 // pred_fallthru
      _
  $region485: #{rnn_model_forward.6} parent=0 // pred_fallthru
    _
  // Predicated region
  $region486: #{rnn_model_forward.6} parent=0 // pred_check
    %p805 = pneg %p801
  $region487: #{rnn_model_forward.6} parent=0 // pred_check_branch
    %807 = sbr.rel (%p805) target = $region489
  $region488: #{rnn_model_forward.6} parent=0 // pred_region
    %s808 = sshllo.u32 0, 1
    loop: start=0, step=1, limit=1
    $region490: #{rnn_model_forward.6} parent=488 // loop_pre_header
      _
    $region491: #{rnn_model_forward.6} parent=488 // loop_header
      %s810 = sphi 0, %s814
      %p811 = scmp.ge.s32.totalorder %s810, 1
      %s815 = sphi %s797, %s797
      %s816 = sphi %s798, %s798
    $region492: #{rnn_model_forward.6} parent=488 // loop_header_branch
      %813 = sbr.rel (%p811) target = $region496
    $region493: #{rnn_model_forward.6} parent=488 // loop_body
      %v817 = vld [vmem:[%s815] sm:%s808]
      %818 = vst [vmem:[%s816] sm:%s808] %v817
    $region494: #{rnn_model_forward.6} parent=488 // loop_footer
      %s814 = sadd.s32 1, %s810
    $region495: #{rnn_model_forward.6} parent=488 // loop_footer_branch
      %809 = sbr.rel target = $region491
    $region496: #{rnn_model_forward.6} parent=488 // loop_exit
      _
  $region489: #{rnn_model_forward.6} parent=0 // pred_fallthru
    _
  // Predicated region
  $region508: #{rnn_model_forward.6} parent=0 // pred_check
    _
  $region509: #{rnn_model_forward.6} parent=0 // pred_check_branch
    %842 = sbr.rel (0) target = $region511
  $region510: #{rnn_model_forward.6} parent=0 // pred_region
    %843 = vsyncadd %s799, 16
  $region511: #{rnn_model_forward.6} parent=0 // pred_fallthru
    _
  %s844 = sadd.s32 %s13, 17
  %s845 = sld [smem:[#allocation4 + %s844]]
  %s846 = scalar_lea.vmem %s1, %s845
  %s847 = scalar_lea.vmem %s2, 17
  %s848 = scalar_lea.sflag [#allocation2], 17
  %p850 = scmp.lt.u32.totalorder 1, 8
  %p851 = pneg %p850
  // Predicated region
  $region512: #{rnn_model_forward.6} parent=0 // pred_check
    _
  $region513: #{rnn_model_forward.6} parent=0 // pred_check_branch
    %853 = sbr.rel (%p850) target = $region515
  $region514: #{rnn_model_forward.6} parent=0 // pred_region
    %s868 = sand.u32 1, 7
    %p869 = scmp.eq.s32.totalorder %s868, 0
    %p870 = pneg %p869
    // Predicated region
    $region527: #{rnn_model_forward.6} parent=514 // pred_check
      _
    $region528: #{rnn_model_forward.6} parent=514 // pred_check_branch
      %872 = sbr.rel (%p869) target = $region530
    $region529: #{rnn_model_forward.6} parent=514 // pred_region
      %s873 = sand.u32 1, 7
      %s874 = ssub.s32 1, %s873
      %s875 = scalar_lea.vmem %s846, %s874
      %s876 = ssub.s32 1, %s873
      %s877 = scalar_lea.vmem %s847, %s876
      %s878 = sshllo.u32 0, %s873
      loop: start=0, step=1, limit=1
      $region531: #{rnn_model_forward.6} parent=529 // loop_pre_header
        _
      $region532: #{rnn_model_forward.6} parent=529 // loop_header
        %s880 = sphi 0, %s884
        %p881 = scmp.ge.s32.totalorder %s880, 1
        %s885 = sphi %s875, %s875
        %s886 = sphi %s877, %s877
      $region533: #{rnn_model_forward.6} parent=529 // loop_header_branch
        %883 = sbr.rel (%p881) target = $region537
      $region534: #{rnn_model_forward.6} parent=529 // loop_body
        %v887 = vld [vmem:[%s885] sm:%s878]
        %888 = vst [vmem:[%s886] sm:%s878] %v887
      $region535: #{rnn_model_forward.6} parent=529 // loop_footer
        %s884 = sadd.s32 1, %s880
      $region536: #{rnn_model_forward.6} parent=529 // loop_footer_branch
        %879 = sbr.rel target = $region532
      $region537: #{rnn_model_forward.6} parent=529 // loop_exit
        _
    $region530: #{rnn_model_forward.6} parent=514 // pred_fallthru
      _
  $region515: #{rnn_model_forward.6} parent=0 // pred_fallthru
    _
  // Predicated region
  $region516: #{rnn_model_forward.6} parent=0 // pred_check
    %p854 = pneg %p850
  $region517: #{rnn_model_forward.6} parent=0 // pred_check_branch
    %856 = sbr.rel (%p854) target = $region519
  $region518: #{rnn_model_forward.6} parent=0 // pred_region
    %s857 = sshllo.u32 0, 1
    loop: start=0, step=1, limit=1
    $region520: #{rnn_model_forward.6} parent=518 // loop_pre_header
      _
    $region521: #{rnn_model_forward.6} parent=518 // loop_header
      %s859 = sphi 0, %s863
      %p860 = scmp.ge.s32.totalorder %s859, 1
      %s864 = sphi %s846, %s846
      %s865 = sphi %s847, %s847
    $region522: #{rnn_model_forward.6} parent=518 // loop_header_branch
      %862 = sbr.rel (%p860) target = $region526
    $region523: #{rnn_model_forward.6} parent=518 // loop_body
      %v866 = vld [vmem:[%s864] sm:%s857]
      %867 = vst [vmem:[%s865] sm:%s857] %v866
    $region524: #{rnn_model_forward.6} parent=518 // loop_footer
      %s863 = sadd.s32 1, %s859
    $region525: #{rnn_model_forward.6} parent=518 // loop_footer_branch
      %858 = sbr.rel target = $region521
    $region526: #{rnn_model_forward.6} parent=518 // loop_exit
      _
  $region519: #{rnn_model_forward.6} parent=0 // pred_fallthru
    _
  // Predicated region
  $region538: #{rnn_model_forward.6} parent=0 // pred_check
    _
  $region539: #{rnn_model_forward.6} parent=0 // pred_check_branch
    %891 = sbr.rel (0) target = $region541
  $region540: #{rnn_model_forward.6} parent=0 // pred_region
    %892 = vsyncadd %s848, 16
  $region541: #{rnn_model_forward.6} parent=0 // pred_fallthru
    _
  %s893 = sadd.s32 %s13, 18
  %s894 = sld [smem:[#allocation4 + %s893]]
  %s895 = scalar_lea.vmem %s1, %s894
  %s896 = scalar_lea.vmem %s2, 18
  %s897 = scalar_lea.sflag [#allocation2], 18
  %p899 = scmp.lt.u32.totalorder 1, 8
  %p900 = pneg %p899
  // Predicated region
  $region542: #{rnn_model_forward.6} parent=0 // pred_check
    _
  $region543: #{rnn_model_forward.6} parent=0 // pred_check_branch
    %902 = sbr.rel (%p899) target = $region545
  $region544: #{rnn_model_forward.6} parent=0 // pred_region
    %s917 = sand.u32 1, 7
    %p918 = scmp.eq.s32.totalorder %s917, 0
    %p919 = pneg %p918
    // Predicated region
    $region557: #{rnn_model_forward.6} parent=544 // pred_check
      _
    $region558: #{rnn_model_forward.6} parent=544 // pred_check_branch
      %921 = sbr.rel (%p918) target = $region560
    $region559: #{rnn_model_forward.6} parent=544 // pred_region
      %s922 = sand.u32 1, 7
      %s923 = ssub.s32 1, %s922
      %s924 = scalar_lea.vmem %s895, %s923
      %s925 = ssub.s32 1, %s922
      %s926 = scalar_lea.vmem %s896, %s925
      %s927 = sshllo.u32 0, %s922
      loop: start=0, step=1, limit=1
      $region561: #{rnn_model_forward.6} parent=559 // loop_pre_header
        _
      $region562: #{rnn_model_forward.6} parent=559 // loop_header
        %s929 = sphi 0, %s933
        %p930 = scmp.ge.s32.totalorder %s929, 1
        %s934 = sphi %s924, %s924
        %s935 = sphi %s926, %s926
      $region563: #{rnn_model_forward.6} parent=559 // loop_header_branch
        %932 = sbr.rel (%p930) target = $region567
      $region564: #{rnn_model_forward.6} parent=559 // loop_body
        %v936 = vld [vmem:[%s934] sm:%s927]
        %937 = vst [vmem:[%s935] sm:%s927] %v936
      $region565: #{rnn_model_forward.6} parent=559 // loop_footer
        %s933 = sadd.s32 1, %s929
      $region566: #{rnn_model_forward.6} parent=559 // loop_footer_branch
        %928 = sbr.rel target = $region562
      $region567: #{rnn_model_forward.6} parent=559 // loop_exit
        _
    $region560: #{rnn_model_forward.6} parent=544 // pred_fallthru
      _
  $region545: #{rnn_model_forward.6} parent=0 // pred_fallthru
    _
  // Predicated region
  $region546: #{rnn_model_forward.6} parent=0 // pred_check
    %p903 = pneg %p899
  $region547: #{rnn_model_forward.6} parent=0 // pred_check_branch
    %905 = sbr.rel (%p903) target = $region549
  $region548: #{rnn_model_forward.6} parent=0 // pred_region
    %s906 = sshllo.u32 0, 1
    loop: start=0, step=1, limit=1
    $region550: #{rnn_model_forward.6} parent=548 // loop_pre_header
      _
    $region551: #{rnn_model_forward.6} parent=548 // loop_header
      %s908 = sphi 0, %s912
      %p909 = scmp.ge.s32.totalorder %s908, 1
      %s913 = sphi %s895, %s895
      %s914 = sphi %s896, %s896
    $region552: #{rnn_model_forward.6} parent=548 // loop_header_branch
      %911 = sbr.rel (%p909) target = $region556
    $region553: #{rnn_model_forward.6} parent=548 // loop_body
      %v915 = vld [vmem:[%s913] sm:%s906]
      %916 = vst [vmem:[%s914] sm:%s906] %v915
    $region554: #{rnn_model_forward.6} parent=548 // loop_footer
      %s912 = sadd.s32 1, %s908
    $region555: #{rnn_model_forward.6} parent=548 // loop_footer_branch
      %907 = sbr.rel target = $region551
    $region556: #{rnn_model_forward.6} parent=548 // loop_exit
      _
  $region549: #{rnn_model_forward.6} parent=0 // pred_fallthru
    _
  // Predicated region
  $region568: #{rnn_model_forward.6} parent=0 // pred_check
    _
  $region569: #{rnn_model_forward.6} parent=0 // pred_check_branch
    %940 = sbr.rel (0) target = $region571
  $region570: #{rnn_model_forward.6} parent=0 // pred_region
    %941 = vsyncadd %s897, 16
  $region571: #{rnn_model_forward.6} parent=0 // pred_fallthru
    _
  %s942 = sadd.s32 %s13, 19
  %s943 = sld [smem:[#allocation4 + %s942]]
  %s944 = scalar_lea.vmem %s1, %s943
  %s945 = scalar_lea.vmem %s2, 19
  %s946 = scalar_lea.sflag [#allocation2], 19
  %p948 = scmp.lt.u32.totalorder 1, 8
  %p949 = pneg %p948
  // Predicated region
  $region572: #{rnn_model_forward.6} parent=0 // pred_check
    _
  $region573: #{rnn_model_forward.6} parent=0 // pred_check_branch
    %951 = sbr.rel (%p948) target = $region575
  $region574: #{rnn_model_forward.6} parent=0 // pred_region
    %s966 = sand.u32 1, 7
    %p967 = scmp.eq.s32.totalorder %s966, 0
    %p968 = pneg %p967
    // Predicated region
    $region587: #{rnn_model_forward.6} parent=574 // pred_check
      _
    $region588: #{rnn_model_forward.6} parent=574 // pred_check_branch
      %970 = sbr.rel (%p967) target = $region590
    $region589: #{rnn_model_forward.6} parent=574 // pred_region
      %s971 = sand.u32 1, 7
      %s972 = ssub.s32 1, %s971
      %s973 = scalar_lea.vmem %s944, %s972
      %s974 = ssub.s32 1, %s971
      %s975 = scalar_lea.vmem %s945, %s974
      %s976 = sshllo.u32 0, %s971
      loop: start=0, step=1, limit=1
      $region591: #{rnn_model_forward.6} parent=589 // loop_pre_header
        _
      $region592: #{rnn_model_forward.6} parent=589 // loop_header
        %s978 = sphi 0, %s982
        %p979 = scmp.ge.s32.totalorder %s978, 1
        %s983 = sphi %s973, %s973
        %s984 = sphi %s975, %s975
      $region593: #{rnn_model_forward.6} parent=589 // loop_header_branch
        %981 = sbr.rel (%p979) target = $region597
      $region594: #{rnn_model_forward.6} parent=589 // loop_body
        %v985 = vld [vmem:[%s983] sm:%s976]
        %986 = vst [vmem:[%s984] sm:%s976] %v985
      $region595: #{rnn_model_forward.6} parent=589 // loop_footer
        %s982 = sadd.s32 1, %s978
      $region596: #{rnn_model_forward.6} parent=589 // loop_footer_branch
        %977 = sbr.rel target = $region592
      $region597: #{rnn_model_forward.6} parent=589 // loop_exit
        _
    $region590: #{rnn_model_forward.6} parent=574 // pred_fallthru
      _
  $region575: #{rnn_model_forward.6} parent=0 // pred_fallthru
    _
  // Predicated region
  $region576: #{rnn_model_forward.6} parent=0 // pred_check
    %p952 = pneg %p948
  $region577: #{rnn_model_forward.6} parent=0 // pred_check_branch
    %954 = sbr.rel (%p952) target = $region579
  $region578: #{rnn_model_forward.6} parent=0 // pred_region
    %s955 = sshllo.u32 0, 1
    loop: start=0, step=1, limit=1
    $region580: #{rnn_model_forward.6} parent=578 // loop_pre_header
      _
    $region581: #{rnn_model_forward.6} parent=578 // loop_header
      %s957 = sphi 0, %s961
      %p958 = scmp.ge.s32.totalorder %s957, 1
      %s962 = sphi %s944, %s944
      %s963 = sphi %s945, %s945
    $region582: #{rnn_model_forward.6} parent=578 // loop_header_branch
      %960 = sbr.rel (%p958) target = $region586
    $region583: #{rnn_model_forward.6} parent=578 // loop_body
      %v964 = vld [vmem:[%s962] sm:%s955]
      %965 = vst [vmem:[%s963] sm:%s955] %v964
    $region584: #{rnn_model_forward.6} parent=578 // loop_footer
      %s961 = sadd.s32 1, %s957
    $region585: #{rnn_model_forward.6} parent=578 // loop_footer_branch
      %956 = sbr.rel target = $region581
    $region586: #{rnn_model_forward.6} parent=578 // loop_exit
      _
  $region579: #{rnn_model_forward.6} parent=0 // pred_fallthru
    _
  // Predicated region
  $region598: #{rnn_model_forward.6} parent=0 // pred_check
    _
  $region599: #{rnn_model_forward.6} parent=0 // pred_check_branch
    %989 = sbr.rel (0) target = $region601
  $region600: #{rnn_model_forward.6} parent=0 // pred_region
    %990 = vsyncadd %s946, 16
  $region601: #{rnn_model_forward.6} parent=0 // pred_fallthru
    _
  %s991 = sadd.s32 %s13, 20
  %s992 = sld [smem:[#allocation4 + %s991]]
  %s993 = scalar_lea.vmem %s1, %s992
  %s994 = scalar_lea.vmem %s2, 20
  %s995 = scalar_lea.sflag [#allocation2], 20
  %p997 = scmp.lt.u32.totalorder 1, 8
  %p998 = pneg %p997
  // Predicated region
  $region602: #{rnn_model_forward.6} parent=0 // pred_check
    _
  $region603: #{rnn_model_forward.6} parent=0 // pred_check_branch
    %1000 = sbr.rel (%p997) target = $region605
  $region604: #{rnn_model_forward.6} parent=0 // pred_region
    %s1015 = sand.u32 1, 7
    %p1016 = scmp.eq.s32.totalorder %s1015, 0
    %p1017 = pneg %p1016
    // Predicated region
    $region617: #{rnn_model_forward.6} parent=604 // pred_check
      _
    $region618: #{rnn_model_forward.6} parent=604 // pred_check_branch
      %1019 = sbr.rel (%p1016) target = $region620
    $region619: #{rnn_model_forward.6} parent=604 // pred_region
      %s1020 = sand.u32 1, 7
      %s1021 = ssub.s32 1, %s1020
      %s1022 = scalar_lea.vmem %s993, %s1021
      %s1023 = ssub.s32 1, %s1020
      %s1024 = scalar_lea.vmem %s994, %s1023
      %s1025 = sshllo.u32 0, %s1020
      loop: start=0, step=1, limit=1
      $region621: #{rnn_model_forward.6} parent=619 // loop_pre_header
        _
      $region622: #{rnn_model_forward.6} parent=619 // loop_header
        %s1027 = sphi 0, %s1031
        %p1028 = scmp.ge.s32.totalorder %s1027, 1
        %s1032 = sphi %s1022, %s1022
        %s1033 = sphi %s1024, %s1024
      $region623: #{rnn_model_forward.6} parent=619 // loop_header_branch
        %1030 = sbr.rel (%p1028) target = $region627
      $region624: #{rnn_model_forward.6} parent=619 // loop_body
        %v1034 = vld [vmem:[%s1032] sm:%s1025]
        %1035 = vst [vmem:[%s1033] sm:%s1025] %v1034
      $region625: #{rnn_model_forward.6} parent=619 // loop_footer
        %s1031 = sadd.s32 1, %s1027
      $region626: #{rnn_model_forward.6} parent=619 // loop_footer_branch
        %1026 = sbr.rel target = $region622
      $region627: #{rnn_model_forward.6} parent=619 // loop_exit
        _
    $region620: #{rnn_model_forward.6} parent=604 // pred_fallthru
      _
  $region605: #{rnn_model_forward.6} parent=0 // pred_fallthru
    _
  // Predicated region
  $region606: #{rnn_model_forward.6} parent=0 // pred_check
    %p1001 = pneg %p997
  $region607: #{rnn_model_forward.6} parent=0 // pred_check_branch
    %1003 = sbr.rel (%p1001) target = $region609
  $region608: #{rnn_model_forward.6} parent=0 // pred_region
    %s1004 = sshllo.u32 0, 1
    loop: start=0, step=1, limit=1
    $region610: #{rnn_model_forward.6} parent=608 // loop_pre_header
      _
    $region611: #{rnn_model_forward.6} parent=608 // loop_header
      %s1006 = sphi 0, %s1010
      %p1007 = scmp.ge.s32.totalorder %s1006, 1
      %s1011 = sphi %s993, %s993
      %s1012 = sphi %s994, %s994
    $region612: #{rnn_model_forward.6} parent=608 // loop_header_branch
      %1009 = sbr.rel (%p1007) target = $region616
    $region613: #{rnn_model_forward.6} parent=608 // loop_body
      %v1013 = vld [vmem:[%s1011] sm:%s1004]
      %1014 = vst [vmem:[%s1012] sm:%s1004] %v1013
    $region614: #{rnn_model_forward.6} parent=608 // loop_footer
      %s1010 = sadd.s32 1, %s1006
    $region615: #{rnn_model_forward.6} parent=608 // loop_footer_branch
      %1005 = sbr.rel target = $region611
    $region616: #{rnn_model_forward.6} parent=608 // loop_exit
      _
  $region609: #{rnn_model_forward.6} parent=0 // pred_fallthru
    _
  // Predicated region
  $region628: #{rnn_model_forward.6} parent=0 // pred_check
    _
  $region629: #{rnn_model_forward.6} parent=0 // pred_check_branch
    %1038 = sbr.rel (0) target = $region631
  $region630: #{rnn_model_forward.6} parent=0 // pred_region
    %1039 = vsyncadd %s995, 16
  $region631: #{rnn_model_forward.6} parent=0 // pred_fallthru
    _
  %s1040 = sadd.s32 %s13, 21
  %s1041 = sld [smem:[#allocation4 + %s1040]]
  %s1042 = scalar_lea.vmem %s1, %s1041
  %s1043 = scalar_lea.vmem %s2, 21
  %s1044 = scalar_lea.sflag [#allocation2], 21
  %p1046 = scmp.lt.u32.totalorder 1, 8
  %p1047 = pneg %p1046
  // Predicated region
  $region632: #{rnn_model_forward.6} parent=0 // pred_check
    _
  $region633: #{rnn_model_forward.6} parent=0 // pred_check_branch
    %1049 = sbr.rel (%p1046) target = $region635
  $region634: #{rnn_model_forward.6} parent=0 // pred_region
    %s1064 = sand.u32 1, 7
    %p1065 = scmp.eq.s32.totalorder %s1064, 0
    %p1066 = pneg %p1065
    // Predicated region
    $region647: #{rnn_model_forward.6} parent=634 // pred_check
      _
    $region648: #{rnn_model_forward.6} parent=634 // pred_check_branch
      %1068 = sbr.rel (%p1065) target = $region650
    $region649: #{rnn_model_forward.6} parent=634 // pred_region
      %s1069 = sand.u32 1, 7
      %s1070 = ssub.s32 1, %s1069
      %s1071 = scalar_lea.vmem %s1042, %s1070
      %s1072 = ssub.s32 1, %s1069
      %s1073 = scalar_lea.vmem %s1043, %s1072
      %s1074 = sshllo.u32 0, %s1069
      loop: start=0, step=1, limit=1
      $region651: #{rnn_model_forward.6} parent=649 // loop_pre_header
        _
      $region652: #{rnn_model_forward.6} parent=649 // loop_header
        %s1076 = sphi 0, %s1080
        %p1077 = scmp.ge.s32.totalorder %s1076, 1
        %s1081 = sphi %s1071, %s1071
        %s1082 = sphi %s1073, %s1073
      $region653: #{rnn_model_forward.6} parent=649 // loop_header_branch
        %1079 = sbr.rel (%p1077) target = $region657
      $region654: #{rnn_model_forward.6} parent=649 // loop_body
        %v1083 = vld [vmem:[%s1081] sm:%s1074]
        %1084 = vst [vmem:[%s1082] sm:%s1074] %v1083
      $region655: #{rnn_model_forward.6} parent=649 // loop_footer
        %s1080 = sadd.s32 1, %s1076
      $region656: #{rnn_model_forward.6} parent=649 // loop_footer_branch
        %1075 = sbr.rel target = $region652
      $region657: #{rnn_model_forward.6} parent=649 // loop_exit
        _
    $region650: #{rnn_model_forward.6} parent=634 // pred_fallthru
      _
  $region635: #{rnn_model_forward.6} parent=0 // pred_fallthru
    _
  // Predicated region
  $region636: #{rnn_model_forward.6} parent=0 // pred_check
    %p1050 = pneg %p1046
  $region637: #{rnn_model_forward.6} parent=0 // pred_check_branch
    %1052 = sbr.rel (%p1050) target = $region639
  $region638: #{rnn_model_forward.6} parent=0 // pred_region
    %s1053 = sshllo.u32 0, 1
    loop: start=0, step=1, limit=1
    $region640: #{rnn_model_forward.6} parent=638 // loop_pre_header
      _
    $region641: #{rnn_model_forward.6} parent=638 // loop_header
      %s1055 = sphi 0, %s1059
      %p1056 = scmp.ge.s32.totalorder %s1055, 1
      %s1060 = sphi %s1042, %s1042
      %s1061 = sphi %s1043, %s1043
    $region642: #{rnn_model_forward.6} parent=638 // loop_header_branch
      %1058 = sbr.rel (%p1056) target = $region646
    $region643: #{rnn_model_forward.6} parent=638 // loop_body
      %v1062 = vld [vmem:[%s1060] sm:%s1053]
      %1063 = vst [vmem:[%s1061] sm:%s1053] %v1062
    $region644: #{rnn_model_forward.6} parent=638 // loop_footer
      %s1059 = sadd.s32 1, %s1055
    $region645: #{rnn_model_forward.6} parent=638 // loop_footer_branch
      %1054 = sbr.rel target = $region641
    $region646: #{rnn_model_forward.6} parent=638 // loop_exit
      _
  $region639: #{rnn_model_forward.6} parent=0 // pred_fallthru
    _
  // Predicated region
  $region658: #{rnn_model_forward.6} parent=0 // pred_check
    _
  $region659: #{rnn_model_forward.6} parent=0 // pred_check_branch
    %1087 = sbr.rel (0) target = $region661
  $region660: #{rnn_model_forward.6} parent=0 // pred_region
    %1088 = vsyncadd %s1044, 16
  $region661: #{rnn_model_forward.6} parent=0 // pred_fallthru
    _
  %s1089 = sadd.s32 %s13, 22
  %s1090 = sld [smem:[#allocation4 + %s1089]]
  %s1091 = scalar_lea.vmem %s1, %s1090
  %s1092 = scalar_lea.vmem %s2, 22
  %s1093 = scalar_lea.sflag [#allocation2], 22
  %p1095 = scmp.lt.u32.totalorder 1, 8
  %p1096 = pneg %p1095
  // Predicated region
  $region662: #{rnn_model_forward.6} parent=0 // pred_check
    _
  $region663: #{rnn_model_forward.6} parent=0 // pred_check_branch
    %1098 = sbr.rel (%p1095) target = $region665
  $region664: #{rnn_model_forward.6} parent=0 // pred_region
    %s1113 = sand.u32 1, 7
    %p1114 = scmp.eq.s32.totalorder %s1113, 0
    %p1115 = pneg %p1114
    // Predicated region
    $region677: #{rnn_model_forward.6} parent=664 // pred_check
      _
    $region678: #{rnn_model_forward.6} parent=664 // pred_check_branch
      %1117 = sbr.rel (%p1114) target = $region680
    $region679: #{rnn_model_forward.6} parent=664 // pred_region
      %s1118 = sand.u32 1, 7
      %s1119 = ssub.s32 1, %s1118
      %s1120 = scalar_lea.vmem %s1091, %s1119
      %s1121 = ssub.s32 1, %s1118
      %s1122 = scalar_lea.vmem %s1092, %s1121
      %s1123 = sshllo.u32 0, %s1118
      loop: start=0, step=1, limit=1
      $region681: #{rnn_model_forward.6} parent=679 // loop_pre_header
        _
      $region682: #{rnn_model_forward.6} parent=679 // loop_header
        %s1125 = sphi 0, %s1129
        %p1126 = scmp.ge.s32.totalorder %s1125, 1
        %s1130 = sphi %s1120, %s1120
        %s1131 = sphi %s1122, %s1122
      $region683: #{rnn_model_forward.6} parent=679 // loop_header_branch
        %1128 = sbr.rel (%p1126) target = $region687
      $region684: #{rnn_model_forward.6} parent=679 // loop_body
        %v1132 = vld [vmem:[%s1130] sm:%s1123]
        %1133 = vst [vmem:[%s1131] sm:%s1123] %v1132
      $region685: #{rnn_model_forward.6} parent=679 // loop_footer
        %s1129 = sadd.s32 1, %s1125
      $region686: #{rnn_model_forward.6} parent=679 // loop_footer_branch
        %1124 = sbr.rel target = $region682
      $region687: #{rnn_model_forward.6} parent=679 // loop_exit
        _
    $region680: #{rnn_model_forward.6} parent=664 // pred_fallthru
      _
  $region665: #{rnn_model_forward.6} parent=0 // pred_fallthru
    _
  // Predicated region
  $region666: #{rnn_model_forward.6} parent=0 // pred_check
    %p1099 = pneg %p1095
  $region667: #{rnn_model_forward.6} parent=0 // pred_check_branch
    %1101 = sbr.rel (%p1099) target = $region669
  $region668: #{rnn_model_forward.6} parent=0 // pred_region
    %s1102 = sshllo.u32 0, 1
    loop: start=0, step=1, limit=1
    $region670: #{rnn_model_forward.6} parent=668 // loop_pre_header
      _
    $region671: #{rnn_model_forward.6} parent=668 // loop_header
      %s1104 = sphi 0, %s1108
      %p1105 = scmp.ge.s32.totalorder %s1104, 1
      %s1109 = sphi %s1091, %s1091
      %s1110 = sphi %s1092, %s1092
    $region672: #{rnn_model_forward.6} parent=668 // loop_header_branch
      %1107 = sbr.rel (%p1105) target = $region676
    $region673: #{rnn_model_forward.6} parent=668 // loop_body
      %v1111 = vld [vmem:[%s1109] sm:%s1102]
      %1112 = vst [vmem:[%s1110] sm:%s1102] %v1111
    $region674: #{rnn_model_forward.6} parent=668 // loop_footer
      %s1108 = sadd.s32 1, %s1104
    $region675: #{rnn_model_forward.6} parent=668 // loop_footer_branch
      %1103 = sbr.rel target = $region671
    $region676: #{rnn_model_forward.6} parent=668 // loop_exit
      _
  $region669: #{rnn_model_forward.6} parent=0 // pred_fallthru
    _
  // Predicated region
  $region688: #{rnn_model_forward.6} parent=0 // pred_check
    _
  $region689: #{rnn_model_forward.6} parent=0 // pred_check_branch
    %1136 = sbr.rel (0) target = $region691
  $region690: #{rnn_model_forward.6} parent=0 // pred_region
    %1137 = vsyncadd %s1093, 16
  $region691: #{rnn_model_forward.6} parent=0 // pred_fallthru
    _
  %s1138 = sadd.s32 %s13, 23
  %s1139 = sld [smem:[#allocation4 + %s1138]]
  %s1140 = scalar_lea.vmem %s1, %s1139
  %s1141 = scalar_lea.vmem %s2, 23
  %s1142 = scalar_lea.sflag [#allocation2], 23
  %p1144 = scmp.lt.u32.totalorder 1, 8
  %p1145 = pneg %p1144
  // Predicated region
  $region692: #{rnn_model_forward.6} parent=0 // pred_check
    _
  $region693: #{rnn_model_forward.6} parent=0 // pred_check_branch
    %1147 = sbr.rel (%p1144) target = $region695
  $region694: #{rnn_model_forward.6} parent=0 // pred_region
    %s1162 = sand.u32 1, 7
    %p1163 = scmp.eq.s32.totalorder %s1162, 0
    %p1164 = pneg %p1163
    // Predicated region
    $region707: #{rnn_model_forward.6} parent=694 // pred_check
      _
    $region708: #{rnn_model_forward.6} parent=694 // pred_check_branch
      %1166 = sbr.rel (%p1163) target = $region710
    $region709: #{rnn_model_forward.6} parent=694 // pred_region
      %s1167 = sand.u32 1, 7
      %s1168 = ssub.s32 1, %s1167
      %s1169 = scalar_lea.vmem %s1140, %s1168
      %s1170 = ssub.s32 1, %s1167
      %s1171 = scalar_lea.vmem %s1141, %s1170
      %s1172 = sshllo.u32 0, %s1167
      loop: start=0, step=1, limit=1
      $region711: #{rnn_model_forward.6} parent=709 // loop_pre_header
        _
      $region712: #{rnn_model_forward.6} parent=709 // loop_header
        %s1174 = sphi 0, %s1178
        %p1175 = scmp.ge.s32.totalorder %s1174, 1
        %s1179 = sphi %s1169, %s1169
        %s1180 = sphi %s1171, %s1171
      $region713: #{rnn_model_forward.6} parent=709 // loop_header_branch
        %1177 = sbr.rel (%p1175) target = $region717
      $region714: #{rnn_model_forward.6} parent=709 // loop_body
        %v1181 = vld [vmem:[%s1179] sm:%s1172]
        %1182 = vst [vmem:[%s1180] sm:%s1172] %v1181
      $region715: #{rnn_model_forward.6} parent=709 // loop_footer
        %s1178 = sadd.s32 1, %s1174
      $region716: #{rnn_model_forward.6} parent=709 // loop_footer_branch
        %1173 = sbr.rel target = $region712
      $region717: #{rnn_model_forward.6} parent=709 // loop_exit
        _
    $region710: #{rnn_model_forward.6} parent=694 // pred_fallthru
      _
  $region695: #{rnn_model_forward.6} parent=0 // pred_fallthru
    _
  // Predicated region
  $region696: #{rnn_model_forward.6} parent=0 // pred_check
    %p1148 = pneg %p1144
  $region697: #{rnn_model_forward.6} parent=0 // pred_check_branch
    %1150 = sbr.rel (%p1148) target = $region699
  $region698: #{rnn_model_forward.6} parent=0 // pred_region
    %s1151 = sshllo.u32 0, 1
    loop: start=0, step=1, limit=1
    $region700: #{rnn_model_forward.6} parent=698 // loop_pre_header
      _
    $region701: #{rnn_model_forward.6} parent=698 // loop_header
      %s1153 = sphi 0, %s1157
      %p1154 = scmp.ge.s32.totalorder %s1153, 1
      %s1158 = sphi %s1140, %s1140
      %s1159 = sphi %s1141, %s1141
    $region702: #{rnn_model_forward.6} parent=698 // loop_header_branch
      %1156 = sbr.rel (%p1154) target = $region706
    $region703: #{rnn_model_forward.6} parent=698 // loop_body
      %v1160 = vld [vmem:[%s1158] sm:%s1151]
      %1161 = vst [vmem:[%s1159] sm:%s1151] %v1160
    $region704: #{rnn_model_forward.6} parent=698 // loop_footer
      %s1157 = sadd.s32 1, %s1153
    $region705: #{rnn_model_forward.6} parent=698 // loop_footer_branch
      %1152 = sbr.rel target = $region701
    $region706: #{rnn_model_forward.6} parent=698 // loop_exit
      _
  $region699: #{rnn_model_forward.6} parent=0 // pred_fallthru
    _
  // Predicated region
  $region718: #{rnn_model_forward.6} parent=0 // pred_check
    _
  $region719: #{rnn_model_forward.6} parent=0 // pred_check_branch
    %1185 = sbr.rel (0) target = $region721
  $region720: #{rnn_model_forward.6} parent=0 // pred_region
    %1186 = vsyncadd %s1142, 16
  $region721: #{rnn_model_forward.6} parent=0 // pred_fallthru
    _
  %s1187 = sadd.s32 %s13, 24
  %s1188 = sld [smem:[#allocation4 + %s1187]]
  %s1189 = scalar_lea.vmem %s1, %s1188
  %s1190 = scalar_lea.vmem %s2, 24
  %s1191 = scalar_lea.sflag [#allocation2], 24
  %p1193 = scmp.lt.u32.totalorder 1, 8
  %p1194 = pneg %p1193
  // Predicated region
  $region722: #{rnn_model_forward.6} parent=0 // pred_check
    _
  $region723: #{rnn_model_forward.6} parent=0 // pred_check_branch
    %1196 = sbr.rel (%p1193) target = $region725
  $region724: #{rnn_model_forward.6} parent=0 // pred_region
    %s1211 = sand.u32 1, 7
    %p1212 = scmp.eq.s32.totalorder %s1211, 0
    %p1213 = pneg %p1212
    // Predicated region
    $region737: #{rnn_model_forward.6} parent=724 // pred_check
      _
    $region738: #{rnn_model_forward.6} parent=724 // pred_check_branch
      %1215 = sbr.rel (%p1212) target = $region740
    $region739: #{rnn_model_forward.6} parent=724 // pred_region
      %s1216 = sand.u32 1, 7
      %s1217 = ssub.s32 1, %s1216
      %s1218 = scalar_lea.vmem %s1189, %s1217
      %s1219 = ssub.s32 1, %s1216
      %s1220 = scalar_lea.vmem %s1190, %s1219
      %s1221 = sshllo.u32 0, %s1216
      loop: start=0, step=1, limit=1
      $region741: #{rnn_model_forward.6} parent=739 // loop_pre_header
        _
      $region742: #{rnn_model_forward.6} parent=739 // loop_header
        %s1223 = sphi 0, %s1227
        %p1224 = scmp.ge.s32.totalorder %s1223, 1
        %s1228 = sphi %s1218, %s1218
        %s1229 = sphi %s1220, %s1220
      $region743: #{rnn_model_forward.6} parent=739 // loop_header_branch
        %1226 = sbr.rel (%p1224) target = $region747
      $region744: #{rnn_model_forward.6} parent=739 // loop_body
        %v1230 = vld [vmem:[%s1228] sm:%s1221]
        %1231 = vst [vmem:[%s1229] sm:%s1221] %v1230
      $region745: #{rnn_model_forward.6} parent=739 // loop_footer
        %s1227 = sadd.s32 1, %s1223
      $region746: #{rnn_model_forward.6} parent=739 // loop_footer_branch
        %1222 = sbr.rel target = $region742
      $region747: #{rnn_model_forward.6} parent=739 // loop_exit
        _
    $region740: #{rnn_model_forward.6} parent=724 // pred_fallthru
      _
  $region725: #{rnn_model_forward.6} parent=0 // pred_fallthru
    _
  // Predicated region
  $region726: #{rnn_model_forward.6} parent=0 // pred_check
    %p1197 = pneg %p1193
  $region727: #{rnn_model_forward.6} parent=0 // pred_check_branch
    %1199 = sbr.rel (%p1197) target = $region729
  $region728: #{rnn_model_forward.6} parent=0 // pred_region
    %s1200 = sshllo.u32 0, 1
    loop: start=0, step=1, limit=1
    $region730: #{rnn_model_forward.6} parent=728 // loop_pre_header
      _
    $region731: #{rnn_model_forward.6} parent=728 // loop_header
      %s1202 = sphi 0, %s1206
      %p1203 = scmp.ge.s32.totalorder %s1202, 1
      %s1207 = sphi %s1189, %s1189
      %s1208 = sphi %s1190, %s1190
    $region732: #{rnn_model_forward.6} parent=728 // loop_header_branch
      %1205 = sbr.rel (%p1203) target = $region736
    $region733: #{rnn_model_forward.6} parent=728 // loop_body
      %v1209 = vld [vmem:[%s1207] sm:%s1200]
      %1210 = vst [vmem:[%s1208] sm:%s1200] %v1209
    $region734: #{rnn_model_forward.6} parent=728 // loop_footer
      %s1206 = sadd.s32 1, %s1202
    $region735: #{rnn_model_forward.6} parent=728 // loop_footer_branch
      %1201 = sbr.rel target = $region731
    $region736: #{rnn_model_forward.6} parent=728 // loop_exit
      _
  $region729: #{rnn_model_forward.6} parent=0 // pred_fallthru
    _
  // Predicated region
  $region748: #{rnn_model_forward.6} parent=0 // pred_check
    _
  $region749: #{rnn_model_forward.6} parent=0 // pred_check_branch
    %1234 = sbr.rel (0) target = $region751
  $region750: #{rnn_model_forward.6} parent=0 // pred_region
    %1235 = vsyncadd %s1191, 16
  $region751: #{rnn_model_forward.6} parent=0 // pred_fallthru
    _
  %s1236 = sadd.s32 %s13, 25
  %s1237 = sld [smem:[#allocation4 + %s1236]]
  %s1238 = scalar_lea.vmem %s1, %s1237
  %s1239 = scalar_lea.vmem %s2, 25
  %s1240 = scalar_lea.sflag [#allocation2], 25
  %p1242 = scmp.lt.u32.totalorder 1, 8
  %p1243 = pneg %p1242
  // Predicated region
  $region752: #{rnn_model_forward.6} parent=0 // pred_check
    _
  $region753: #{rnn_model_forward.6} parent=0 // pred_check_branch
    %1245 = sbr.rel (%p1242) target = $region755
  $region754: #{rnn_model_forward.6} parent=0 // pred_region
    %s1260 = sand.u32 1, 7
    %p1261 = scmp.eq.s32.totalorder %s1260, 0
    %p1262 = pneg %p1261
    // Predicated region
    $region767: #{rnn_model_forward.6} parent=754 // pred_check
      _
    $region768: #{rnn_model_forward.6} parent=754 // pred_check_branch
      %1264 = sbr.rel (%p1261) target = $region770
    $region769: #{rnn_model_forward.6} parent=754 // pred_region
      %s1265 = sand.u32 1, 7
      %s1266 = ssub.s32 1, %s1265
      %s1267 = scalar_lea.vmem %s1238, %s1266
      %s1268 = ssub.s32 1, %s1265
      %s1269 = scalar_lea.vmem %s1239, %s1268
      %s1270 = sshllo.u32 0, %s1265
      loop: start=0, step=1, limit=1
      $region771: #{rnn_model_forward.6} parent=769 // loop_pre_header
        _
      $region772: #{rnn_model_forward.6} parent=769 // loop_header
        %s1272 = sphi 0, %s1276
        %p1273 = scmp.ge.s32.totalorder %s1272, 1
        %s1277 = sphi %s1267, %s1267
        %s1278 = sphi %s1269, %s1269
      $region773: #{rnn_model_forward.6} parent=769 // loop_header_branch
        %1275 = sbr.rel (%p1273) target = $region777
      $region774: #{rnn_model_forward.6} parent=769 // loop_body
        %v1279 = vld [vmem:[%s1277] sm:%s1270]
        %1280 = vst [vmem:[%s1278] sm:%s1270] %v1279
      $region775: #{rnn_model_forward.6} parent=769 // loop_footer
        %s1276 = sadd.s32 1, %s1272
      $region776: #{rnn_model_forward.6} parent=769 // loop_footer_branch
        %1271 = sbr.rel target = $region772
      $region777: #{rnn_model_forward.6} parent=769 // loop_exit
        _
    $region770: #{rnn_model_forward.6} parent=754 // pred_fallthru
      _
  $region755: #{rnn_model_forward.6} parent=0 // pred_fallthru
    _
  // Predicated region
  $region756: #{rnn_model_forward.6} parent=0 // pred_check
    %p1246 = pneg %p1242
  $region757: #{rnn_model_forward.6} parent=0 // pred_check_branch
    %1248 = sbr.rel (%p1246) target = $region759
  $region758: #{rnn_model_forward.6} parent=0 // pred_region
    %s1249 = sshllo.u32 0, 1
    loop: start=0, step=1, limit=1
    $region760: #{rnn_model_forward.6} parent=758 // loop_pre_header
      _
    $region761: #{rnn_model_forward.6} parent=758 // loop_header
      %s1251 = sphi 0, %s1255
      %p1252 = scmp.ge.s32.totalorder %s1251, 1
      %s1256 = sphi %s1238, %s1238
      %s1257 = sphi %s1239, %s1239
    $region762: #{rnn_model_forward.6} parent=758 // loop_header_branch
      %1254 = sbr.rel (%p1252) target = $region766
    $region763: #{rnn_model_forward.6} parent=758 // loop_body
      %v1258 = vld [vmem:[%s1256] sm:%s1249]
      %1259 = vst [vmem:[%s1257] sm:%s1249] %v1258
    $region764: #{rnn_model_forward.6} parent=758 // loop_footer
      %s1255 = sadd.s32 1, %s1251
    $region765: #{rnn_model_forward.6} parent=758 // loop_footer_branch
      %1250 = sbr.rel target = $region761
    $region766: #{rnn_model_forward.6} parent=758 // loop_exit
      _
  $region759: #{rnn_model_forward.6} parent=0 // pred_fallthru
    _
  // Predicated region
  $region778: #{rnn_model_forward.6} parent=0 // pred_check
    _
  $region779: #{rnn_model_forward.6} parent=0 // pred_check_branch
    %1283 = sbr.rel (0) target = $region781
  $region780: #{rnn_model_forward.6} parent=0 // pred_region
    %1284 = vsyncadd %s1240, 16
  $region781: #{rnn_model_forward.6} parent=0 // pred_fallthru
    _
  %s1285 = sadd.s32 %s13, 26
  %s1286 = sld [smem:[#allocation4 + %s1285]]
  %s1287 = scalar_lea.vmem %s1, %s1286
  %s1288 = scalar_lea.vmem %s2, 26
  %s1289 = scalar_lea.sflag [#allocation2], 26
  %p1291 = scmp.lt.u32.totalorder 1, 8
  %p1292 = pneg %p1291
  // Predicated region
  $region782: #{rnn_model_forward.6} parent=0 // pred_check
    _
  $region783: #{rnn_model_forward.6} parent=0 // pred_check_branch
    %1294 = sbr.rel (%p1291) target = $region785
  $region784: #{rnn_model_forward.6} parent=0 // pred_region
    %s1309 = sand.u32 1, 7
    %p1310 = scmp.eq.s32.totalorder %s1309, 0
    %p1311 = pneg %p1310
    // Predicated region
    $region797: #{rnn_model_forward.6} parent=784 // pred_check
      _
    $region798: #{rnn_model_forward.6} parent=784 // pred_check_branch
      %1313 = sbr.rel (%p1310) target = $region800
    $region799: #{rnn_model_forward.6} parent=784 // pred_region
      %s1314 = sand.u32 1, 7
      %s1315 = ssub.s32 1, %s1314
      %s1316 = scalar_lea.vmem %s1287, %s1315
      %s1317 = ssub.s32 1, %s1314
      %s1318 = scalar_lea.vmem %s1288, %s1317
      %s1319 = sshllo.u32 0, %s1314
      loop: start=0, step=1, limit=1
      $region801: #{rnn_model_forward.6} parent=799 // loop_pre_header
        _
      $region802: #{rnn_model_forward.6} parent=799 // loop_header
        %s1321 = sphi 0, %s1325
        %p1322 = scmp.ge.s32.totalorder %s1321, 1
        %s1326 = sphi %s1316, %s1316
        %s1327 = sphi %s1318, %s1318
      $region803: #{rnn_model_forward.6} parent=799 // loop_header_branch
        %1324 = sbr.rel (%p1322) target = $region807
      $region804: #{rnn_model_forward.6} parent=799 // loop_body
        %v1328 = vld [vmem:[%s1326] sm:%s1319]
        %1329 = vst [vmem:[%s1327] sm:%s1319] %v1328
      $region805: #{rnn_model_forward.6} parent=799 // loop_footer
        %s1325 = sadd.s32 1, %s1321
      $region806: #{rnn_model_forward.6} parent=799 // loop_footer_branch
        %1320 = sbr.rel target = $region802
      $region807: #{rnn_model_forward.6} parent=799 // loop_exit
        _
    $region800: #{rnn_model_forward.6} parent=784 // pred_fallthru
      _
  $region785: #{rnn_model_forward.6} parent=0 // pred_fallthru
    _
  // Predicated region
  $region786: #{rnn_model_forward.6} parent=0 // pred_check
    %p1295 = pneg %p1291
  $region787: #{rnn_model_forward.6} parent=0 // pred_check_branch
    %1297 = sbr.rel (%p1295) target = $region789
  $region788: #{rnn_model_forward.6} parent=0 // pred_region
    %s1298 = sshllo.u32 0, 1
    loop: start=0, step=1, limit=1
    $region790: #{rnn_model_forward.6} parent=788 // loop_pre_header
      _
    $region791: #{rnn_model_forward.6} parent=788 // loop_header
      %s1300 = sphi 0, %s1304
      %p1301 = scmp.ge.s32.totalorder %s1300, 1
      %s1305 = sphi %s1287, %s1287
      %s1306 = sphi %s1288, %s1288
    $region792: #{rnn_model_forward.6} parent=788 // loop_header_branch
      %1303 = sbr.rel (%p1301) target = $region796
    $region793: #{rnn_model_forward.6} parent=788 // loop_body
      %v1307 = vld [vmem:[%s1305] sm:%s1298]
      %1308 = vst [vmem:[%s1306] sm:%s1298] %v1307
    $region794: #{rnn_model_forward.6} parent=788 // loop_footer
      %s1304 = sadd.s32 1, %s1300
    $region795: #{rnn_model_forward.6} parent=788 // loop_footer_branch
      %1299 = sbr.rel target = $region791
    $region796: #{rnn_model_forward.6} parent=788 // loop_exit
      _
  $region789: #{rnn_model_forward.6} parent=0 // pred_fallthru
    _
  // Predicated region
  $region808: #{rnn_model_forward.6} parent=0 // pred_check
    _
  $region809: #{rnn_model_forward.6} parent=0 // pred_check_branch
    %1332 = sbr.rel (0) target = $region811
  $region810: #{rnn_model_forward.6} parent=0 // pred_region
    %1333 = vsyncadd %s1289, 16
  $region811: #{rnn_model_forward.6} parent=0 // pred_fallthru
    _
  %s1334 = sadd.s32 %s13, 27
  %s1335 = sld [smem:[#allocation4 + %s1334]]
  %s1336 = scalar_lea.vmem %s1, %s1335
  %s1337 = scalar_lea.vmem %s2, 27
  %s1338 = scalar_lea.sflag [#allocation2], 27
  %p1340 = scmp.lt.u32.totalorder 1, 8
  %p1341 = pneg %p1340
  // Predicated region
  $region812: #{rnn_model_forward.6} parent=0 // pred_check
    _
  $region813: #{rnn_model_forward.6} parent=0 // pred_check_branch
    %1343 = sbr.rel (%p1340) target = $region815
  $region814: #{rnn_model_forward.6} parent=0 // pred_region
    %s1358 = sand.u32 1, 7
    %p1359 = scmp.eq.s32.totalorder %s1358, 0
    %p1360 = pneg %p1359
    // Predicated region
    $region827: #{rnn_model_forward.6} parent=814 // pred_check
      _
    $region828: #{rnn_model_forward.6} parent=814 // pred_check_branch
      %1362 = sbr.rel (%p1359) target = $region830
    $region829: #{rnn_model_forward.6} parent=814 // pred_region
      %s1363 = sand.u32 1, 7
      %s1364 = ssub.s32 1, %s1363
      %s1365 = scalar_lea.vmem %s1336, %s1364
      %s1366 = ssub.s32 1, %s1363
      %s1367 = scalar_lea.vmem %s1337, %s1366
      %s1368 = sshllo.u32 0, %s1363
      loop: start=0, step=1, limit=1
      $region831: #{rnn_model_forward.6} parent=829 // loop_pre_header
        _
      $region832: #{rnn_model_forward.6} parent=829 // loop_header
        %s1370 = sphi 0, %s1374
        %p1371 = scmp.ge.s32.totalorder %s1370, 1
        %s1375 = sphi %s1365, %s1365
        %s1376 = sphi %s1367, %s1367
      $region833: #{rnn_model_forward.6} parent=829 // loop_header_branch
        %1373 = sbr.rel (%p1371) target = $region837
      $region834: #{rnn_model_forward.6} parent=829 // loop_body
        %v1377 = vld [vmem:[%s1375] sm:%s1368]
        %1378 = vst [vmem:[%s1376] sm:%s1368] %v1377
      $region835: #{rnn_model_forward.6} parent=829 // loop_footer
        %s1374 = sadd.s32 1, %s1370
      $region836: #{rnn_model_forward.6} parent=829 // loop_footer_branch
        %1369 = sbr.rel target = $region832
      $region837: #{rnn_model_forward.6} parent=829 // loop_exit
        _
    $region830: #{rnn_model_forward.6} parent=814 // pred_fallthru
      _
  $region815: #{rnn_model_forward.6} parent=0 // pred_fallthru
    _
  // Predicated region
  $region816: #{rnn_model_forward.6} parent=0 // pred_check
    %p1344 = pneg %p1340
  $region817: #{rnn_model_forward.6} parent=0 // pred_check_branch
    %1346 = sbr.rel (%p1344) target = $region819
  $region818: #{rnn_model_forward.6} parent=0 // pred_region
    %s1347 = sshllo.u32 0, 1
    loop: start=0, step=1, limit=1
    $region820: #{rnn_model_forward.6} parent=818 // loop_pre_header
      _
    $region821: #{rnn_model_forward.6} parent=818 // loop_header
      %s1349 = sphi 0, %s1353
      %p1350 = scmp.ge.s32.totalorder %s1349, 1
      %s1354 = sphi %s1336, %s1336
      %s1355 = sphi %s1337, %s1337
    $region822: #{rnn_model_forward.6} parent=818 // loop_header_branch
      %1352 = sbr.rel (%p1350) target = $region826
    $region823: #{rnn_model_forward.6} parent=818 // loop_body
      %v1356 = vld [vmem:[%s1354] sm:%s1347]
      %1357 = vst [vmem:[%s1355] sm:%s1347] %v1356
    $region824: #{rnn_model_forward.6} parent=818 // loop_footer
      %s1353 = sadd.s32 1, %s1349
    $region825: #{rnn_model_forward.6} parent=818 // loop_footer_branch
      %1348 = sbr.rel target = $region821
    $region826: #{rnn_model_forward.6} parent=818 // loop_exit
      _
  $region819: #{rnn_model_forward.6} parent=0 // pred_fallthru
    _
  // Predicated region
  $region838: #{rnn_model_forward.6} parent=0 // pred_check
    _
  $region839: #{rnn_model_forward.6} parent=0 // pred_check_branch
    %1381 = sbr.rel (0) target = $region841
  $region840: #{rnn_model_forward.6} parent=0 // pred_region
    %1382 = vsyncadd %s1338, 16
  $region841: #{rnn_model_forward.6} parent=0 // pred_fallthru
    _
  %s1383 = sadd.s32 %s13, 28
  %s1384 = sld [smem:[#allocation4 + %s1383]]
  %s1385 = scalar_lea.vmem %s1, %s1384
  %s1386 = scalar_lea.vmem %s2, 28
  %s1387 = scalar_lea.sflag [#allocation2], 28
  %p1389 = scmp.lt.u32.totalorder 1, 8
  %p1390 = pneg %p1389
  // Predicated region
  $region842: #{rnn_model_forward.6} parent=0 // pred_check
    _
  $region843: #{rnn_model_forward.6} parent=0 // pred_check_branch
    %1392 = sbr.rel (%p1389) target = $region845
  $region844: #{rnn_model_forward.6} parent=0 // pred_region
    %s1407 = sand.u32 1, 7
    %p1408 = scmp.eq.s32.totalorder %s1407, 0
    %p1409 = pneg %p1408
    // Predicated region
    $region857: #{rnn_model_forward.6} parent=844 // pred_check
      _
    $region858: #{rnn_model_forward.6} parent=844 // pred_check_branch
      %1411 = sbr.rel (%p1408) target = $region860
    $region859: #{rnn_model_forward.6} parent=844 // pred_region
      %s1412 = sand.u32 1, 7
      %s1413 = ssub.s32 1, %s1412
      %s1414 = scalar_lea.vmem %s1385, %s1413
      %s1415 = ssub.s32 1, %s1412
      %s1416 = scalar_lea.vmem %s1386, %s1415
      %s1417 = sshllo.u32 0, %s1412
      loop: start=0, step=1, limit=1
      $region861: #{rnn_model_forward.6} parent=859 // loop_pre_header
        _
      $region862: #{rnn_model_forward.6} parent=859 // loop_header
        %s1419 = sphi 0, %s1423
        %p1420 = scmp.ge.s32.totalorder %s1419, 1
        %s1424 = sphi %s1414, %s1414
        %s1425 = sphi %s1416, %s1416
      $region863: #{rnn_model_forward.6} parent=859 // loop_header_branch
        %1422 = sbr.rel (%p1420) target = $region867
      $region864: #{rnn_model_forward.6} parent=859 // loop_body
        %v1426 = vld [vmem:[%s1424] sm:%s1417]
        %1427 = vst [vmem:[%s1425] sm:%s1417] %v1426
      $region865: #{rnn_model_forward.6} parent=859 // loop_footer
        %s1423 = sadd.s32 1, %s1419
      $region866: #{rnn_model_forward.6} parent=859 // loop_footer_branch
        %1418 = sbr.rel target = $region862
      $region867: #{rnn_model_forward.6} parent=859 // loop_exit
        _
    $region860: #{rnn_model_forward.6} parent=844 // pred_fallthru
      _
  $region845: #{rnn_model_forward.6} parent=0 // pred_fallthru
    _
  // Predicated region
  $region846: #{rnn_model_forward.6} parent=0 // pred_check
    %p1393 = pneg %p1389
  $region847: #{rnn_model_forward.6} parent=0 // pred_check_branch
    %1395 = sbr.rel (%p1393) target = $region849
  $region848: #{rnn_model_forward.6} parent=0 // pred_region
    %s1396 = sshllo.u32 0, 1
    loop: start=0, step=1, limit=1
    $region850: #{rnn_model_forward.6} parent=848 // loop_pre_header
      _
    $region851: #{rnn_model_forward.6} parent=848 // loop_header
      %s1398 = sphi 0, %s1402
      %p1399 = scmp.ge.s32.totalorder %s1398, 1
      %s1403 = sphi %s1385, %s1385
      %s1404 = sphi %s1386, %s1386
    $region852: #{rnn_model_forward.6} parent=848 // loop_header_branch
      %1401 = sbr.rel (%p1399) target = $region856
    $region853: #{rnn_model_forward.6} parent=848 // loop_body
      %v1405 = vld [vmem:[%s1403] sm:%s1396]
      %1406 = vst [vmem:[%s1404] sm:%s1396] %v1405
    $region854: #{rnn_model_forward.6} parent=848 // loop_footer
      %s1402 = sadd.s32 1, %s1398
    $region855: #{rnn_model_forward.6} parent=848 // loop_footer_branch
      %1397 = sbr.rel target = $region851
    $region856: #{rnn_model_forward.6} parent=848 // loop_exit
      _
  $region849: #{rnn_model_forward.6} parent=0 // pred_fallthru
    _
  // Predicated region
  $region868: #{rnn_model_forward.6} parent=0 // pred_check
    _
  $region869: #{rnn_model_forward.6} parent=0 // pred_check_branch
    %1430 = sbr.rel (0) target = $region871
  $region870: #{rnn_model_forward.6} parent=0 // pred_region
    %1431 = vsyncadd %s1387, 16
  $region871: #{rnn_model_forward.6} parent=0 // pred_fallthru
    _
  %s1432 = sadd.s32 %s13, 29
  %s1433 = sld [smem:[#allocation4 + %s1432]]
  %s1434 = scalar_lea.vmem %s1, %s1433
  %s1435 = scalar_lea.vmem %s2, 29
  %s1436 = scalar_lea.sflag [#allocation2], 29
  %p1438 = scmp.lt.u32.totalorder 1, 8
  %p1439 = pneg %p1438
  // Predicated region
  $region872: #{rnn_model_forward.6} parent=0 // pred_check
    _
  $region873: #{rnn_model_forward.6} parent=0 // pred_check_branch
    %1441 = sbr.rel (%p1438) target = $region875
  $region874: #{rnn_model_forward.6} parent=0 // pred_region
    %s1456 = sand.u32 1, 7
    %p1457 = scmp.eq.s32.totalorder %s1456, 0
    %p1458 = pneg %p1457
    // Predicated region
    $region887: #{rnn_model_forward.6} parent=874 // pred_check
      _
    $region888: #{rnn_model_forward.6} parent=874 // pred_check_branch
      %1460 = sbr.rel (%p1457) target = $region890
    $region889: #{rnn_model_forward.6} parent=874 // pred_region
      %s1461 = sand.u32 1, 7
      %s1462 = ssub.s32 1, %s1461
      %s1463 = scalar_lea.vmem %s1434, %s1462
      %s1464 = ssub.s32 1, %s1461
      %s1465 = scalar_lea.vmem %s1435, %s1464
      %s1466 = sshllo.u32 0, %s1461
      loop: start=0, step=1, limit=1
      $region891: #{rnn_model_forward.6} parent=889 // loop_pre_header
        _
      $region892: #{rnn_model_forward.6} parent=889 // loop_header
        %s1468 = sphi 0, %s1472
        %p1469 = scmp.ge.s32.totalorder %s1468, 1
        %s1473 = sphi %s1463, %s1463
        %s1474 = sphi %s1465, %s1465
      $region893: #{rnn_model_forward.6} parent=889 // loop_header_branch
        %1471 = sbr.rel (%p1469) target = $region897
      $region894: #{rnn_model_forward.6} parent=889 // loop_body
        %v1475 = vld [vmem:[%s1473] sm:%s1466]
        %1476 = vst [vmem:[%s1474] sm:%s1466] %v1475
      $region895: #{rnn_model_forward.6} parent=889 // loop_footer
        %s1472 = sadd.s32 1, %s1468
      $region896: #{rnn_model_forward.6} parent=889 // loop_footer_branch
        %1467 = sbr.rel target = $region892
      $region897: #{rnn_model_forward.6} parent=889 // loop_exit
        _
    $region890: #{rnn_model_forward.6} parent=874 // pred_fallthru
      _
  $region875: #{rnn_model_forward.6} parent=0 // pred_fallthru
    _
  // Predicated region
  $region876: #{rnn_model_forward.6} parent=0 // pred_check
    %p1442 = pneg %p1438
  $region877: #{rnn_model_forward.6} parent=0 // pred_check_branch
    %1444 = sbr.rel (%p1442) target = $region879
  $region878: #{rnn_model_forward.6} parent=0 // pred_region
    %s1445 = sshllo.u32 0, 1
    loop: start=0, step=1, limit=1
    $region880: #{rnn_model_forward.6} parent=878 // loop_pre_header
      _
    $region881: #{rnn_model_forward.6} parent=878 // loop_header
      %s1447 = sphi 0, %s1451
      %p1448 = scmp.ge.s32.totalorder %s1447, 1
      %s1452 = sphi %s1434, %s1434
      %s1453 = sphi %s1435, %s1435
    $region882: #{rnn_model_forward.6} parent=878 // loop_header_branch
      %1450 = sbr.rel (%p1448) target = $region886
    $region883: #{rnn_model_forward.6} parent=878 // loop_body
      %v1454 = vld [vmem:[%s1452] sm:%s1445]
      %1455 = vst [vmem:[%s1453] sm:%s1445] %v1454
    $region884: #{rnn_model_forward.6} parent=878 // loop_footer
      %s1451 = sadd.s32 1, %s1447
    $region885: #{rnn_model_forward.6} parent=878 // loop_footer_branch
      %1446 = sbr.rel target = $region881
    $region886: #{rnn_model_forward.6} parent=878 // loop_exit
      _
  $region879: #{rnn_model_forward.6} parent=0 // pred_fallthru
    _
  // Predicated region
  $region898: #{rnn_model_forward.6} parent=0 // pred_check
    _
  $region899: #{rnn_model_forward.6} parent=0 // pred_check_branch
    %1479 = sbr.rel (0) target = $region901
  $region900: #{rnn_model_forward.6} parent=0 // pred_region
    %1480 = vsyncadd %s1436, 16
  $region901: #{rnn_model_forward.6} parent=0 // pred_fallthru
    _
  %s1481 = sadd.s32 %s13, 30
  %s1482 = sld [smem:[#allocation4 + %s1481]]
  %s1483 = scalar_lea.vmem %s1, %s1482
  %s1484 = scalar_lea.vmem %s2, 30
  %s1485 = scalar_lea.sflag [#allocation2], 30
  %p1487 = scmp.lt.u32.totalorder 1, 8
  %p1488 = pneg %p1487
  // Predicated region
  $region902: #{rnn_model_forward.6} parent=0 // pred_check
    _
  $region903: #{rnn_model_forward.6} parent=0 // pred_check_branch
    %1490 = sbr.rel (%p1487) target = $region905
  $region904: #{rnn_model_forward.6} parent=0 // pred_region
    %s1505 = sand.u32 1, 7
    %p1506 = scmp.eq.s32.totalorder %s1505, 0
    %p1507 = pneg %p1506
    // Predicated region
    $region917: #{rnn_model_forward.6} parent=904 // pred_check
      _
    $region918: #{rnn_model_forward.6} parent=904 // pred_check_branch
      %1509 = sbr.rel (%p1506) target = $region920
    $region919: #{rnn_model_forward.6} parent=904 // pred_region
      %s1510 = sand.u32 1, 7
      %s1511 = ssub.s32 1, %s1510
      %s1512 = scalar_lea.vmem %s1483, %s1511
      %s1513 = ssub.s32 1, %s1510
      %s1514 = scalar_lea.vmem %s1484, %s1513
      %s1515 = sshllo.u32 0, %s1510
      loop: start=0, step=1, limit=1
      $region921: #{rnn_model_forward.6} parent=919 // loop_pre_header
        _
      $region922: #{rnn_model_forward.6} parent=919 // loop_header
        %s1517 = sphi 0, %s1521
        %p1518 = scmp.ge.s32.totalorder %s1517, 1
        %s1522 = sphi %s1512, %s1512
        %s1523 = sphi %s1514, %s1514
      $region923: #{rnn_model_forward.6} parent=919 // loop_header_branch
        %1520 = sbr.rel (%p1518) target = $region927
      $region924: #{rnn_model_forward.6} parent=919 // loop_body
        %v1524 = vld [vmem:[%s1522] sm:%s1515]
        %1525 = vst [vmem:[%s1523] sm:%s1515] %v1524
      $region925: #{rnn_model_forward.6} parent=919 // loop_footer
        %s1521 = sadd.s32 1, %s1517
      $region926: #{rnn_model_forward.6} parent=919 // loop_footer_branch
        %1516 = sbr.rel target = $region922
      $region927: #{rnn_model_forward.6} parent=919 // loop_exit
        _
    $region920: #{rnn_model_forward.6} parent=904 // pred_fallthru
      _
  $region905: #{rnn_model_forward.6} parent=0 // pred_fallthru
    _
  // Predicated region
  $region906: #{rnn_model_forward.6} parent=0 // pred_check
    %p1491 = pneg %p1487
  $region907: #{rnn_model_forward.6} parent=0 // pred_check_branch
    %1493 = sbr.rel (%p1491) target = $region909
  $region908: #{rnn_model_forward.6} parent=0 // pred_region
    %s1494 = sshllo.u32 0, 1
    loop: start=0, step=1, limit=1
    $region910: #{rnn_model_forward.6} parent=908 // loop_pre_header
      _
    $region911: #{rnn_model_forward.6} parent=908 // loop_header
      %s1496 = sphi 0, %s1500
      %p1497 = scmp.ge.s32.totalorder %s1496, 1
      %s1501 = sphi %s1483, %s1483
      %s1502 = sphi %s1484, %s1484
    $region912: #{rnn_model_forward.6} parent=908 // loop_header_branch
      %1499 = sbr.rel (%p1497) target = $region916
    $region913: #{rnn_model_forward.6} parent=908 // loop_body
      %v1503 = vld [vmem:[%s1501] sm:%s1494]
      %1504 = vst [vmem:[%s1502] sm:%s1494] %v1503
    $region914: #{rnn_model_forward.6} parent=908 // loop_footer
      %s1500 = sadd.s32 1, %s1496
    $region915: #{rnn_model_forward.6} parent=908 // loop_footer_branch
      %1495 = sbr.rel target = $region911
    $region916: #{rnn_model_forward.6} parent=908 // loop_exit
      _
  $region909: #{rnn_model_forward.6} parent=0 // pred_fallthru
    _
  // Predicated region
  $region928: #{rnn_model_forward.6} parent=0 // pred_check
    _
  $region929: #{rnn_model_forward.6} parent=0 // pred_check_branch
    %1528 = sbr.rel (0) target = $region931
  $region930: #{rnn_model_forward.6} parent=0 // pred_region
    %1529 = vsyncadd %s1485, 16
  $region931: #{rnn_model_forward.6} parent=0 // pred_fallthru
    _
  %s1530 = sadd.s32 %s13, 31
  %s1531 = sld [smem:[#allocation4 + %s1530]]
  %s1532 = scalar_lea.vmem %s1, %s1531
  %s1533 = scalar_lea.vmem %s2, 31
  %s1534 = scalar_lea.sflag [#allocation2], 31
  %p1536 = scmp.lt.u32.totalorder 1, 8
  %p1537 = pneg %p1536
  // Predicated region
  $region932: #{rnn_model_forward.6} parent=0 // pred_check
    _
  $region933: #{rnn_model_forward.6} parent=0 // pred_check_branch
    %1539 = sbr.rel (%p1536) target = $region935
  $region934: #{rnn_model_forward.6} parent=0 // pred_region
    %s1554 = sand.u32 1, 7
    %p1555 = scmp.eq.s32.totalorder %s1554, 0
    %p1556 = pneg %p1555
    // Predicated region
    $region947: #{rnn_model_forward.6} parent=934 // pred_check
      _
    $region948: #{rnn_model_forward.6} parent=934 // pred_check_branch
      %1558 = sbr.rel (%p1555) target = $region950
    $region949: #{rnn_model_forward.6} parent=934 // pred_region
      %s1559 = sand.u32 1, 7
      %s1560 = ssub.s32 1, %s1559
      %s1561 = scalar_lea.vmem %s1532, %s1560
      %s1562 = ssub.s32 1, %s1559
      %s1563 = scalar_lea.vmem %s1533, %s1562
      %s1564 = sshllo.u32 0, %s1559
      loop: start=0, step=1, limit=1
      $region951: #{rnn_model_forward.6} parent=949 // loop_pre_header
        _
      $region952: #{rnn_model_forward.6} parent=949 // loop_header
        %s1566 = sphi 0, %s1570
        %p1567 = scmp.ge.s32.totalorder %s1566, 1
        %s1571 = sphi %s1561, %s1561
        %s1572 = sphi %s1563, %s1563
      $region953: #{rnn_model_forward.6} parent=949 // loop_header_branch
        %1569 = sbr.rel (%p1567) target = $region957
      $region954: #{rnn_model_forward.6} parent=949 // loop_body
        %v1573 = vld [vmem:[%s1571] sm:%s1564]
        %1574 = vst [vmem:[%s1572] sm:%s1564] %v1573
      $region955: #{rnn_model_forward.6} parent=949 // loop_footer
        %s1570 = sadd.s32 1, %s1566
      $region956: #{rnn_model_forward.6} parent=949 // loop_footer_branch
        %1565 = sbr.rel target = $region952
      $region957: #{rnn_model_forward.6} parent=949 // loop_exit
        _
    $region950: #{rnn_model_forward.6} parent=934 // pred_fallthru
      _
  $region935: #{rnn_model_forward.6} parent=0 // pred_fallthru
    _
  // Predicated region
  $region936: #{rnn_model_forward.6} parent=0 // pred_check
    %p1540 = pneg %p1536
  $region937: #{rnn_model_forward.6} parent=0 // pred_check_branch
    %1542 = sbr.rel (%p1540) target = $region939
  $region938: #{rnn_model_forward.6} parent=0 // pred_region
    %s1543 = sshllo.u32 0, 1
    loop: start=0, step=1, limit=1
    $region940: #{rnn_model_forward.6} parent=938 // loop_pre_header
      _
    $region941: #{rnn_model_forward.6} parent=938 // loop_header
      %s1545 = sphi 0, %s1549
      %p1546 = scmp.ge.s32.totalorder %s1545, 1
      %s1550 = sphi %s1532, %s1532
      %s1551 = sphi %s1533, %s1533
    $region942: #{rnn_model_forward.6} parent=938 // loop_header_branch
      %1548 = sbr.rel (%p1546) target = $region946
    $region943: #{rnn_model_forward.6} parent=938 // loop_body
      %v1552 = vld [vmem:[%s1550] sm:%s1543]
      %1553 = vst [vmem:[%s1551] sm:%s1543] %v1552
    $region944: #{rnn_model_forward.6} parent=938 // loop_footer
      %s1549 = sadd.s32 1, %s1545
    $region945: #{rnn_model_forward.6} parent=938 // loop_footer_branch
      %1544 = sbr.rel target = $region941
    $region946: #{rnn_model_forward.6} parent=938 // loop_exit
      _
  $region939: #{rnn_model_forward.6} parent=0 // pred_fallthru
    _
  // Predicated region
  $region958: #{rnn_model_forward.6} parent=0 // pred_check
    _
  $region959: #{rnn_model_forward.6} parent=0 // pred_check_branch
    %1577 = sbr.rel (0) target = $region961
  $region960: #{rnn_model_forward.6} parent=0 // pred_region
    %1578 = vsyncadd %s1534, 16
  $region961: #{rnn_model_forward.6} parent=0 // pred_fallthru
    _
  %s1579 = smul.u32 1, 1
  %s1580 = sshll.u32 %s1579, 4
  %1581 = dma.done [#allocation2], %s1580
  %s1582 = sshll.u32 %s1579, 4
  %1583 = dma.done %s64, %s1582
  %s1584 = sshll.u32 %s1579, 4
  %1585 = dma.done %s113, %s1584
  %s1586 = sshll.u32 %s1579, 4
  %1587 = dma.done %s162, %s1586
  %s1588 = sshll.u32 %s1579, 4
  %1589 = dma.done %s211, %s1588
  %s1590 = sshll.u32 %s1579, 4
  %1591 = dma.done %s260, %s1590
  %s1592 = sshll.u32 %s1579, 4
  %1593 = dma.done %s309, %s1592
  %s1594 = sshll.u32 %s1579, 4
  %1595 = dma.done %s358, %s1594
  %s1596 = sshll.u32 %s1579, 4
  %1597 = dma.done %s407, %s1596
  %s1598 = sshll.u32 %s1579, 4
  %1599 = dma.done %s456, %s1598
  %s1600 = sshll.u32 %s1579, 4
  %1601 = dma.done %s505, %s1600
  %s1602 = sshll.u32 %s1579, 4
  %1603 = dma.done %s554, %s1602
  %s1604 = sshll.u32 %s1579, 4
  %1605 = dma.done %s603, %s1604
  %s1606 = sshll.u32 %s1579, 4
  %1607 = dma.done %s652, %s1606
  %s1608 = sshll.u32 %s1579, 4
  %1609 = dma.done %s701, %s1608
  %s1610 = sshll.u32 %s1579, 4
  %1611 = dma.done %s750, %s1610
  %s1612 = sshll.u32 %s1579, 4
  %1613 = dma.done %s799, %s1612
  %s1614 = sshll.u32 %s1579, 4
  %1615 = dma.done %s848, %s1614
  %s1616 = sshll.u32 %s1579, 4
  %1617 = dma.done %s897, %s1616
  %s1618 = sshll.u32 %s1579, 4
  %1619 = dma.done %s946, %s1618
  %s1620 = sshll.u32 %s1579, 4
  %1621 = dma.done %s995, %s1620
  %s1622 = sshll.u32 %s1579, 4
  %1623 = dma.done %s1044, %s1622
  %s1624 = sshll.u32 %s1579, 4
  %1625 = dma.done %s1093, %s1624
  %s1626 = sshll.u32 %s1579, 4
  %1627 = dma.done %s1142, %s1626
  %s1628 = sshll.u32 %s1579, 4
  %1629 = dma.done %s1191, %s1628
  %s1630 = sshll.u32 %s1579, 4
  %1631 = dma.done %s1240, %s1630
  %s1632 = sshll.u32 %s1579, 4
  %1633 = dma.done %s1289, %s1632
  %s1634 = sshll.u32 %s1579, 4
  %1635 = dma.done %s1338, %s1634
  %s1636 = sshll.u32 %s1579, 4
  %1637 = dma.done %s1387, %s1636
  %s1638 = sshll.u32 %s1579, 4
  %1639 = dma.done %s1436, %s1638
  %s1640 = sshll.u32 %s1579, 4
  %1641 = dma.done %s1485, %s1640
  %s1642 = sshll.u32 %s1579, 4
  %1643 = dma.done %s1534, %s1642
  // Predicated region
  $region962: #{rnn_model_forward.6} parent=0 // pred_check
    _
  $region963: #{rnn_model_forward.6} parent=0 // pred_check_branch
    %1645 = sbr.rel (0) target = $region965
  $region964: #{rnn_model_forward.6} parent=0 // pred_region
    _
  $region965: #{rnn_model_forward.6} parent=0 // pred_fallthru
    _
  // Predicated region
  $region966: #{rnn_model_forward.6} parent=0 // pred_check
    _
  $region967: #{rnn_model_forward.6} parent=0 // pred_check_branch
    %1647 = sbr.rel (0) target = $region969
  $region968: #{rnn_model_forward.6} parent=0 // pred_region
    _
  $region969: #{rnn_model_forward.6} parent=0 // pred_fallthru
    _
  %1648 = vsyncmov [#allocation2]
  %s1649 = vpop.sfrf %1648
  %p1650 = scmp.eq.s32.totalorder %s1649, 0
  %p1651 = pneg %p1650
  %1653 = shalt.err (%p1651)
  %s1654 = scalar_lea.sflag [#allocation2], 1
  %1655 = vsyncmov %s1654
  %s1656 = vpop.sfrf %1655
  %p1657 = scmp.eq.s32.totalorder %s1656, 0
  %p1658 = pneg %p1657
  %1660 = shalt.err (%p1658)
  %s1661 = scalar_lea.sflag [#allocation2], 2
  %1662 = vsyncmov %s1661
  %s1663 = vpop.sfrf %1662
  %p1664 = scmp.eq.s32.totalorder %s1663, 0
  %p1665 = pneg %p1664
  %1667 = shalt.err (%p1665)
  %s1668 = scalar_lea.sflag [#allocation2], 3
  %1669 = vsyncmov %s1668
  %s1670 = vpop.sfrf %1669
  %p1671 = scmp.eq.s32.totalorder %s1670, 0
  %p1672 = pneg %p1671
  %1674 = shalt.err (%p1672)
  %s1675 = scalar_lea.sflag [#allocation2], 4
  %1676 = vsyncmov %s1675
  %s1677 = vpop.sfrf %1676
  %p1678 = scmp.eq.s32.totalorder %s1677, 0
  %p1679 = pneg %p1678
  %1681 = shalt.err (%p1679)
  %s1682 = scalar_lea.sflag [#allocation2], 5
  %1683 = vsyncmov %s1682
  %s1684 = vpop.sfrf %1683
  %p1685 = scmp.eq.s32.totalorder %s1684, 0
  %p1686 = pneg %p1685
  %1688 = shalt.err (%p1686)
  %s1689 = scalar_lea.sflag [#allocation2], 6
  %1690 = vsyncmov %s1689
  %s1691 = vpop.sfrf %1690
  %p1692 = scmp.eq.s32.totalorder %s1691, 0
  %p1693 = pneg %p1692
  %1695 = shalt.err (%p1693)
  %s1696 = scalar_lea.sflag [#allocation2], 7
  %1697 = vsyncmov %s1696
  %s1698 = vpop.sfrf %1697
  %p1699 = scmp.eq.s32.totalorder %s1698, 0
  %p1700 = pneg %p1699
  %1702 = shalt.err (%p1700)
  %s1703 = scalar_lea.sflag [#allocation2], 8
  %1704 = vsyncmov %s1703
  %s1705 = vpop.sfrf %1704
  %p1706 = scmp.eq.s32.totalorder %s1705, 0
  %p1707 = pneg %p1706
  %1709 = shalt.err (%p1707)
  %s1710 = scalar_lea.sflag [#allocation2], 9
  %1711 = vsyncmov %s1710
  %s1712 = vpop.sfrf %1711
  %p1713 = scmp.eq.s32.totalorder %s1712, 0
  %p1714 = pneg %p1713
  %1716 = shalt.err (%p1714)
  %s1717 = scalar_lea.sflag [#allocation2], 10
  %1718 = vsyncmov %s1717
  %s1719 = vpop.sfrf %1718
  %p1720 = scmp.eq.s32.totalorder %s1719, 0
  %p1721 = pneg %p1720
  %1723 = shalt.err (%p1721)
  %s1724 = scalar_lea.sflag [#allocation2], 11
  %1725 = vsyncmov %s1724
  %s1726 = vpop.sfrf %1725
  %p1727 = scmp.eq.s32.totalorder %s1726, 0
  %p1728 = pneg %p1727
  %1730 = shalt.err (%p1728)
  %s1731 = scalar_lea.sflag [#allocation2], 12
  %1732 = vsyncmov %s1731
  %s1733 = vpop.sfrf %1732
  %p1734 = scmp.eq.s32.totalorder %s1733, 0
  %p1735 = pneg %p1734
  %1737 = shalt.err (%p1735)
  %s1738 = scalar_lea.sflag [#allocation2], 13
  %1739 = vsyncmov %s1738
  %s1740 = vpop.sfrf %1739
  %p1741 = scmp.eq.s32.totalorder %s1740, 0
  %p1742 = pneg %p1741
  %1744 = shalt.err (%p1742)
  %s1745 = scalar_lea.sflag [#allocation2], 14
  %1746 = vsyncmov %s1745
  %s1747 = vpop.sfrf %1746
  %p1748 = scmp.eq.s32.totalorder %s1747, 0
  %p1749 = pneg %p1748
  %1751 = shalt.err (%p1749)
  %s1752 = scalar_lea.sflag [#allocation2], 15
  %1753 = vsyncmov %s1752
  %s1754 = vpop.sfrf %1753
  %p1755 = scmp.eq.s32.totalorder %s1754, 0
  %p1756 = pneg %p1755
  %1758 = shalt.err (%p1756)
  %s1759 = scalar_lea.sflag [#allocation2], 16
  %1760 = vsyncmov %s1759
  %s1761 = vpop.sfrf %1760
  %p1762 = scmp.eq.s32.totalorder %s1761, 0
  %p1763 = pneg %p1762
  %1765 = shalt.err (%p1763)
  %s1766 = scalar_lea.sflag [#allocation2], 17
  %1767 = vsyncmov %s1766
  %s1768 = vpop.sfrf %1767
  %p1769 = scmp.eq.s32.totalorder %s1768, 0
  %p1770 = pneg %p1769
  %1772 = shalt.err (%p1770)
  %s1773 = scalar_lea.sflag [#allocation2], 18
  %1774 = vsyncmov %s1773
  %s1775 = vpop.sfrf %1774
  %p1776 = scmp.eq.s32.totalorder %s1775, 0
  %p1777 = pneg %p1776
  %1779 = shalt.err (%p1777)
  %s1780 = scalar_lea.sflag [#allocation2], 19
  %1781 = vsyncmov %s1780
  %s1782 = vpop.sfrf %1781
  %p1783 = scmp.eq.s32.totalorder %s1782, 0
  %p1784 = pneg %p1783
  %1786 = shalt.err (%p1784)
  %s1787 = scalar_lea.sflag [#allocation2], 20
  %1788 = vsyncmov %s1787
  %s1789 = vpop.sfrf %1788
  %p1790 = scmp.eq.s32.totalorder %s1789, 0
  %p1791 = pneg %p1790
  %1793 = shalt.err (%p1791)
  %s1794 = scalar_lea.sflag [#allocation2], 21
  %1795 = vsyncmov %s1794
  %s1796 = vpop.sfrf %1795
  %p1797 = scmp.eq.s32.totalorder %s1796, 0
  %p1798 = pneg %p1797
  %1800 = shalt.err (%p1798)
  %s1801 = scalar_lea.sflag [#allocation2], 22
  %1802 = vsyncmov %s1801
  %s1803 = vpop.sfrf %1802
  %p1804 = scmp.eq.s32.totalorder %s1803, 0
  %p1805 = pneg %p1804
  %1807 = shalt.err (%p1805)
  %s1808 = scalar_lea.sflag [#allocation2], 23
  %1809 = vsyncmov %s1808
  %s1810 = vpop.sfrf %1809
  %p1811 = scmp.eq.s32.totalorder %s1810, 0
  %p1812 = pneg %p1811
  %1814 = shalt.err (%p1812)
  %s1815 = scalar_lea.sflag [#allocation2], 24
  %1816 = vsyncmov %s1815
  %s1817 = vpop.sfrf %1816
  %p1818 = scmp.eq.s32.totalorder %s1817, 0
  %p1819 = pneg %p1818
  %1821 = shalt.err (%p1819)
  %s1822 = scalar_lea.sflag [#allocation2], 25
  %1823 = vsyncmov %s1822
  %s1824 = vpop.sfrf %1823
  %p1825 = scmp.eq.s32.totalorder %s1824, 0
  %p1826 = pneg %p1825
  %1828 = shalt.err (%p1826)
  %s1829 = scalar_lea.sflag [#allocation2], 26
  %1830 = vsyncmov %s1829
  %s1831 = vpop.sfrf %1830
  %p1832 = scmp.eq.s32.totalorder %s1831, 0
  %p1833 = pneg %p1832
  %1835 = shalt.err (%p1833)
  %s1836 = scalar_lea.sflag [#allocation2], 27
  %1837 = vsyncmov %s1836
  %s1838 = vpop.sfrf %1837
  %p1839 = scmp.eq.s32.totalorder %s1838, 0
  %p1840 = pneg %p1839
  %1842 = shalt.err (%p1840)
  %s1843 = scalar_lea.sflag [#allocation2], 28
  %1844 = vsyncmov %s1843
  %s1845 = vpop.sfrf %1844
  %p1846 = scmp.eq.s32.totalorder %s1845, 0
  %p1847 = pneg %p1846
  %1849 = shalt.err (%p1847)
  %s1850 = scalar_lea.sflag [#allocation2], 29
  %1851 = vsyncmov %s1850
  %s1852 = vpop.sfrf %1851
  %p1853 = scmp.eq.s32.totalorder %s1852, 0
  %p1854 = pneg %p1853
  %1856 = shalt.err (%p1854)
  %s1857 = scalar_lea.sflag [#allocation2], 30
  %1858 = vsyncmov %s1857
  %s1859 = vpop.sfrf %1858
  %p1860 = scmp.eq.s32.totalorder %s1859, 0
  %p1861 = pneg %p1860
  %1863 = shalt.err (%p1861)
  %s1864 = scalar_lea.sflag [#allocation2], 31
  %1865 = vsyncmov %s1864
  %s1866 = vpop.sfrf %1865
  %p1867 = scmp.eq.s32.totalorder %s1866, 0
  %p1868 = pneg %p1867
  %1870 = shalt.err (%p1868)

</llo_original>
